<compile_context>
chip_gen: v6e
topology: v6e:2x2x1
jax: 0.10.0
libtpu: 0.0.40
codegen_flags: <defaults>
</compile_context>

<pallas_src>
import jax
import jax.numpy as jnp
from jax import lax
from jax.experimental import pallas as pl
from jax.experimental.pallas import tpu as pltpu


# Architecture (stride = 2 everywhere): (C_in, C_out, K, pad, L_in, L_out)
_LAYERS = (
    (1, 16, 7, 3, 512, 256),
    (16, 32, 5, 2, 256, 128),
    (32, 64, 5, 2, 128, 64),
    (64, 128, 3, 1, 64, 32),
)
_FEAT = _LAYERS[-1][1] * _LAYERS[-1][5]          # 128 * 32 = 4096


# ---------------------------------------------------------------------------
# In-kernel helpers
# ---------------------------------------------------------------------------
def _epilogue(acc, e_ref):
    """conv bias + LeakyReLU(0.2) + inference BatchNorm (all per-channel)."""
    y = acc + e_ref[0]                            # (C, 1) broadcast over lanes
    y = jnp.where(y >= 0.0, y, 0.2 * y)           # LeakyReLU(0.2)
    return y * e_ref[1] + e_ref[2]                # gamma/sqrt(var+eps), shift


def _stable_sigmoid(z):
    """Overflow-free sigmoid (exp argument is always <= 0)."""
    ez = jnp.exp(-jnp.abs(z))
    return jnp.where(z >= 0.0, 1.0 / (1.0 + ez), ez / (1.0 + ez))


# ---------------------------------------------------------------------------
# Fused Pallas kernel (one grid step == one sub-batch of Bt items)
# ---------------------------------------------------------------------------
def fused_disc_kernel(xcol1_ref,
                      w1_ref, e1_ref, w2_ref, e2_ref,
                      w3_ref, e3_ref, w4_ref, e4_ref,
                      sel2_ref, sel3_ref, sel4_ref,
                      fcw_ref, fcb_ref, o_ref):
    bt = o_ref.shape[1]                           # sub-batch size
    w_refs = (w2_ref, w3_ref, w4_ref)
    e_refs = (e2_ref, e3_ref, e4_ref)
    sel_refs = (sel2_ref, sel3_ref, sel4_ref)

    # ---- layer 1 (C_in = 1): batched VPU broadcast-FMA over the 7 taps -----
    xcol1 = xcol1_ref[0]                          # (7, bt*256) f32
    w1 = w1_ref[...]                              # (16, 7)    f32
    acc = jnp.zeros((w1.shape[0], xcol1.shape[1]), jnp.float32)
    for k in range(_LAYERS[0][2]):
        acc = acc + w1[:, k:k + 1] * xcol1[k:k + 1, :]
    y = _epilogue(acc, e1_ref)                    # (16, bt*256) f32, layout L

    # ---- layers 2..4: ONE 0/1 selection matmul + ONE conv matmul each ------
    # Activations stay (C, bt*L).  The host-built selection matrix does zero
    # padding, stride-2 phase extraction and the per-tap shift in one go:
    #   ph[ci, k*(bt*L_out) + b*L_out + j] = y_padded[ci, b, 2j + k - pad]
    for li, (c_in, c_out, k_sz, _, l_in, l_out) in enumerate(_LAYERS[1:]):
        n = bt * l_out
        ph = jnp.dot(y.astype(jnp.bfloat16), sel_refs[li][...],
                     preferred_element_type=jnp.float32)     # (C_in, K*n) f32
        ph = ph.astype(jnp.bfloat16)
        # im2col: stack the K aligned tap blocks along sublanes (k-major rows)
        x_col = jnp.concatenate(
            [ph[:, k * n:(k + 1) * n] for k in range(k_sz)], axis=0)
        acc = jnp.dot(w_refs[li][...], x_col,
                      preferred_element_type=jnp.float32)    # (C_out, n) f32
        y = _epilogue(acc, e_refs[li])

    # ---- flatten + Linear(4096 -> 1) + Sigmoid (VPU mul + XLU reduce) ------
    # TODO(synk): Dropout(p=0.3) is identity at inference; no kernel work.
    fcw = fcw_ref[...]                            # (128, 32) f32
    l4 = _LAYERS[-1][5]                           # 32
    probs = []
    for bb in range(bt):                          # bt is tiny and static
        z = jnp.sum(fcw * y[:, bb * l4:(bb + 1) * l4], axis=1, keepdims=True)
        z = jnp.sum(z, axis=0, keepdims=True) + fcb_ref[...]  # (1, 1)
        probs.append(_stable_sigmoid(z))
    o_ref[...] = jnp.concatenate(probs, axis=0)[None].astype(o_ref.dtype)


# ---------------------------------------------------------------------------
# Host-side helpers (tiny, one-time glue)
# ---------------------------------------------------------------------------
def _make_sel(cfg, bt):
    """0/1 selection matrix (bt*L_in, K*bt*L_out): pad + stride-2 + tap shift."""
    _, _, k_sz, pad, l_in, l_out = cfg
    rows, cols = bt * l_in, k_sz * bt * l_out
    r = jnp.arange(rows)
    b_r, m_r = r // l_in, r % l_in
    c = jnp.arange(cols)
    k_c = c // (bt * l_out)
    b_c = (c % (bt * l_out)) // l_out
    j_c = c % l_out
    hit = ((b_r[:, None] == b_c[None, :]) &
           (m_r[:, None] == (2 * j_c + k_c - pad)[None, :]))
    return hit.astype(jnp.bfloat16)


# ---------------------------------------------------------------------------
# Wrapper: one pallas_call for the whole network
# ---------------------------------------------------------------------------
def forward_pallas(params, x, batch_tile=2):
    """x: (B, 1, 512) NCL float32  ->  (B, 1) probabilities."""
    B, c_in, l_in = x.shape
    assert (c_in, l_in) == (_LAYERS[0][0], _LAYERS[0][4])
    bt = batch_tile if (batch_tile <= B and B % batch_tile == 0) else 1
    g = B // bt

    c1, k1, p1, _, l1_out = (_LAYERS[0][1], _LAYERS[0][2], _LAYERS[0][3],
                             _LAYERS[0][4], _LAYERS[0][5])

    # Layer-1 im2col on the host (tiny: 7 * B * 256 f32), grouped per grid step.
    x_pad = jnp.pad(x, ((0, 0), (0, 0), (p1, p1)))
    taps = jnp.stack([x_pad[:, 0, k:k + 2 * l1_out:2] for k in range(k1)],
                     axis=0)                                  # (7, B, 256)
    xcol1 = (taps.reshape(k1, g, bt, l1_out)
                 .transpose(1, 0, 2, 3)
                 .reshape(g, k1, bt * l1_out)).astype(jnp.float32)

    ins = [xcol1]
    in_specs = [pl.BlockSpec((1, k1, bt * l1_out), lambda i: (i, 0, 0))]

    # Layer 1 weight / epilogue params (f32, VPU path).
    c0 = params["convs"][0]
    w1 = c0["w"].reshape(c1, k1).astype(jnp.float32)
    e1 = jnp.stack([c0["b"], c0["scale"], c0["shift"]], 0
                   ).reshape(3, c1, 1).astype(jnp.float32)
    ins += [w1, e1]
    in_specs += [pl.BlockSpec(w1.shape, lambda i: (0, 0)),
                 pl.BlockSpec(e1.shape, lambda i: (0, 0, 0))]

    # Layers 2..4: bf16 im2col weights (k-major columns) + f32 epilogue params.
    sels = []
    for c, cfg in zip(params["convs"][1:], _LAYERS[1:]):
        _, c_out, k_sz, _, _, _ = cfg
        wf = (jnp.transpose(c["w"], (0, 2, 1))
                 .reshape(c_out, k_sz * c["w"].shape[1]).astype(jnp.bfloat16))
        eps = jnp.stack([c["b"], c["scale"], c["shift"]], 0
                        ).reshape(3, c_out, 1).astype(jnp.float32)
        ins += [wf, eps]
        in_specs += [pl.BlockSpec(wf.shape, lambda i: (0, 0)),
                     pl.BlockSpec(eps.shape, lambda i: (0, 0, 0))]
        sels.append(_make_sel(cfg, bt))

    for sel in sels:                              # sel2, sel3, sel4 (bf16)
        ins.append(sel)
        in_specs.append(pl.BlockSpec(sel.shape, lambda i: (0, 0)))

    fcw = params["fc_w"].reshape(_LAYERS[-1][1], _LAYERS[-1][5]
                                 ).astype(jnp.float32)        # (128, 32)
    fcb = params["fc_b"].reshape(1, 1).astype(jnp.float32)
    ins += [fcw, fcb]
    in_specs += [pl.BlockSpec(fcw.shape, lambda i: (0, 0)),
                 pl.BlockSpec(fcb.shape, lambda i: (0, 0))]

    out = pl.pallas_call(
        fused_disc_kernel,
        out_shape=jax.ShapeDtypeStruct((g, bt, 1), jnp.float32),
        grid=(g,),
        in_specs=in_specs,
        out_specs=pl.BlockSpec((1, bt, 1), lambda i: (i, 0, 0)),
        compiler_params=pltpu.CompilerParams(
            dimension_semantics=("parallel",)),
    )(*ins)
    return out.reshape(B, 1).astype(x.dtype)


# ---------------------------------------------------------------------------
# Parameter setup (deterministic, synthetic)
# ---------------------------------------------------------------------------
def spectral_normalize(w, key, n_iter=50):
    """Divide weight by its largest singular value (W.view(out, -1))."""
    w2 = w.reshape(w.shape[0], -1)
    u = jax.random.normal(key, (w.shape[0],), w.dtype)
    u = u / (jnp.linalg.norm(u) + 1e-12)
    for _ in range(n_iter):
        v = w2.T @ u
        v = v / (jnp.linalg.norm(v) + 1e-12)
        u = w2 @ v
        u = u / (jnp.linalg.norm(u) + 1e-12)
    sigma = u @ (w2 @ v)
    return w / sigma


def make_params(key):
    params = {"convs": []}
    keys = jax.random.split(key, 4 * len(_LAYERS) + 2)
    eps = 1e-5
    for i, (cin, cout, k, pad, _, _) in enumerate(_LAYERS):
        kw, kb, kbn, ksn = keys[4 * i: 4 * i + 4]
        w = jax.random.normal(kw, (cout, cin, k), jnp.float32) * 0.2
        w = spectral_normalize(w, ksn)
        b = jax.random.normal(kb, (cout,), jnp.float32) * 0.05
        g1, g2, g3, g4 = jax.random.split(kbn, 4)
        gamma = 1.0 + 0.1 * jax.random.normal(g1, (cout,), jnp.float32)
        beta = 0.1 * jax.random.normal(g2, (cout,), jnp.float32)
        rmean = 0.1 * jax.random.normal(g3, (cout,), jnp.float32)
        rvar = 1.0 + 0.1 * jax.random.uniform(g4, (cout,), jnp.float32)
        scale = gamma / jnp.sqrt(rvar + eps)
        shift = beta - rmean * scale
        params["convs"].append(dict(w=w, b=b, scale=scale, shift=shift,
                                    pad=pad))
    kfw, kfb = keys[-2:]
    params["fc_w"] = jax.random.normal(kfw, (1, _FEAT), jnp.float32) * 0.02
    params["fc_b"] = jax.random.normal(kfb, (1,), jnp.float32) * 0.05
    return params


# ---------------------------------------------------------------------------
# Pure-JAX reference (f32)
# ---------------------------------------------------------------------------
def forward_reference(params, x):
    for c in params["convs"]:
        y = lax.conv_general_dilated(
            x, c["w"], window_strides=(2,), padding=[(c["pad"], c["pad"])],
            dimension_numbers=("NCH", "OIH", "NCH"))
        y = y + c["b"][None, :, None]
        y = jnp.where(y >= 0, y, 0.2 * y)
        x = y * c["scale"][None, :, None] + c["shift"][None, :, None]
    x_flat = x.reshape(x.shape[0], -1)
    z = x_flat @ params["fc_w"].T + params["fc_b"][None, :]
    return jax.nn.sigmoid(z)


# ---------------------------------------------------------------------------
if __name__ == "__main__":
    key = jax.random.PRNGKey(0)
    kp, kx = jax.random.split(key)
    params = make_params(kp)

    # Module expects input (batch, 1, 512); B=4 -> 2 grid steps of 2 items.
    x = jax.random.normal(kx, (4, 1, 512), jnp.float32)

    prob = jax.block_until_ready(forward_pallas(params, x, batch_tile=2))
    ref = jax.block_until_ready(forward_reference(params, x))

    assert prob.shape == (4, 1)
    assert bool(jnp.all((prob >= 0.0) & (prob <= 1.0)))
    # bf16 MXU operands (f32 accumulation) vs the f32 reference.
    assert bool(jnp.allclose(prob, ref, rtol=0.0, atol=1e-2)), (prob, ref)

    print("KERNEL_OK")
</pallas_src>

<mosaic_0001>
module attributes {stable_mosaic.version = 11 : i64} {
  func.func @fused_disc_kernel(%arg0: i32, %arg1: memref<1x7x512xf32, #tpu.memory_space<vmem>>, %arg2: memref<16x7xf32, #tpu.memory_space<vmem>>, %arg3: memref<3x16x1xf32, #tpu.memory_space<vmem>>, %arg4: memref<32x80xbf16, #tpu.memory_space<vmem>>, %arg5: memref<3x32x1xf32, #tpu.memory_space<vmem>>, %arg6: memref<64x160xbf16, #tpu.memory_space<vmem>>, %arg7: memref<3x64x1xf32, #tpu.memory_space<vmem>>, %arg8: memref<128x192xbf16, #tpu.memory_space<vmem>>, %arg9: memref<3x128x1xf32, #tpu.memory_space<vmem>>, %arg10: memref<512x1280xbf16, #tpu.memory_space<vmem>>, %arg11: memref<256x640xbf16, #tpu.memory_space<vmem>>, %arg12: memref<128x192xbf16, #tpu.memory_space<vmem>>, %arg13: memref<128x32xf32, #tpu.memory_space<vmem>>, %arg14: memref<1x1xf32, #tpu.memory_space<vmem>>, %arg15: memref<1x2x1xf32, #tpu.memory_space<vmem>>) attributes {dimension_semantics = [#tpu.dimension_semantics<parallel>], iteration_bounds = array<i64: 2>, scalar_prefetch = 0 : i64, scratch_operands = 0 : i64, tpu.core_type = #tpu.core_type<tc>, window_params = [{transform_indices = @transform_0, window_bounds = array<i64: 1, 7, 512>}, {pipeline_mode = #tpu.pipeline_mode<synchronous>, transform_indices = @transform_1, window_bounds = array<i64: 16, 7>}, {pipeline_mode = #tpu.pipeline_mode<synchronous>, transform_indices = @transform_2, window_bounds = array<i64: 3, 16, 1>}, {pipeline_mode = #tpu.pipeline_mode<synchronous>, transform_indices = @transform_3, window_bounds = array<i64: 32, 80>}, {pipeline_mode = #tpu.pipeline_mode<synchronous>, transform_indices = @transform_4, window_bounds = array<i64: 3, 32, 1>}, {pipeline_mode = #tpu.pipeline_mode<synchronous>, transform_indices = @transform_5, window_bounds = array<i64: 64, 160>}, {pipeline_mode = #tpu.pipeline_mode<synchronous>, transform_indices = @transform_6, window_bounds = array<i64: 3, 64, 1>}, {pipeline_mode = #tpu.pipeline_mode<synchronous>, transform_indices = @transform_7, window_bounds = array<i64: 128, 192>}, {pipeline_mode = #tpu.pipeline_mode<synchronous>, transform_indices = @transform_8, window_bounds = array<i64: 3, 128, 1>}, {pipeline_mode = #tpu.pipeline_mode<synchronous>, transform_indices = @transform_9, window_bounds = array<i64: 512, 1280>}, {pipeline_mode = #tpu.pipeline_mode<synchronous>, transform_indices = @transform_10, window_bounds = array<i64: 256, 640>}, {pipeline_mode = #tpu.pipeline_mode<synchronous>, transform_indices = @transform_11, window_bounds = array<i64: 128, 192>}, {pipeline_mode = #tpu.pipeline_mode<synchronous>, transform_indices = @transform_12, window_bounds = array<i64: 128, 32>}, {pipeline_mode = #tpu.pipeline_mode<synchronous>, transform_indices = @transform_13, window_bounds = array<i64: 1, 1>}, {transform_indices = @transform_14, window_bounds = array<i64: 1, 2, 1>}]} {
    %c0 = arith.constant 0 : index
    %c0_0 = arith.constant 0 : index
    %c0_1 = arith.constant 0 : index
    %0 = vector.load %arg1[%c0, %c0_0, %c0_1] : memref<1x7x512xf32, #tpu.memory_space<vmem>>, vector<1x7x512xf32>
    %1 = vector.shape_cast %0 : vector<1x7x512xf32> to vector<7x512xf32>
    %c0_2 = arith.constant 0 : index
    %c0_3 = arith.constant 0 : index
    %2 = vector.load %arg2[%c0_2, %c0_3] : memref<16x7xf32, #tpu.memory_space<vmem>>, vector<16x7xf32>
    %cst = arith.constant 0.000000e+00 : f32
    %3 = vector.broadcast %cst : f32 to vector<16x512xf32>
    %4 = vector.extract_strided_slice %2 {offsets = [0, 0], sizes = [16, 1], strides = [1, 1]} : vector<16x7xf32> to vector<16x1xf32>
    %5 = vector.extract_strided_slice %1 {offsets = [0, 0], sizes = [1, 512], strides = [1, 1]} : vector<7x512xf32> to vector<1x512xf32>
    %6 = vector.broadcast %4 : vector<16x1xf32> to vector<16x512xf32>
    %7 = vector.broadcast %5 : vector<1x512xf32> to vector<16x512xf32>
    %8 = arith.mulf %6, %7 : vector<16x512xf32>
    %9 = arith.addf %3, %8 : vector<16x512xf32>
    %10 = vector.extract_strided_slice %2 {offsets = [0, 1], sizes = [16, 1], strides = [1, 1]} : vector<16x7xf32> to vector<16x1xf32>
    %11 = vector.extract_strided_slice %1 {offsets = [1, 0], sizes = [1, 512], strides = [1, 1]} : vector<7x512xf32> to vector<1x512xf32>
    %12 = vector.broadcast %10 : vector<16x1xf32> to vector<16x512xf32>
    %13 = vector.broadcast %11 : vector<1x512xf32> to vector<16x512xf32>
    %14 = arith.mulf %12, %13 : vector<16x512xf32>
    %15 = arith.addf %9, %14 : vector<16x512xf32>
    %16 = vector.extract_strided_slice %2 {offsets = [0, 2], sizes = [16, 1], strides = [1, 1]} : vector<16x7xf32> to vector<16x1xf32>
    %17 = vector.extract_strided_slice %1 {offsets = [2, 0], sizes = [1, 512], strides = [1, 1]} : vector<7x512xf32> to vector<1x512xf32>
    %18 = vector.broadcast %16 : vector<16x1xf32> to vector<16x512xf32>
    %19 = vector.broadcast %17 : vector<1x512xf32> to vector<16x512xf32>
    %20 = arith.mulf %18, %19 : vector<16x512xf32>
    %21 = arith.addf %15, %20 : vector<16x512xf32>
    %22 = vector.extract_strided_slice %2 {offsets = [0, 3], sizes = [16, 1], strides = [1, 1]} : vector<16x7xf32> to vector<16x1xf32>
    %23 = vector.extract_strided_slice %1 {offsets = [3, 0], sizes = [1, 512], strides = [1, 1]} : vector<7x512xf32> to vector<1x512xf32>
    %24 = vector.broadcast %22 : vector<16x1xf32> to vector<16x512xf32>
    %25 = vector.broadcast %23 : vector<1x512xf32> to vector<16x512xf32>
    %26 = arith.mulf %24, %25 : vector<16x512xf32>
    %27 = arith.addf %21, %26 : vector<16x512xf32>
    %28 = vector.extract_strided_slice %2 {offsets = [0, 4], sizes = [16, 1], strides = [1, 1]} : vector<16x7xf32> to vector<16x1xf32>
    %29 = vector.extract_strided_slice %1 {offsets = [4, 0], sizes = [1, 512], strides = [1, 1]} : vector<7x512xf32> to vector<1x512xf32>
    %30 = vector.broadcast %28 : vector<16x1xf32> to vector<16x512xf32>
    %31 = vector.broadcast %29 : vector<1x512xf32> to vector<16x512xf32>
    %32 = arith.mulf %30, %31 : vector<16x512xf32>
    %33 = arith.addf %27, %32 : vector<16x512xf32>
    %34 = vector.extract_strided_slice %2 {offsets = [0, 5], sizes = [16, 1], strides = [1, 1]} : vector<16x7xf32> to vector<16x1xf32>
    %35 = vector.extract_strided_slice %1 {offsets = [5, 0], sizes = [1, 512], strides = [1, 1]} : vector<7x512xf32> to vector<1x512xf32>
    %36 = vector.broadcast %34 : vector<16x1xf32> to vector<16x512xf32>
    %37 = vector.broadcast %35 : vector<1x512xf32> to vector<16x512xf32>
    %38 = arith.mulf %36, %37 : vector<16x512xf32>
    %39 = arith.addf %33, %38 : vector<16x512xf32>
    %40 = vector.extract_strided_slice %2 {offsets = [0, 6], sizes = [16, 1], strides = [1, 1]} : vector<16x7xf32> to vector<16x1xf32>
    %41 = vector.extract_strided_slice %1 {offsets = [6, 0], sizes = [1, 512], strides = [1, 1]} : vector<7x512xf32> to vector<1x512xf32>
    %42 = vector.broadcast %40 : vector<16x1xf32> to vector<16x512xf32>
    %43 = vector.broadcast %41 : vector<1x512xf32> to vector<16x512xf32>
    %44 = arith.mulf %42, %43 : vector<16x512xf32>
    %45 = arith.addf %39, %44 : vector<16x512xf32>
    %c0_4 = arith.constant 0 : index
    %c0_5 = arith.constant 0 : index
    %c0_6 = arith.constant 0 : index
    %46 = vector.load %arg3[%c0_4, %c0_5, %c0_6] : memref<3x16x1xf32, #tpu.memory_space<vmem>>, vector<1x16x1xf32>
    %47 = vector.shape_cast %46 : vector<1x16x1xf32> to vector<16x1xf32>
    %48 = vector.broadcast %47 : vector<16x1xf32> to vector<16x512xf32>
    %49 = arith.addf %45, %48 : vector<16x512xf32>
    %cst_7 = arith.constant 0.000000e+00 : f32
    %50 = vector.broadcast %cst_7 : f32 to vector<16x512xf32>
    %51 = arith.cmpf oge, %49, %50 : vector<16x512xf32>
    %cst_8 = arith.constant 2.000000e-01 : f32
    %52 = vector.broadcast %cst_8 : f32 to vector<16x512xf32>
    %53 = arith.mulf %52, %49 : vector<16x512xf32>
    %54 = arith.select %51, %49, %53 : vector<16x512xi1>, vector<16x512xf32>
    %c1 = arith.constant 1 : index
    %c0_9 = arith.constant 0 : index
    %c0_10 = arith.constant 0 : index
    %55 = vector.load %arg3[%c1, %c0_9, %c0_10] : memref<3x16x1xf32, #tpu.memory_space<vmem>>, vector<1x16x1xf32>
    %56 = vector.shape_cast %55 : vector<1x16x1xf32> to vector<16x1xf32>
    %57 = vector.broadcast %56 : vector<16x1xf32> to vector<16x512xf32>
    %58 = arith.mulf %54, %57 : vector<16x512xf32>
    %c2 = arith.constant 2 : index
    %c0_11 = arith.constant 0 : index
    %c0_12 = arith.constant 0 : index
    %59 = vector.load %arg3[%c2, %c0_11, %c0_12] : memref<3x16x1xf32, #tpu.memory_space<vmem>>, vector<1x16x1xf32>
    %60 = vector.shape_cast %59 : vector<1x16x1xf32> to vector<16x1xf32>
    %61 = vector.broadcast %60 : vector<16x1xf32> to vector<16x512xf32>
    %62 = arith.addf %58, %61 : vector<16x512xf32>
    %63 = arith.truncf %62 : vector<16x512xf32> to vector<16x512xbf16>
    %c0_13 = arith.constant 0 : index
    %c0_14 = arith.constant 0 : index
    %64 = vector.load %arg10[%c0_13, %c0_14] : memref<512x1280xbf16, #tpu.memory_space<vmem>>, vector<512x1280xbf16>
    %cst_15 = arith.constant dense<0.000000e+00> : vector<16x1280xf32>
    %65 = tpu.matmul %63, %64, %cst_15 {dimension_numbers = #tpu.dot_dimension_numbers<[1], [0], [0], [1], [0, 0, 1, 1], [], []>} : vector<16x512xbf16>, vector<512x1280xbf16>, vector<16x1280xf32> -> vector<16x1280xf32>
    %66 = arith.truncf %65 : vector<16x1280xf32> to vector<16x1280xbf16>
    %67 = vector.extract_strided_slice %66 {offsets = [0, 0], sizes = [16, 256], strides = [1, 1]} : vector<16x1280xbf16> to vector<16x256xbf16>
    %68 = vector.extract_strided_slice %66 {offsets = [0, 256], sizes = [16, 256], strides = [1, 1]} : vector<16x1280xbf16> to vector<16x256xbf16>
    %69 = vector.extract_strided_slice %66 {offsets = [0, 512], sizes = [16, 256], strides = [1, 1]} : vector<16x1280xbf16> to vector<16x256xbf16>
    %70 = vector.extract_strided_slice %66 {offsets = [0, 768], sizes = [16, 256], strides = [1, 1]} : vector<16x1280xbf16> to vector<16x256xbf16>
    %71 = vector.extract_strided_slice %66 {offsets = [0, 1024], sizes = [16, 256], strides = [1, 1]} : vector<16x1280xbf16> to vector<16x256xbf16>
    %72 = tpu.concatenate %67, %68, %69, %70, %71 in 0 : vector<16x256xbf16>, vector<16x256xbf16>, vector<16x256xbf16>, vector<16x256xbf16>, vector<16x256xbf16> -> vector<80x256xbf16>
    %c0_16 = arith.constant 0 : index
    %c0_17 = arith.constant 0 : index
    %73 = vector.load %arg4[%c0_16, %c0_17] : memref<32x80xbf16, #tpu.memory_space<vmem>>, vector<32x80xbf16>
    %cst_18 = arith.constant dense<0.000000e+00> : vector<32x256xf32>
    %74 = tpu.matmul %73, %72, %cst_18 {dimension_numbers = #tpu.dot_dimension_numbers<[1], [0], [0], [1], [0, 0, 1, 1], [], []>} : vector<32x80xbf16>, vector<80x256xbf16>, vector<32x256xf32> -> vector<32x256xf32>
    %c0_19 = arith.constant 0 : index
    %c0_20 = arith.constant 0 : index
    %c0_21 = arith.constant 0 : index
    %75 = vector.load %arg5[%c0_19, %c0_20, %c0_21] : memref<3x32x1xf32, #tpu.memory_space<vmem>>, vector<1x32x1xf32>
    %76 = vector.shape_cast %75 : vector<1x32x1xf32> to vector<32x1xf32>
    %77 = vector.broadcast %76 : vector<32x1xf32> to vector<32x256xf32>
    %78 = arith.addf %74, %77 : vector<32x256xf32>
    %cst_22 = arith.constant 0.000000e+00 : f32
    %79 = vector.broadcast %cst_22 : f32 to vector<32x256xf32>
    %80 = arith.cmpf oge, %78, %79 : vector<32x256xf32>
    %cst_23 = arith.constant 2.000000e-01 : f32
    %81 = vector.broadcast %cst_23 : f32 to vector<32x256xf32>
    %82 = arith.mulf %81, %78 : vector<32x256xf32>
    %83 = arith.select %80, %78, %82 : vector<32x256xi1>, vector<32x256xf32>
    %c1_24 = arith.constant 1 : index
    %c0_25 = arith.constant 0 : index
    %c0_26 = arith.constant 0 : index
    %84 = vector.load %arg5[%c1_24, %c0_25, %c0_26] : memref<3x32x1xf32, #tpu.memory_space<vmem>>, vector<1x32x1xf32>
    %85 = vector.shape_cast %84 : vector<1x32x1xf32> to vector<32x1xf32>
    %86 = vector.broadcast %85 : vector<32x1xf32> to vector<32x256xf32>
    %87 = arith.mulf %83, %86 : vector<32x256xf32>
    %c2_27 = arith.constant 2 : index
    %c0_28 = arith.constant 0 : index
    %c0_29 = arith.constant 0 : index
    %88 = vector.load %arg5[%c2_27, %c0_28, %c0_29] : memref<3x32x1xf32, #tpu.memory_space<vmem>>, vector<1x32x1xf32>
    %89 = vector.shape_cast %88 : vector<1x32x1xf32> to vector<32x1xf32>
    %90 = vector.broadcast %89 : vector<32x1xf32> to vector<32x256xf32>
    %91 = arith.addf %87, %90 : vector<32x256xf32>
    %92 = arith.truncf %91 : vector<32x256xf32> to vector<32x256xbf16>
    %c0_30 = arith.constant 0 : index
    %c0_31 = arith.constant 0 : index
    %93 = vector.load %arg11[%c0_30, %c0_31] : memref<256x640xbf16, #tpu.memory_space<vmem>>, vector<256x640xbf16>
    %cst_32 = arith.constant dense<0.000000e+00> : vector<32x640xf32>
    %94 = tpu.matmul %92, %93, %cst_32 {dimension_numbers = #tpu.dot_dimension_numbers<[1], [0], [0], [1], [0, 0, 1, 1], [], []>} : vector<32x256xbf16>, vector<256x640xbf16>, vector<32x640xf32> -> vector<32x640xf32>
    %95 = arith.truncf %94 : vector<32x640xf32> to vector<32x640xbf16>
    %96 = vector.extract_strided_slice %95 {offsets = [0, 0], sizes = [32, 128], strides = [1, 1]} : vector<32x640xbf16> to vector<32x128xbf16>
    %97 = vector.extract_strided_slice %95 {offsets = [0, 128], sizes = [32, 128], strides = [1, 1]} : vector<32x640xbf16> to vector<32x128xbf16>
    %98 = vector.extract_strided_slice %95 {offsets = [0, 256], sizes = [32, 128], strides = [1, 1]} : vector<32x640xbf16> to vector<32x128xbf16>
    %99 = vector.extract_strided_slice %95 {offsets = [0, 384], sizes = [32, 128], strides = [1, 1]} : vector<32x640xbf16> to vector<32x128xbf16>
    %100 = vector.extract_strided_slice %95 {offsets = [0, 512], sizes = [32, 128], strides = [1, 1]} : vector<32x640xbf16> to vector<32x128xbf16>
    %101 = tpu.concatenate %96, %97, %98, %99, %100 in 0 : vector<32x128xbf16>, vector<32x128xbf16>, vector<32x128xbf16>, vector<32x128xbf16>, vector<32x128xbf16> -> vector<160x128xbf16>
    %c0_33 = arith.constant 0 : index
    %c0_34 = arith.constant 0 : index
    %102 = vector.load %arg6[%c0_33, %c0_34] : memref<64x160xbf16, #tpu.memory_space<vmem>>, vector<64x160xbf16>
    %cst_35 = arith.constant dense<0.000000e+00> : vector<64x128xf32>
    %103 = tpu.matmul %102, %101, %cst_35 {dimension_numbers = #tpu.dot_dimension_numbers<[1], [0], [0], [1], [0, 0, 1, 1], [], []>} : vector<64x160xbf16>, vector<160x128xbf16>, vector<64x128xf32> -> vector<64x128xf32>
    %c0_36 = arith.constant 0 : index
    %c0_37 = arith.constant 0 : index
    %c0_38 = arith.constant 0 : index
    %104 = vector.load %arg7[%c0_36, %c0_37, %c0_38] : memref<3x64x1xf32, #tpu.memory_space<vmem>>, vector<1x64x1xf32>
    %105 = vector.shape_cast %104 : vector<1x64x1xf32> to vector<64x1xf32>
    %106 = vector.broadcast %105 : vector<64x1xf32> to vector<64x128xf32>
    %107 = arith.addf %103, %106 : vector<64x128xf32>
    %cst_39 = arith.constant 0.000000e+00 : f32
    %108 = vector.broadcast %cst_39 : f32 to vector<64x128xf32>
    %109 = arith.cmpf oge, %107, %108 : vector<64x128xf32>
    %cst_40 = arith.constant 2.000000e-01 : f32
    %110 = vector.broadcast %cst_40 : f32 to vector<64x128xf32>
    %111 = arith.mulf %110, %107 : vector<64x128xf32>
    %112 = arith.select %109, %107, %111 : vector<64x128xi1>, vector<64x128xf32>
    %c1_41 = arith.constant 1 : index
    %c0_42 = arith.constant 0 : index
    %c0_43 = arith.constant 0 : index
    %113 = vector.load %arg7[%c1_41, %c0_42, %c0_43] : memref<3x64x1xf32, #tpu.memory_space<vmem>>, vector<1x64x1xf32>
    %114 = vector.shape_cast %113 : vector<1x64x1xf32> to vector<64x1xf32>
    %115 = vector.broadcast %114 : vector<64x1xf32> to vector<64x128xf32>
    %116 = arith.mulf %112, %115 : vector<64x128xf32>
    %c2_44 = arith.constant 2 : index
    %c0_45 = arith.constant 0 : index
    %c0_46 = arith.constant 0 : index
    %117 = vector.load %arg7[%c2_44, %c0_45, %c0_46] : memref<3x64x1xf32, #tpu.memory_space<vmem>>, vector<1x64x1xf32>
    %118 = vector.shape_cast %117 : vector<1x64x1xf32> to vector<64x1xf32>
    %119 = vector.broadcast %118 : vector<64x1xf32> to vector<64x128xf32>
    %120 = arith.addf %116, %119 : vector<64x128xf32>
    %121 = arith.truncf %120 : vector<64x128xf32> to vector<64x128xbf16>
    %c0_47 = arith.constant 0 : index
    %c0_48 = arith.constant 0 : index
    %122 = vector.load %arg12[%c0_47, %c0_48] : memref<128x192xbf16, #tpu.memory_space<vmem>>, vector<128x192xbf16>
    %cst_49 = arith.constant dense<0.000000e+00> : vector<64x192xf32>
    %123 = tpu.matmul %121, %122, %cst_49 {dimension_numbers = #tpu.dot_dimension_numbers<[1], [0], [0], [1], [0, 0, 1, 1], [], []>} : vector<64x128xbf16>, vector<128x192xbf16>, vector<64x192xf32> -> vector<64x192xf32>
    %124 = arith.truncf %123 : vector<64x192xf32> to vector<64x192xbf16>
    %125 = vector.extract_strided_slice %124 {offsets = [0, 0], sizes = [64, 64], strides = [1, 1]} : vector<64x192xbf16> to vector<64x64xbf16>
    %126 = vector.extract_strided_slice %124 {offsets = [0, 64], sizes = [64, 64], strides = [1, 1]} : vector<64x192xbf16> to vector<64x64xbf16>
    %127 = vector.extract_strided_slice %124 {offsets = [0, 128], sizes = [64, 64], strides = [1, 1]} : vector<64x192xbf16> to vector<64x64xbf16>
    %128 = tpu.concatenate %125, %126, %127 in 0 : vector<64x64xbf16>, vector<64x64xbf16>, vector<64x64xbf16> -> vector<192x64xbf16>
    %c0_50 = arith.constant 0 : index
    %c0_51 = arith.constant 0 : index
    %129 = vector.load %arg8[%c0_50, %c0_51] : memref<128x192xbf16, #tpu.memory_space<vmem>>, vector<128x192xbf16>
    %cst_52 = arith.constant dense<0.000000e+00> : vector<128x64xf32>
    %130 = tpu.matmul %129, %128, %cst_52 {dimension_numbers = #tpu.dot_dimension_numbers<[1], [0], [0], [1], [0, 0, 1, 1], [], []>} : vector<128x192xbf16>, vector<192x64xbf16>, vector<128x64xf32> -> vector<128x64xf32>
    %c0_53 = arith.constant 0 : index
    %c0_54 = arith.constant 0 : index
    %c0_55 = arith.constant 0 : index
    %131 = vector.load %arg9[%c0_53, %c0_54, %c0_55] : memref<3x128x1xf32, #tpu.memory_space<vmem>>, vector<1x128x1xf32>
    %132 = vector.shape_cast %131 : vector<1x128x1xf32> to vector<128x1xf32>
    %133 = vector.broadcast %132 : vector<128x1xf32> to vector<128x64xf32>
    %134 = arith.addf %130, %133 : vector<128x64xf32>
    %cst_56 = arith.constant 0.000000e+00 : f32
    %135 = vector.broadcast %cst_56 : f32 to vector<128x64xf32>
    %136 = arith.cmpf oge, %134, %135 : vector<128x64xf32>
    %cst_57 = arith.constant 2.000000e-01 : f32
    %137 = vector.broadcast %cst_57 : f32 to vector<128x64xf32>
    %138 = arith.mulf %137, %134 : vector<128x64xf32>
    %139 = arith.select %136, %134, %138 : vector<128x64xi1>, vector<128x64xf32>
    %c1_58 = arith.constant 1 : index
    %c0_59 = arith.constant 0 : index
    %c0_60 = arith.constant 0 : index
    %140 = vector.load %arg9[%c1_58, %c0_59, %c0_60] : memref<3x128x1xf32, #tpu.memory_space<vmem>>, vector<1x128x1xf32>
    %141 = vector.shape_cast %140 : vector<1x128x1xf32> to vector<128x1xf32>
    %142 = vector.broadcast %141 : vector<128x1xf32> to vector<128x64xf32>
    %143 = arith.mulf %139, %142 : vector<128x64xf32>
    %c2_61 = arith.constant 2 : index
    %c0_62 = arith.constant 0 : index
    %c0_63 = arith.constant 0 : index
    %144 = vector.load %arg9[%c2_61, %c0_62, %c0_63] : memref<3x128x1xf32, #tpu.memory_space<vmem>>, vector<1x128x1xf32>
    %145 = vector.shape_cast %144 : vector<1x128x1xf32> to vector<128x1xf32>
    %146 = vector.broadcast %145 : vector<128x1xf32> to vector<128x64xf32>
    %147 = arith.addf %143, %146 : vector<128x64xf32>
    %c0_64 = arith.constant 0 : index
    %c0_65 = arith.constant 0 : index
    %148 = vector.load %arg13[%c0_64, %c0_65] : memref<128x32xf32, #tpu.memory_space<vmem>>, vector<128x32xf32>
    %149 = vector.extract_strided_slice %147 {offsets = [0, 0], sizes = [128, 32], strides = [1, 1]} : vector<128x64xf32> to vector<128x32xf32>
    %150 = arith.mulf %148, %149 : vector<128x32xf32>
    %cst_66 = arith.constant dense<0.000000e+00> : vector<128xf32>
    %151 = vector.multi_reduction <add>, %150, %cst_66 [1] : vector<128x32xf32> to vector<128xf32>
    %152 = vector.shape_cast %151 : vector<128xf32> to vector<128x1xf32>
    %cst_67 = arith.constant dense<0.000000e+00> : vector<1xf32>
    %153 = vector.multi_reduction <add>, %152, %cst_67 [0] : vector<128x1xf32> to vector<1xf32>
    %154 = vector.shape_cast %153 : vector<1xf32> to vector<1x1xf32>
    %c0_68 = arith.constant 0 : index
    %c0_69 = arith.constant 0 : index
    %155 = vector.load %arg14[%c0_68, %c0_69] : memref<1x1xf32, #tpu.memory_space<vmem>>, vector<1x1xf32>
    %156 = arith.addf %154, %155 : vector<1x1xf32>
    %157 = math.absf %156 : vector<1x1xf32>
    %cst_70 = arith.constant 0.000000e+00 : f32
    %158 = vector.broadcast %cst_70 : f32 to vector<1x1xf32>
    %159 = arith.subf %158, %157 : vector<1x1xf32>
    %160 = math.exp %159 : vector<1x1xf32>
    %cst_71 = arith.constant 0.000000e+00 : f32
    %161 = vector.broadcast %cst_71 : f32 to vector<1x1xf32>
    %162 = arith.cmpf oge, %156, %161 : vector<1x1xf32>
    %cst_72 = arith.constant 1.000000e+00 : f32
    %163 = vector.broadcast %cst_72 : f32 to vector<1x1xf32>
    %164 = arith.addf %163, %160 : vector<1x1xf32>
    %cst_73 = arith.constant 1.000000e+00 : f32
    %165 = vector.broadcast %cst_73 : f32 to vector<1x1xf32>
    %166 = arith.divf %165, %164 : vector<1x1xf32>
    %cst_74 = arith.constant 1.000000e+00 : f32
    %167 = vector.broadcast %cst_74 : f32 to vector<1x1xf32>
    %168 = arith.addf %167, %160 : vector<1x1xf32>
    %169 = arith.divf %160, %168 : vector<1x1xf32>
    %170 = arith.select %162, %166, %169 : vector<1x1xi1>, vector<1x1xf32>
    %171 = vector.extract_strided_slice %147 {offsets = [0, 32], sizes = [128, 32], strides = [1, 1]} : vector<128x64xf32> to vector<128x32xf32>
    %172 = arith.mulf %148, %171 : vector<128x32xf32>
    %cst_75 = arith.constant dense<0.000000e+00> : vector<128xf32>
    %173 = vector.multi_reduction <add>, %172, %cst_75 [1] : vector<128x32xf32> to vector<128xf32>
    %174 = vector.shape_cast %173 : vector<128xf32> to vector<128x1xf32>
    %cst_76 = arith.constant dense<0.000000e+00> : vector<1xf32>
    %175 = vector.multi_reduction <add>, %174, %cst_76 [0] : vector<128x1xf32> to vector<1xf32>
    %176 = vector.shape_cast %175 : vector<1xf32> to vector<1x1xf32>
    %c0_77 = arith.constant 0 : index
    %c0_78 = arith.constant 0 : index
    %177 = vector.load %arg14[%c0_77, %c0_78] : memref<1x1xf32, #tpu.memory_space<vmem>>, vector<1x1xf32>
    %178 = arith.addf %176, %177 : vector<1x1xf32>
    %179 = math.absf %178 : vector<1x1xf32>
    %cst_79 = arith.constant 0.000000e+00 : f32
    %180 = vector.broadcast %cst_79 : f32 to vector<1x1xf32>
    %181 = arith.subf %180, %179 : vector<1x1xf32>
    %182 = math.exp %181 : vector<1x1xf32>
    %cst_80 = arith.constant 0.000000e+00 : f32
    %183 = vector.broadcast %cst_80 : f32 to vector<1x1xf32>
    %184 = arith.cmpf oge, %178, %183 : vector<1x1xf32>
    %cst_81 = arith.constant 1.000000e+00 : f32
    %185 = vector.broadcast %cst_81 : f32 to vector<1x1xf32>
    %186 = arith.addf %185, %182 : vector<1x1xf32>
    %cst_82 = arith.constant 1.000000e+00 : f32
    %187 = vector.broadcast %cst_82 : f32 to vector<1x1xf32>
    %188 = arith.divf %187, %186 : vector<1x1xf32>
    %cst_83 = arith.constant 1.000000e+00 : f32
    %189 = vector.broadcast %cst_83 : f32 to vector<1x1xf32>
    %190 = arith.addf %189, %182 : vector<1x1xf32>
    %191 = arith.divf %182, %190 : vector<1x1xf32>
    %192 = arith.select %184, %188, %191 : vector<1x1xi1>, vector<1x1xf32>
    %193 = tpu.concatenate %170, %192 in 0 : vector<1x1xf32>, vector<1x1xf32> -> vector<2x1xf32>
    %194 = vector.shape_cast %193 : vector<2x1xf32> to vector<1x2x1xf32>
    %c0_84 = arith.constant 0 : index
    %c0_85 = arith.constant 0 : index
    %c0_86 = arith.constant 0 : index
    %195 = vector.load %arg15[%c0_84, %c0_85, %c0_86] : memref<1x2x1xf32, #tpu.memory_space<vmem>>, vector<1x2x1xf32>
    tpu.vector_store %arg15[%c0_84, %c0_85, %c0_86], %194 {strides = array<i32>} : memref<1x2x1xf32, #tpu.memory_space<vmem>>, vector<1x2x1xf32>,
    return
  }
  func.func @transform_0(%arg0: i32) -> (i32, i32, i32) {
    %c0_i32 = arith.constant 0 : i32
    %c0_i32_0 = arith.constant 0 : i32
    %c0_i32_1 = arith.constant 0 : i32
    return %arg0, %c0_i32, %c0_i32_0 : i32, i32, i32
  }
  func.func @transform_1(%arg0: i32) -> (i32, i32) {
    %c0_i32 = arith.constant 0 : i32
    %c0_i32_0 = arith.constant 0 : i32
    %c0_i32_1 = arith.constant 0 : i32
    return %c0_i32, %c0_i32_0 : i32, i32
  }
  func.func @transform_2(%arg0: i32) -> (i32, i32, i32) {
    %c0_i32 = arith.constant 0 : i32
    %c0_i32_0 = arith.constant 0 : i32
    %c0_i32_1 = arith.constant 0 : i32
    %c0_i32_2 = arith.constant 0 : i32
    return %c0_i32, %c0_i32_0, %c0_i32_1 : i32, i32, i32
  }
  func.func @transform_3(%arg0: i32) -> (i32, i32) {
    %c0_i32 = arith.constant 0 : i32
    %c0_i32_0 = arith.constant 0 : i32
    %c0_i32_1 = arith.constant 0 : i32
    return %c0_i32, %c0_i32_0 : i32, i32
  }
  func.func @transform_4(%arg0: i32) -> (i32, i32, i32) {
    %c0_i32 = arith.constant 0 : i32
    %c0_i32_0 = arith.constant 0 : i32
    %c0_i32_1 = arith.constant 0 : i32
    %c0_i32_2 = arith.constant 0 : i32
    return %c0_i32, %c0_i32_0, %c0_i32_1 : i32, i32, i32
  }
  func.func @transform_5(%arg0: i32) -> (i32, i32) {
    %c0_i32 = arith.constant 0 : i32
    %c0_i32_0 = arith.constant 0 : i32
    %c0_i32_1 = arith.constant 0 : i32
    return %c0_i32, %c0_i32_0 : i32, i32
  }
  func.func @transform_6(%arg0: i32) -> (i32, i32, i32) {
    %c0_i32 = arith.constant 0 : i32
    %c0_i32_0 = arith.constant 0 : i32
    %c0_i32_1 = arith.constant 0 : i32
    %c0_i32_2 = arith.constant 0 : i32
    return %c0_i32, %c0_i32_0, %c0_i32_1 : i32, i32, i32
  }
  func.func @transform_7(%arg0: i32) -> (i32, i32) {
    %c0_i32 = arith.constant 0 : i32
    %c0_i32_0 = arith.constant 0 : i32
    %c0_i32_1 = arith.constant 0 : i32
    return %c0_i32, %c0_i32_0 : i32, i32
  }
  func.func @transform_8(%arg0: i32) -> (i32, i32, i32) {
    %c0_i32 = arith.constant 0 : i32
    %c0_i32_0 = arith.constant 0 : i32
    %c0_i32_1 = arith.constant 0 : i32
    %c0_i32_2 = arith.constant 0 : i32
    return %c0_i32, %c0_i32_0, %c0_i32_1 : i32, i32, i32
  }
  func.func @transform_9(%arg0: i32) -> (i32, i32) {
    %c0_i32 = arith.constant 0 : i32
    %c0_i32_0 = arith.constant 0 : i32
    %c0_i32_1 = arith.constant 0 : i32
    return %c0_i32, %c0_i32_0 : i32, i32
  }
  func.func @transform_10(%arg0: i32) -> (i32, i32) {
    %c0_i32 = arith.constant 0 : i32
    %c0_i32_0 = arith.constant 0 : i32
    %c0_i32_1 = arith.constant 0 : i32
    return %c0_i32, %c0_i32_0 : i32, i32
  }
  func.func @transform_11(%arg0: i32) -> (i32, i32) {
    %c0_i32 = arith.constant 0 : i32
    %c0_i32_0 = arith.constant 0 : i32
    %c0_i32_1 = arith.constant 0 : i32
    return %c0_i32, %c0_i32_0 : i32, i32
  }
  func.func @transform_12(%arg0: i32) -> (i32, i32) {
    %c0_i32 = arith.constant 0 : i32
    %c0_i32_0 = arith.constant 0 : i32
    %c0_i32_1 = arith.constant 0 : i32
    return %c0_i32, %c0_i32_0 : i32, i32
  }
  func.func @transform_13(%arg0: i32) -> (i32, i32) {
    %c0_i32 = arith.constant 0 : i32
    %c0_i32_0 = arith.constant 0 : i32
    %c0_i32_1 = arith.constant 0 : i32
    return %c0_i32, %c0_i32_0 : i32, i32
  }
  func.func @transform_14(%arg0: i32) -> (i32, i32, i32) {
    %c0_i32 = arith.constant 0 : i32
    %c0_i32_0 = arith.constant 0 : i32
    %c0_i32_1 = arith.constant 0 : i32
    return %arg0, %c0_i32, %c0_i32_0 : i32, i32, i32
  }
}

</mosaic_0001>

<llo_original>
// kernel: tpu_custom_call.1
$region0: #{tpu_custom_call.1}
  #allocation0 [shape = 'u32[]', space=smem, size = 0x4, offset = 0x4, fixed_abs, tag = 'smem constant byte address 0x4 - core index']
  #allocation1 [shape = 'u32[144,128]{1,0:T(1,128)}', space=vmem, size = 0x12000, scoped, tag = 'internal scratch']
  #allocation2 [shape = 'f32[1,1]{1,0:T(1,128)S(1)}', space=vmem, size = 0x200, scoped, tag = 'scoped memory for tpu_custom_call.1']
  %s0 = inlined_call_operand.vmem [shape: f32[2,7,512], index: 0, kind: input, shape index: {}]
  %s1 = inlined_call_operand.vmem [shape: f32[16,7], index: 1, kind: input, shape index: {}]
  %s2 = inlined_call_operand.vmem [shape: f32[3,16,1], index: 2, kind: input, shape index: {}]
  %s3 = inlined_call_operand.hbm [shape: bf16[32,80], index: 3, kind: input, shape index: {}]
  %s4 = inlined_call_operand.vmem [shape: f32[3,32,1], index: 4, kind: input, shape index: {}]
  %s5 = inlined_call_operand.hbm [shape: bf16[64,160], index: 5, kind: input, shape index: {}]
  %s6 = inlined_call_operand.vmem [shape: f32[3,64,1], index: 6, kind: input, shape index: {}]
  %s7 = inlined_call_operand.vmem [shape: bf16[128,192], index: 7, kind: input, shape index: {}]
  %s8 = inlined_call_operand.vmem [shape: f32[3,128,1], index: 8, kind: input, shape index: {}]
  %s9 = inlined_call_operand.hbm [shape: bf16[512,1280], index: 9, kind: input, shape index: {}]
  %s10 = inlined_call_operand.hbm [shape: bf16[256,640], index: 10, kind: input, shape index: {}]
  %s11 = inlined_call_operand.vmem [shape: bf16[128,192], index: 11, kind: input, shape index: {}]
  %s12 = inlined_call_operand.vmem [shape: f32[128,32], index: 12, kind: input, shape index: {}]
  %s13 = inlined_call_operand.<no memory space> [shape: f32[1,1], index: 13, kind: input, shape index: {}]
  %s14 = inlined_call_operand.vmem [shape: f32[2,2,1], index: 14, kind: output, shape index: {}]
  %s15 = sld [smem:[#allocation0]]
  $region105: #{tpu_custom_call.1} parent=0
    _
  %s17 = ssub.s32 1, %s15
  %s18 = scalar_select 0, %s17, %s15
  %v19 = vstv %s13
  %20 = vst [vmem:[#allocation2] sm:$0x1] %v19
  $region1: #{tpu_custom_call.1} parent=0
    #allocation3 [shape = 'u8[8192]{0}', space=vmem, size = 0x2000, scoped, tag = 'input window, operand 3, single buffered']
    #allocation4 [shape = 's32[2]{0}', space=sflag, size = 0x8, scoped, tag = 'scoped memory for tpu_custom_call.1']
    #allocation5 [shape = 'u8[32768]{0}', space=vmem, size = 0x8000, scoped, tag = 'input window, operand 5, single buffered']
    #allocation6 [shape = 's32[1]{0}', space=sflag, size = 0x4, scoped, tag = 'scoped memory for tpu_custom_call.1']
    #allocation7 [shape = 'u8[1310720]{0}', space=vmem, size = 0x140000, scoped, tag = 'input window, operand 9, single buffered']
    #allocation8 [shape = 'u8[327680]{0}', space=vmem, size = 0x50000, scoped, tag = 'input window, operand 10, single buffered']
    #allocation9 [shape = 's32[1]{0}', space=sflag, size = 0x4, scoped, tag = 'scoped memory for tpu_custom_call.1']
    %21 = vsyncpa [#allocation4], 0
    %22 = vsyncpa [#allocation6], 0
    %23 = vsyncpa [#allocation9], 0
    loop: start=0, step=1, limit=4
    $region2: #{tpu_custom_call.1} parent=1 // loop_pre_header
      _
    $region3: #{tpu_custom_call.1} parent=1 // loop_header
      %s25 = sphi 0, %s29
      %p26 = scmp.ge.s32.totalorder %s25, 4
      %s35 = sphi 0, %s37
      %s38 = sphi 0, %s35
      %s39 = sphi 0, %s38
      %s55 = sphi 0, %s39
      %s59 = sphi 0, %s59
      %s61 = sphi 0, %s59
      %s62 = sphi 0, %s61
      %s76 = sphi 0, %s62
      %s80 = sphi 0, %s80
      %s82 = sphi 0, %s80
      %s83 = sphi 0, %s82
      %s97 = sphi 0, %s83
      %s101 = sphi 0, %s101
      %s103 = sphi 0, %s101
      %s104 = sphi 0, %s103
      %s118 = sphi 0, %s104
      %s122 = sphi 0, %s122
      %s124 = sphi 0, %s122
      %s125 = sphi 0, %s124
      %s139 = sphi 0, %s125
      %s143 = sphi 0, %s143
      %s145 = sphi 0, %s143
      %s146 = sphi 0, %s145
      %s160 = sphi 0, %s146
      %s164 = sphi 0, %s164
      %s166 = sphi 0, %s164
      %s167 = sphi 0, %s166
      %s181 = sphi 0, %s167
      %s185 = sphi 0, %s185
      %s187 = sphi 0, %s185
      %s188 = sphi 0, %s187
      %s202 = sphi 0, %s188
      %s206 = sphi 0, %s206
      %s208 = sphi 0, %s206
      %s209 = sphi 0, %s208
      %s223 = sphi 0, %s209
      %s227 = sphi 0, %s227
      %s229 = sphi 0, %s227
      %s230 = sphi 0, %s229
      %s244 = sphi 0, %s230
      %s248 = sphi 0, %s248
      %s250 = sphi 0, %s248
      %s251 = sphi 0, %s250
      %s265 = sphi 0, %s251
      %s269 = sphi 0, %s269
      %s271 = sphi 0, %s269
      %s272 = sphi 0, %s271
      %s286 = sphi 0, %s272
      %s290 = sphi 0, %s290
      %s292 = sphi 0, %s290
      %s293 = sphi 0, %s292
      %s307 = sphi 0, %s293
      %s311 = sphi 0, %s311
      %s313 = sphi 0, %s311
      %s314 = sphi 0, %s313
      %s328 = sphi 0, %s314
      %s334 = sphi 0, %s336
      %s337 = sphi 0, %s334
      %s338 = sphi 0, %s337
      %s354 = sphi 0, %s338
    $region4: #{tpu_custom_call.1} parent=1 // loop_header_branch
      %28 = sbr.rel (%p26) target = $region8
    $region5: #{tpu_custom_call.1} parent=1 // loop_body
      %s30 = ssub.s32 %s25, 1
      %s31 = ssub.s32 %s25, 2
      %s32 = sadd.s32 %s25, 1
      %s33 = ssub.s32 %s25, %s32
      %p34 = scmp.eq.s32.totalorder %s33, 0
      %s36 = sadd.s32 %s35, 1
      %s37 = scalar_select %p34, %s35, %s36
      %p40 = pneg %p34
      %p41 = scmp.eq.s32.totalorder %s25, 1
      %p42 = por %p40, %p41
      %p43 = scmp.ne.s32.totalorder %s35, %s38
      %p44 = scmp.eq.s32.totalorder %s25, 0
      %p45 = por %p43, %p44
      %p46 = scmp.ne.s32.totalorder %s35, %s38
      %p47 = scmp.eq.s32.totalorder %s30, 1
      %p48 = por %p46, %p47
      %p49 = scmp.ne.s32.totalorder %s38, %s39
      %p50 = scmp.eq.s32.totalorder %s30, 0
      %p51 = por %p49, %p50
      %p52 = scmp.ne.s32.totalorder %s38, %s39
      %p53 = scmp.eq.s32.totalorder %s31, 1
      %p54 = por %p52, %p53
      %p56 = scmp.ne.s32.totalorder %s39, %s55
      %p57 = scmp.eq.s32.totalorder %s31, 0
      %p58 = por %p56, %p57
      %s60 = sadd.s32 %s59, 1
      %p63 = scmp.eq.s32.totalorder %s25, 1
      %p64 = scmp.ne.s32.totalorder %s59, %s61
      %p65 = scmp.eq.s32.totalorder %s25, 0
      %p66 = por %p64, %p65
      %p67 = scmp.ne.s32.totalorder %s59, %s61
      %p68 = scmp.eq.s32.totalorder %s30, 1
      %p69 = por %p67, %p68
      %p70 = scmp.ne.s32.totalorder %s61, %s62
      %p71 = scmp.eq.s32.totalorder %s30, 0
      %p72 = por %p70, %p71
      %p73 = scmp.ne.s32.totalorder %s61, %s62
      %p74 = scmp.eq.s32.totalorder %s31, 1
      %p75 = por %p73, %p74
      %p77 = scmp.ne.s32.totalorder %s62, %s76
      %p78 = scmp.eq.s32.totalorder %s31, 0
      %p79 = por %p77, %p78
      %s81 = sadd.s32 %s80, 1
      %p84 = scmp.eq.s32.totalorder %s25, 1
      %p85 = scmp.ne.s32.totalorder %s80, %s82
      %p86 = scmp.eq.s32.totalorder %s25, 0
      %p87 = por %p85, %p86
      %p88 = scmp.ne.s32.totalorder %s80, %s82
      %p89 = scmp.eq.s32.totalorder %s30, 1
      %p90 = por %p88, %p89
      %p91 = scmp.ne.s32.totalorder %s82, %s83
      %p92 = scmp.eq.s32.totalorder %s30, 0
      %p93 = por %p91, %p92
      %p94 = scmp.ne.s32.totalorder %s82, %s83
      %p95 = scmp.eq.s32.totalorder %s31, 1
      %p96 = por %p94, %p95
      %p98 = scmp.ne.s32.totalorder %s83, %s97
      %p99 = scmp.eq.s32.totalorder %s31, 0
      %p100 = por %p98, %p99
      %s102 = sadd.s32 %s101, 1
      %p105 = scmp.eq.s32.totalorder %s25, 1
      %p106 = scmp.ne.s32.totalorder %s101, %s103
      %p107 = scmp.eq.s32.totalorder %s25, 0
      %p108 = por %p106, %p107
      %p109 = scmp.ne.s32.totalorder %s101, %s103
      %p110 = scmp.eq.s32.totalorder %s30, 1
      %p111 = por %p109, %p110
      %p112 = scmp.ne.s32.totalorder %s103, %s104
      %p113 = scmp.eq.s32.totalorder %s30, 0
      %p114 = por %p112, %p113
      %p115 = scmp.ne.s32.totalorder %s103, %s104
      %p116 = scmp.eq.s32.totalorder %s31, 1
      %p117 = por %p115, %p116
      %p119 = scmp.ne.s32.totalorder %s104, %s118
      %p120 = scmp.eq.s32.totalorder %s31, 0
      %p121 = por %p119, %p120
      %s123 = sadd.s32 %s122, 1
      %p126 = scmp.eq.s32.totalorder %s25, 1
      %p127 = scmp.ne.s32.totalorder %s122, %s124
      %p128 = scmp.eq.s32.totalorder %s25, 0
      %p129 = por %p127, %p128
      %p130 = scmp.ne.s32.totalorder %s122, %s124
      %p131 = scmp.eq.s32.totalorder %s30, 1
      %p132 = por %p130, %p131
      %p133 = scmp.ne.s32.totalorder %s124, %s125
      %p134 = scmp.eq.s32.totalorder %s30, 0
      %p135 = por %p133, %p134
      %p136 = scmp.ne.s32.totalorder %s124, %s125
      %p137 = scmp.eq.s32.totalorder %s31, 1
      %p138 = por %p136, %p137
      %p140 = scmp.ne.s32.totalorder %s125, %s139
      %p141 = scmp.eq.s32.totalorder %s31, 0
      %p142 = por %p140, %p141
      %s144 = sadd.s32 %s143, 1
      %p147 = scmp.eq.s32.totalorder %s25, 1
      %p148 = scmp.ne.s32.totalorder %s143, %s145
      %p149 = scmp.eq.s32.totalorder %s25, 0
      %p150 = por %p148, %p149
      %p151 = scmp.ne.s32.totalorder %s143, %s145
      %p152 = scmp.eq.s32.totalorder %s30, 1
      %p153 = por %p151, %p152
      %p154 = scmp.ne.s32.totalorder %s145, %s146
      %p155 = scmp.eq.s32.totalorder %s30, 0
      %p156 = por %p154, %p155
      %p157 = scmp.ne.s32.totalorder %s145, %s146
      %p158 = scmp.eq.s32.totalorder %s31, 1
      %p159 = por %p157, %p158
      %p161 = scmp.ne.s32.totalorder %s146, %s160
      %p162 = scmp.eq.s32.totalorder %s31, 0
      %p163 = por %p161, %p162
      %s165 = sadd.s32 %s164, 1
      %p168 = scmp.eq.s32.totalorder %s25, 1
      %p169 = scmp.ne.s32.totalorder %s164, %s166
      %p170 = scmp.eq.s32.totalorder %s25, 0
      %p171 = por %p169, %p170
      %p172 = scmp.ne.s32.totalorder %s164, %s166
      %p173 = scmp.eq.s32.totalorder %s30, 1
      %p174 = por %p172, %p173
      %p175 = scmp.ne.s32.totalorder %s166, %s167
      %p176 = scmp.eq.s32.totalorder %s30, 0
      %p177 = por %p175, %p176
      %p178 = scmp.ne.s32.totalorder %s166, %s167
      %p179 = scmp.eq.s32.totalorder %s31, 1
      %p180 = por %p178, %p179
      %p182 = scmp.ne.s32.totalorder %s167, %s181
      %p183 = scmp.eq.s32.totalorder %s31, 0
      %p184 = por %p182, %p183
      %s186 = sadd.s32 %s185, 1
      %p189 = scmp.eq.s32.totalorder %s25, 1
      %p190 = scmp.ne.s32.totalorder %s185, %s187
      %p191 = scmp.eq.s32.totalorder %s25, 0
      %p192 = por %p190, %p191
      %p193 = scmp.ne.s32.totalorder %s185, %s187
      %p194 = scmp.eq.s32.totalorder %s30, 1
      %p195 = por %p193, %p194
      %p196 = scmp.ne.s32.totalorder %s187, %s188
      %p197 = scmp.eq.s32.totalorder %s30, 0
      %p198 = por %p196, %p197
      %p199 = scmp.ne.s32.totalorder %s187, %s188
      %p200 = scmp.eq.s32.totalorder %s31, 1
      %p201 = por %p199, %p200
      %p203 = scmp.ne.s32.totalorder %s188, %s202
      %p204 = scmp.eq.s32.totalorder %s31, 0
      %p205 = por %p203, %p204
      %s207 = sadd.s32 %s206, 1
      %p210 = scmp.eq.s32.totalorder %s25, 1
      %p211 = scmp.ne.s32.totalorder %s206, %s208
      %p212 = scmp.eq.s32.totalorder %s25, 0
      %p213 = por %p211, %p212
      %p214 = scmp.ne.s32.totalorder %s206, %s208
      %p215 = scmp.eq.s32.totalorder %s30, 1
      %p216 = por %p214, %p215
      %p217 = scmp.ne.s32.totalorder %s208, %s209
      %p218 = scmp.eq.s32.totalorder %s30, 0
      %p219 = por %p217, %p218
      %p220 = scmp.ne.s32.totalorder %s208, %s209
      %p221 = scmp.eq.s32.totalorder %s31, 1
      %p222 = por %p220, %p221
      %p224 = scmp.ne.s32.totalorder %s209, %s223
      %p225 = scmp.eq.s32.totalorder %s31, 0
      %p226 = por %p224, %p225
      %s228 = sadd.s32 %s227, 1
      %p231 = scmp.eq.s32.totalorder %s25, 1
      %p232 = scmp.ne.s32.totalorder %s227, %s229
      %p233 = scmp.eq.s32.totalorder %s25, 0
      %p234 = por %p232, %p233
      %p235 = scmp.ne.s32.totalorder %s227, %s229
      %p236 = scmp.eq.s32.totalorder %s30, 1
      %p237 = por %p235, %p236
      %p238 = scmp.ne.s32.totalorder %s229, %s230
      %p239 = scmp.eq.s32.totalorder %s30, 0
      %p240 = por %p238, %p239
      %p241 = scmp.ne.s32.totalorder %s229, %s230
      %p242 = scmp.eq.s32.totalorder %s31, 1
      %p243 = por %p241, %p242
      %p245 = scmp.ne.s32.totalorder %s230, %s244
      %p246 = scmp.eq.s32.totalorder %s31, 0
      %p247 = por %p245, %p246
      %s249 = sadd.s32 %s248, 1
      %p252 = scmp.eq.s32.totalorder %s25, 1
      %p253 = scmp.ne.s32.totalorder %s248, %s250
      %p254 = scmp.eq.s32.totalorder %s25, 0
      %p255 = por %p253, %p254
      %p256 = scmp.ne.s32.totalorder %s248, %s250
      %p257 = scmp.eq.s32.totalorder %s30, 1
      %p258 = por %p256, %p257
      %p259 = scmp.ne.s32.totalorder %s250, %s251
      %p260 = scmp.eq.s32.totalorder %s30, 0
      %p261 = por %p259, %p260
      %p262 = scmp.ne.s32.totalorder %s250, %s251
      %p263 = scmp.eq.s32.totalorder %s31, 1
      %p264 = por %p262, %p263
      %p266 = scmp.ne.s32.totalorder %s251, %s265
      %p267 = scmp.eq.s32.totalorder %s31, 0
      %p268 = por %p266, %p267
      %s270 = sadd.s32 %s269, 1
      %p273 = scmp.eq.s32.totalorder %s25, 1
      %p274 = scmp.ne.s32.totalorder %s269, %s271
      %p275 = scmp.eq.s32.totalorder %s25, 0
      %p276 = por %p274, %p275
      %p277 = scmp.ne.s32.totalorder %s269, %s271
      %p278 = scmp.eq.s32.totalorder %s30, 1
      %p279 = por %p277, %p278
      %p280 = scmp.ne.s32.totalorder %s271, %s272
      %p281 = scmp.eq.s32.totalorder %s30, 0
      %p282 = por %p280, %p281
      %p283 = scmp.ne.s32.totalorder %s271, %s272
      %p284 = scmp.eq.s32.totalorder %s31, 1
      %p285 = por %p283, %p284
      %p287 = scmp.ne.s32.totalorder %s272, %s286
      %p288 = scmp.eq.s32.totalorder %s31, 0
      %p289 = por %p287, %p288
      %s291 = sadd.s32 %s290, 1
      %p294 = scmp.eq.s32.totalorder %s25, 1
      %p295 = scmp.ne.s32.totalorder %s290, %s292
      %p296 = scmp.eq.s32.totalorder %s25, 0
      %p297 = por %p295, %p296
      %p298 = scmp.ne.s32.totalorder %s290, %s292
      %p299 = scmp.eq.s32.totalorder %s30, 1
      %p300 = por %p298, %p299
      %p301 = scmp.ne.s32.totalorder %s292, %s293
      %p302 = scmp.eq.s32.totalorder %s30, 0
      %p303 = por %p301, %p302
      %p304 = scmp.ne.s32.totalorder %s292, %s293
      %p305 = scmp.eq.s32.totalorder %s31, 1
      %p306 = por %p304, %p305
      %p308 = scmp.ne.s32.totalorder %s293, %s307
      %p309 = scmp.eq.s32.totalorder %s31, 0
      %p310 = por %p308, %p309
      %s312 = sadd.s32 %s311, 1
      %p315 = scmp.eq.s32.totalorder %s25, 1
      %p316 = scmp.ne.s32.totalorder %s311, %s313
      %p317 = scmp.eq.s32.totalorder %s25, 0
      %p318 = por %p316, %p317
      %p319 = scmp.ne.s32.totalorder %s311, %s313
      %p320 = scmp.eq.s32.totalorder %s30, 1
      %p321 = por %p319, %p320
      %p322 = scmp.ne.s32.totalorder %s313, %s314
      %p323 = scmp.eq.s32.totalorder %s30, 0
      %p324 = por %p322, %p323
      %p325 = scmp.ne.s32.totalorder %s313, %s314
      %p326 = scmp.eq.s32.totalorder %s31, 1
      %p327 = por %p325, %p326
      %p329 = scmp.ne.s32.totalorder %s314, %s328
      %p330 = scmp.eq.s32.totalorder %s31, 0
      %p331 = por %p329, %p330
      %s332 = ssub.s32 %s25, %s32
      %p333 = scmp.eq.s32.totalorder %s332, 0
      %s335 = sadd.s32 %s334, 1
      %s336 = scalar_select %p333, %s334, %s335
      %p339 = pneg %p333
      %p340 = scmp.eq.s32.totalorder %s25, 1
      %p341 = por %p339, %p340
      %p342 = scmp.ne.s32.totalorder %s334, %s337
      %p343 = scmp.eq.s32.totalorder %s25, 0
      %p344 = por %p342, %p343
      %p345 = scmp.ne.s32.totalorder %s334, %s337
      %p346 = scmp.eq.s32.totalorder %s30, 1
      %p347 = por %p345, %p346
      %p348 = scmp.ne.s32.totalorder %s337, %s338
      %p349 = scmp.eq.s32.totalorder %s30, 0
      %p350 = por %p348, %p349
      %p351 = scmp.ne.s32.totalorder %s337, %s338
      %p352 = scmp.eq.s32.totalorder %s31, 1
      %p353 = por %p351, %p352
      %p355 = scmp.ne.s32.totalorder %s338, %s354
      %p356 = scmp.eq.s32.totalorder %s31, 0
      %p357 = por %p355, %p356
      %p358 = scmp.le.s32.totalorder 1, %s25
      %p359 = scmp.lt.s32.totalorder %s25, 3
      %p360 = pnand %p358, %p359
      %p361 = pneg %p360
      // Predicated region
      $region9: #{tpu_custom_call.1} parent=5 // pred_check
        _
      $region10: #{tpu_custom_call.1} parent=5 // pred_check_branch
        %363 = sbr.rel (%p360) target = $region12
      $region11: #{tpu_custom_call.1} parent=5 // pred_region
        %s364 = ssub.s32 %s25, 1
        // Predicated region
        $region13: #{tpu_custom_call.1} parent=11 // pred_check
          %p365 = pneg %p72
        $region14: #{tpu_custom_call.1} parent=11 // pred_check_branch
          %367 = sbr.rel (%p365) target = $region16
        $region15: #{tpu_custom_call.1} parent=11 // pred_region
          _
        $region16: #{tpu_custom_call.1} parent=11 // pred_fallthru
          _
        // Predicated region
        $region17: #{tpu_custom_call.1} parent=11 // pred_check
          %p368 = pneg %p93
        $region18: #{tpu_custom_call.1} parent=11 // pred_check_branch
          %370 = sbr.rel (%p368) target = $region20
        $region19: #{tpu_custom_call.1} parent=11 // pred_region
          _
        $region20: #{tpu_custom_call.1} parent=11 // pred_fallthru
          _
        // Predicated region
        $region21: #{tpu_custom_call.1} parent=11 // pred_check
          %p371 = pneg %p114
        $region22: #{tpu_custom_call.1} parent=11 // pred_check_branch
          %373 = sbr.rel (%p371) target = $region24
        $region23: #{tpu_custom_call.1} parent=11 // pred_region
          %s375 = ssub.s32 256, 256
          %376 = vsyncadd [#allocation4], %s375
          %s377 = sshll.u32 [#allocation3], 4
          %s378 = int_to_ptr.vmem [resolvable:$true] %s377
          %383 = dma.hbm_to_vmem [thread:$0]  %s3, 256, %s378, [#allocation4], 64, 64, 4
        $region24: #{tpu_custom_call.1} parent=11 // pred_fallthru
          _
        // Predicated region
        $region25: #{tpu_custom_call.1} parent=11 // pred_check
          %p384 = pneg %p135
        $region26: #{tpu_custom_call.1} parent=11 // pred_check_branch
          %386 = sbr.rel (%p384) target = $region28
        $region27: #{tpu_custom_call.1} parent=11 // pred_region
          _
        $region28: #{tpu_custom_call.1} parent=11 // pred_fallthru
          _
        // Predicated region
        $region29: #{tpu_custom_call.1} parent=11 // pred_check
          %p387 = pneg %p156
        $region30: #{tpu_custom_call.1} parent=11 // pred_check_branch
          %389 = sbr.rel (%p387) target = $region32
        $region31: #{tpu_custom_call.1} parent=11 // pred_region
          %s391 = ssub.s32 1024, 1024
          %392 = vsyncadd [#allocation6], %s391
          %s393 = sshll.u32 [#allocation5], 4
          %s394 = int_to_ptr.vmem [resolvable:$true] %s393
          %399 = dma.hbm_to_vmem [thread:$0]  %s5, 1024, %s394, [#allocation6], 128, 128, 8
        $region32: #{tpu_custom_call.1} parent=11 // pred_fallthru
          _
        // Predicated region
        $region33: #{tpu_custom_call.1} parent=11 // pred_check
          %p400 = pneg %p177
        $region34: #{tpu_custom_call.1} parent=11 // pred_check_branch
          %402 = sbr.rel (%p400) target = $region36
        $region35: #{tpu_custom_call.1} parent=11 // pred_region
          _
        $region36: #{tpu_custom_call.1} parent=11 // pred_fallthru
          _
        // Predicated region
        $region37: #{tpu_custom_call.1} parent=11 // pred_check
          %p403 = pneg %p198
        $region38: #{tpu_custom_call.1} parent=11 // pred_check_branch
          %405 = sbr.rel (%p403) target = $region40
        $region39: #{tpu_custom_call.1} parent=11 // pred_region
          _
        $region40: #{tpu_custom_call.1} parent=11 // pred_fallthru
          _
        // Predicated region
        $region41: #{tpu_custom_call.1} parent=11 // pred_check
          %p406 = pneg %p219
        $region42: #{tpu_custom_call.1} parent=11 // pred_check_branch
          %408 = sbr.rel (%p406) target = $region44
        $region43: #{tpu_custom_call.1} parent=11 // pred_region
          _
        $region44: #{tpu_custom_call.1} parent=11 // pred_fallthru
          _
        // Predicated region
        $region45: #{tpu_custom_call.1} parent=11 // pred_check
          %p409 = pneg %p240
        $region46: #{tpu_custom_call.1} parent=11 // pred_check_branch
          %411 = sbr.rel (%p409) target = $region48
        $region47: #{tpu_custom_call.1} parent=11 // pred_region
          %s413 = ssub.s32 40960, 40960
          %414 = vsyncadd [#allocation6], %s413
          %s415 = sshll.u32 [#allocation7], 4
          %s416 = int_to_ptr.vmem [resolvable:$true] %s415
          %421 = dma.hbm_to_vmem [thread:$0]  %s9, 40960, %s416, [#allocation6], 640, 640, 40
        $region48: #{tpu_custom_call.1} parent=11 // pred_fallthru
          _
        // Predicated region
        $region49: #{tpu_custom_call.1} parent=11 // pred_check
          %p422 = pneg %p261
        $region50: #{tpu_custom_call.1} parent=11 // pred_check_branch
          %424 = sbr.rel (%p422) target = $region52
        $region51: #{tpu_custom_call.1} parent=11 // pred_region
          %s426 = ssub.s32 10240, 10240
          %427 = vsyncadd [#allocation9], %s426
          %s428 = sshll.u32 [#allocation8], 4
          %s429 = int_to_ptr.vmem [resolvable:$true] %s428
          %434 = dma.hbm_to_vmem [thread:$0]  %s10, 10240, %s429, [#allocation9], 320, 320, 20
        $region52: #{tpu_custom_call.1} parent=11 // pred_fallthru
          _
        // Predicated region
        $region53: #{tpu_custom_call.1} parent=11 // pred_check
          %p435 = pneg %p282
        $region54: #{tpu_custom_call.1} parent=11 // pred_check_branch
          %437 = sbr.rel (%p435) target = $region56
        $region55: #{tpu_custom_call.1} parent=11 // pred_region
          _
        $region56: #{tpu_custom_call.1} parent=11 // pred_fallthru
          _
        // Predicated region
        $region57: #{tpu_custom_call.1} parent=11 // pred_check
          %p438 = pneg %p303
        $region58: #{tpu_custom_call.1} parent=11 // pred_check_branch
          %440 = sbr.rel (%p438) target = $region60
        $region59: #{tpu_custom_call.1} parent=11 // pred_region
          _
        $region60: #{tpu_custom_call.1} parent=11 // pred_fallthru
          _
        // Predicated region
        $region61: #{tpu_custom_call.1} parent=11 // pred_check
          %p441 = pneg %p324
        $region62: #{tpu_custom_call.1} parent=11 // pred_check_branch
          %443 = sbr.rel (%p441) target = $region64
        $region63: #{tpu_custom_call.1} parent=11 // pred_region
          _
        $region64: #{tpu_custom_call.1} parent=11 // pred_fallthru
          _
      $region12: #{tpu_custom_call.1} parent=5 // pred_fallthru
        _
      %p444 = scmp.lt.s32.totalorder %s25, 2
      // Predicated region
      $region65: #{tpu_custom_call.1} parent=5 // pred_check
        %p445 = pneg %p444
      $region66: #{tpu_custom_call.1} parent=5 // pred_check_branch
        %447 = sbr.rel (%p445) target = $region68
      $region67: #{tpu_custom_call.1} parent=5 // pred_region
        // Predicated region
        $region69: #{tpu_custom_call.1} parent=67 // pred_check
          %p448 = pneg %p45
        $region70: #{tpu_custom_call.1} parent=67 // pred_check_branch
          %450 = sbr.rel (%p448) target = $region72
        $region71: #{tpu_custom_call.1} parent=67 // pred_region
          %p451 = scmp.lt.s32.totalorder %s25, 1
          %s452 = scalar_select %p451, %s25, 1
          %s453 = smul.addr %s452, 4
          %s454 = smul.addr %s453, 8
          %s455 = scalar_lea.vmem %s0, %s454
        $region72: #{tpu_custom_call.1} parent=67 // pred_fallthru
          _
      $region68: #{tpu_custom_call.1} parent=5 // pred_fallthru
        _
      %p456 = scmp.le.s32.totalorder 1, %s25
      %p457 = scmp.lt.s32.totalorder %s25, 3
      %p458 = pnand %p456, %p457
      %p459 = pneg %p458
      // Predicated region
      $region73: #{tpu_custom_call.1} parent=5 // pred_check
        _
      $region74: #{tpu_custom_call.1} parent=5 // pred_check_branch
        %461 = sbr.rel (%p458) target = $region76
      $region75: #{tpu_custom_call.1} parent=5 // pred_region
        %s462 = ssub.s32 %s25, 1
        // Predicated region
        $region77: #{tpu_custom_call.1} parent=75 // pred_check
          %p463 = pneg %p114
        $region78: #{tpu_custom_call.1} parent=75 // pred_check_branch
          %465 = sbr.rel (%p463) target = $region80
        $region79: #{tpu_custom_call.1} parent=75 // pred_region
          %466 = dma.done [#allocation4], 256
        $region80: #{tpu_custom_call.1} parent=75 // pred_fallthru
          _
        // Predicated region
        $region81: #{tpu_custom_call.1} parent=75 // pred_check
          %p467 = pneg %p156
        $region82: #{tpu_custom_call.1} parent=75 // pred_check_branch
          %469 = sbr.rel (%p467) target = $region84
        $region83: #{tpu_custom_call.1} parent=75 // pred_region
          %470 = dma.done [#allocation6], 1024
        $region84: #{tpu_custom_call.1} parent=75 // pred_fallthru
          _
        // Predicated region
        $region85: #{tpu_custom_call.1} parent=75 // pred_check
          %p471 = pneg %p240
        $region86: #{tpu_custom_call.1} parent=75 // pred_check_branch
          %473 = sbr.rel (%p471) target = $region88
        $region87: #{tpu_custom_call.1} parent=75 // pred_region
          %474 = dma.done [#allocation6], 40960
        $region88: #{tpu_custom_call.1} parent=75 // pred_fallthru
          _
        // Predicated region
        $region89: #{tpu_custom_call.1} parent=75 // pred_check
          %p475 = pneg %p261
        $region90: #{tpu_custom_call.1} parent=75 // pred_check_branch
          %477 = sbr.rel (%p475) target = $region92
        $region91: #{tpu_custom_call.1} parent=75 // pred_region
          %478 = dma.done [#allocation9], 10240
        $region92: #{tpu_custom_call.1} parent=75 // pred_fallthru
          _
        %p479 = scmp.lt.s32.totalorder %s30, 1
        %s480 = scalar_select %p479, %s30, 1
        %s481 = smul.addr %s480, 4
        %s482 = smul.addr %s481, 8
        %s483 = scalar_lea.vmem %s0, %s482
        %p484 = pneg %p51
        %p485 = pneg %p48
        %p486 = pneg %p72
        %p487 = pneg %p69
        %p488 = pneg %p93
        %p489 = pneg %p90
        %p490 = pneg %p114
        %p491 = pneg %p111
        %p492 = pneg %p135
        %p493 = pneg %p132
        %p494 = pneg %p156
        %p495 = pneg %p153
        %p496 = pneg %p177
        %p497 = pneg %p174
        %p498 = pneg %p198
        %p499 = pneg %p195
        %p500 = pneg %p219
        %p501 = pneg %p216
        %p502 = pneg %p240
        %p503 = pneg %p237
        %p504 = pneg %p261
        %p505 = pneg %p258
        %p506 = pneg %p282
        %p507 = pneg %p279
        %p508 = pneg %p303
        %p509 = pneg %p300
        %p510 = pneg %p324
        %p511 = pneg %p321
        %p512 = pneg %p350
        %p513 = pneg %p347
        %p514 = scmp.lt.s32.totalorder %s30, 1
        %s515 = scalar_select %p514, %s30, 1
        %s516 = smul.addr %s515, 2
        %s517 = scalar_lea.vmem %s14, %s516
        %p518 = scmp.lt.s32.totalorder %s30, 1
        %s519 = scalar_select %p518, %s30, 1
        %s520 = smul.addr %s519, 4
        %s521 = smul.addr %s520, 8
        %s522 = scalar_lea.vmem %s0, %s521
        %p523 = scmp.lt.s32.totalorder %s30, 1
        %s524 = scalar_select %p523, %s30, 1
        %s525 = smul.addr %s524, 2
        %s526 = scalar_lea.vmem %s14, %s525
        %v528 = vld [vmem:[%s522] sm:$0x7f]
        %v529 = vld [vmem:[%s522 + $0x8] sm:$0x7f]
        %v530 = vld [vmem:[%s522 + $0x10] sm:$0x7f]
        %v531 = vld [vmem:[%s522 + $0x18] sm:$0x7f]
        %v532 = vld [vmem:[%s1] sm:$0xff]
        %v533 = vld [vmem:[%s1 + $0x8] sm:$0xff]
        %535 = vset.pattern.permute.xlu0 0
        %536 = vperm.xlu0 %535, %v532
        %v537 = vpop.permute.xlu0 %536
        %540 = vset.pattern.permute.xlu0 0
        %541 = vperm.xlu0 %540, %v533
        %v542 = vpop.permute.xlu0 %541
        %v544 = vlaneseq
        %v545 = vshrl.u32 %v544, 7
        %v546 = vsub.s32 0, %v545
        %v547 = vrot.slane %v528, %v546
        %v548 = vlaneseq
        %v549 = vshrl.u32 %v548, 7
        %v550 = vsub.s32 0, %v549
        %v551 = vrot.slane %v529, %v550
        %v552 = vlaneseq
        %v553 = vshrl.u32 %v552, 7
        %v554 = vsub.s32 0, %v553
        %v555 = vrot.slane %v530, %v554
        %v556 = vlaneseq
        %v557 = vshrl.u32 %v556, 7
        %v558 = vsub.s32 0, %v557
        %v559 = vrot.slane %v531, %v558
        %v560 = vmul.f32 %v537, %v547
        %v561 = vmul.f32 %v537, %v551
        %v562 = vmul.f32 %v537, %v555
        %v563 = vmul.f32 %v537, %v559
        %v564 = vmul.f32 %v542, %v547
        %v565 = vmul.f32 %v542, %v551
        %v566 = vmul.f32 %v542, %v555
        %v567 = vmul.f32 %v542, %v559
        %v568 = vadd.f32 %v560, 0.0
        %v569 = vadd.f32 %v561, 0.0
        %v570 = vadd.f32 %v562, 0.0
        %v571 = vadd.f32 %v563, 0.0
        %v572 = vadd.f32 %v564, 0.0
        %v573 = vadd.f32 %v565, 0.0
        %v574 = vadd.f32 %v566, 0.0
        %v575 = vadd.f32 %v567, 0.0
        %576 = vset.pattern.permute.xlu0 1
        %577 = vperm.xlu0 %576, %v532
        %v578 = vpop.permute.xlu0 %577
        %580 = vset.pattern.permute.xlu0 1
        %581 = vperm.xlu0 %580, %v533
        %v582 = vpop.permute.xlu0 %581
        %v584 = vlaneseq
        %v585 = vshrl.u32 %v584, 7
        %v586 = vsub.s32 1, %v585
        %v587 = vrot.slane %v528, %v586
        %v588 = vlaneseq
        %v589 = vshrl.u32 %v588, 7
        %v590 = vsub.s32 1, %v589
        %v591 = vrot.slane %v529, %v590
        %v592 = vlaneseq
        %v593 = vshrl.u32 %v592, 7
        %v594 = vsub.s32 1, %v593
        %v595 = vrot.slane %v530, %v594
        %v596 = vlaneseq
        %v597 = vshrl.u32 %v596, 7
        %v598 = vsub.s32 1, %v597
        %v599 = vrot.slane %v531, %v598
        %v600 = vmul.f32 %v578, %v587
        %v601 = vmul.f32 %v578, %v591
        %v602 = vmul.f32 %v578, %v595
        %v603 = vmul.f32 %v578, %v599
        %v604 = vmul.f32 %v582, %v587
        %v605 = vmul.f32 %v582, %v591
        %v606 = vmul.f32 %v582, %v595
        %v607 = vmul.f32 %v582, %v599
        %v608 = vadd.f32 %v568, %v600
        %v609 = vadd.f32 %v569, %v601
        %v610 = vadd.f32 %v570, %v602
        %v611 = vadd.f32 %v571, %v603
        %v612 = vadd.f32 %v572, %v604
        %v613 = vadd.f32 %v573, %v605
        %v614 = vadd.f32 %v574, %v606
        %v615 = vadd.f32 %v575, %v607
        %616 = vset.pattern.permute.xlu0 2
        %617 = vperm.xlu0 %616, %v532
        %v618 = vpop.permute.xlu0 %617
        %620 = vset.pattern.permute.xlu0 2
        %621 = vperm.xlu0 %620, %v533
        %v622 = vpop.permute.xlu0 %621
        %v624 = vlaneseq
        %v625 = vshrl.u32 %v624, 7
        %v626 = vsub.s32 2, %v625
        %v627 = vrot.slane %v528, %v626
        %v628 = vlaneseq
        %v629 = vshrl.u32 %v628, 7
        %v630 = vsub.s32 2, %v629
        %v631 = vrot.slane %v529, %v630
        %v632 = vlaneseq
        %v633 = vshrl.u32 %v632, 7
        %v634 = vsub.s32 2, %v633
        %v635 = vrot.slane %v530, %v634
        %v636 = vlaneseq
        %v637 = vshrl.u32 %v636, 7
        %v638 = vsub.s32 2, %v637
        %v639 = vrot.slane %v531, %v638
        %v640 = vmul.f32 %v618, %v627
        %v641 = vmul.f32 %v618, %v631
        %v642 = vmul.f32 %v618, %v635
        %v643 = vmul.f32 %v618, %v639
        %v644 = vmul.f32 %v622, %v627
        %v645 = vmul.f32 %v622, %v631
        %v646 = vmul.f32 %v622, %v635
        %v647 = vmul.f32 %v622, %v639
        %v648 = vadd.f32 %v608, %v640
        %v649 = vadd.f32 %v609, %v641
        %v650 = vadd.f32 %v610, %v642
        %v651 = vadd.f32 %v611, %v643
        %v652 = vadd.f32 %v612, %v644
        %v653 = vadd.f32 %v613, %v645
        %v654 = vadd.f32 %v614, %v646
        %v655 = vadd.f32 %v615, %v647
        %656 = vset.pattern.permute.xlu0 3
        %657 = vperm.xlu0 %656, %v532
        %v658 = vpop.permute.xlu0 %657
        %660 = vset.pattern.permute.xlu0 3
        %661 = vperm.xlu0 %660, %v533
        %v662 = vpop.permute.xlu0 %661
        %v664 = vlaneseq
        %v665 = vshrl.u32 %v664, 7
        %v666 = vsub.s32 3, %v665
        %v667 = vrot.slane %v528, %v666
        %v668 = vlaneseq
        %v669 = vshrl.u32 %v668, 7
        %v670 = vsub.s32 3, %v669
        %v671 = vrot.slane %v529, %v670
        %v672 = vlaneseq
        %v673 = vshrl.u32 %v672, 7
        %v674 = vsub.s32 3, %v673
        %v675 = vrot.slane %v530, %v674
        %v676 = vlaneseq
        %v677 = vshrl.u32 %v676, 7
        %v678 = vsub.s32 3, %v677
        %v679 = vrot.slane %v531, %v678
        %v680 = vmul.f32 %v658, %v667
        %v681 = vmul.f32 %v658, %v671
        %v682 = vmul.f32 %v658, %v675
        %v683 = vmul.f32 %v658, %v679
        %v684 = vmul.f32 %v662, %v667
        %v685 = vmul.f32 %v662, %v671
        %v686 = vmul.f32 %v662, %v675
        %v687 = vmul.f32 %v662, %v679
        %v688 = vadd.f32 %v648, %v680
        %v689 = vadd.f32 %v649, %v681
        %v690 = vadd.f32 %v650, %v682
        %v691 = vadd.f32 %v651, %v683
        %v692 = vadd.f32 %v652, %v684
        %v693 = vadd.f32 %v653, %v685
        %v694 = vadd.f32 %v654, %v686
        %v695 = vadd.f32 %v655, %v687
        %696 = vset.pattern.permute.xlu0 4
        %697 = vperm.xlu0 %696, %v532
        %v698 = vpop.permute.xlu0 %697
        %700 = vset.pattern.permute.xlu0 4
        %701 = vperm.xlu0 %700, %v533
        %v702 = vpop.permute.xlu0 %701
        %v704 = vlaneseq
        %v705 = vshrl.u32 %v704, 7
        %v706 = vsub.s32 4, %v705
        %v707 = vrot.slane %v528, %v706
        %v708 = vlaneseq
        %v709 = vshrl.u32 %v708, 7
        %v710 = vsub.s32 4, %v709
        %v711 = vrot.slane %v529, %v710
        %v712 = vlaneseq
        %v713 = vshrl.u32 %v712, 7
        %v714 = vsub.s32 4, %v713
        %v715 = vrot.slane %v530, %v714
        %v716 = vlaneseq
        %v717 = vshrl.u32 %v716, 7
        %v718 = vsub.s32 4, %v717
        %v719 = vrot.slane %v531, %v718
        %v720 = vmul.f32 %v698, %v707
        %v721 = vmul.f32 %v698, %v711
        %v722 = vmul.f32 %v698, %v715
        %v723 = vmul.f32 %v698, %v719
        %v724 = vmul.f32 %v702, %v707
        %v725 = vmul.f32 %v702, %v711
        %v726 = vmul.f32 %v702, %v715
        %v727 = vmul.f32 %v702, %v719
        %v728 = vadd.f32 %v688, %v720
        %v729 = vadd.f32 %v689, %v721
        %v730 = vadd.f32 %v690, %v722
        %v731 = vadd.f32 %v691, %v723
        %v732 = vadd.f32 %v692, %v724
        %v733 = vadd.f32 %v693, %v725
        %v734 = vadd.f32 %v694, %v726
        %v735 = vadd.f32 %v695, %v727
        %736 = vset.pattern.permute.xlu0 5
        %737 = vperm.xlu0 %736, %v532
        %v738 = vpop.permute.xlu0 %737
        %740 = vset.pattern.permute.xlu0 5
        %741 = vperm.xlu0 %740, %v533
        %v742 = vpop.permute.xlu0 %741
        %v744 = vlaneseq
        %v745 = vshrl.u32 %v744, 7
        %v746 = vsub.s32 5, %v745
        %v747 = vrot.slane %v528, %v746
        %v748 = vlaneseq
        %v749 = vshrl.u32 %v748, 7
        %v750 = vsub.s32 5, %v749
        %v751 = vrot.slane %v529, %v750
        %v752 = vlaneseq
        %v753 = vshrl.u32 %v752, 7
        %v754 = vsub.s32 5, %v753
        %v755 = vrot.slane %v530, %v754
        %v756 = vlaneseq
        %v757 = vshrl.u32 %v756, 7
        %v758 = vsub.s32 5, %v757
        %v759 = vrot.slane %v531, %v758
        %v760 = vmul.f32 %v738, %v747
        %v761 = vmul.f32 %v738, %v751
        %v762 = vmul.f32 %v738, %v755
        %v763 = vmul.f32 %v738, %v759
        %v764 = vmul.f32 %v742, %v747
        %v765 = vmul.f32 %v742, %v751
        %v766 = vmul.f32 %v742, %v755
        %v767 = vmul.f32 %v742, %v759
        %v768 = vadd.f32 %v728, %v760
        %v769 = vadd.f32 %v729, %v761
        %v770 = vadd.f32 %v730, %v762
        %v771 = vadd.f32 %v731, %v763
        %v772 = vadd.f32 %v732, %v764
        %v773 = vadd.f32 %v733, %v765
        %v774 = vadd.f32 %v734, %v766
        %v775 = vadd.f32 %v735, %v767
        %776 = vset.pattern.permute.xlu0 6
        %777 = vperm.xlu0 %776, %v532
        %v778 = vpop.permute.xlu0 %777
        %780 = vset.pattern.permute.xlu0 6
        %781 = vperm.xlu0 %780, %v533
        %v782 = vpop.permute.xlu0 %781
        %v784 = vlaneseq
        %v785 = vshrl.u32 %v784, 7
        %v786 = vsub.s32 6, %v785
        %v787 = vrot.slane %v528, %v786
        %v788 = vlaneseq
        %v789 = vshrl.u32 %v788, 7
        %v790 = vsub.s32 6, %v789
        %v791 = vrot.slane %v529, %v790
        %v792 = vlaneseq
        %v793 = vshrl.u32 %v792, 7
        %v794 = vsub.s32 6, %v793
        %v795 = vrot.slane %v530, %v794
        %v796 = vlaneseq
        %v797 = vshrl.u32 %v796, 7
        %v798 = vsub.s32 6, %v797
        %v799 = vrot.slane %v531, %v798
        %v800 = vmul.f32 %v778, %v787
        %v801 = vmul.f32 %v778, %v791
        %v802 = vmul.f32 %v778, %v795
        %v803 = vmul.f32 %v778, %v799
        %v804 = vmul.f32 %v782, %v787
        %v805 = vmul.f32 %v782, %v791
        %v806 = vmul.f32 %v782, %v795
        %v807 = vmul.f32 %v782, %v799
        %v808 = vadd.f32 %v768, %v800
        %v809 = vadd.f32 %v769, %v801
        %v810 = vadd.f32 %v770, %v802
        %v811 = vadd.f32 %v771, %v803
        %v812 = vadd.f32 %v772, %v804
        %v813 = vadd.f32 %v773, %v805
        %v814 = vadd.f32 %v774, %v806
        %v815 = vadd.f32 %v775, %v807
        %v816 = vld [vmem:[%s2] sm:$0xff]
        %v817 = vld [vmem:[%s2 + $0x8] sm:$0xff]
        %819 = vset.pattern.permute.xlu0 0
        %820 = vperm.xlu0 %819, %v816
        %v821 = vpop.permute.xlu0 %820
        %824 = vset.pattern.permute.xlu0 0
        %825 = vperm.xlu0 %824, %v817
        %v826 = vpop.permute.xlu0 %825
        %v828 = vadd.f32 %v808, %v821
        %v829 = vadd.f32 %v809, %v821
        %v830 = vadd.f32 %v810, %v821
        %v831 = vadd.f32 %v811, %v821
        %v832 = vadd.f32 %v812, %v826
        %v833 = vadd.f32 %v813, %v826
        %v834 = vadd.f32 %v814, %v826
        %v835 = vadd.f32 %v815, %v826
        %vm836 = vcmp.ge.f32.partialorder %v828, 0.0
        %vm837 = vcmp.ge.f32.partialorder %v829, 0.0
        %vm838 = vcmp.ge.f32.partialorder %v830, 0.0
        %vm839 = vcmp.ge.f32.partialorder %v831, 0.0
        %vm840 = vcmp.ge.f32.partialorder %v832, 0.0
        %vm841 = vcmp.ge.f32.partialorder %v833, 0.0
        %vm842 = vcmp.ge.f32.partialorder %v834, 0.0
        %vm843 = vcmp.ge.f32.partialorder %v835, 0.0
        %v844 = vmul.f32 %v828, 0.2
        %v845 = vmul.f32 %v829, 0.2
        %v846 = vmul.f32 %v830, 0.2
        %v847 = vmul.f32 %v831, 0.2
        %v848 = vmul.f32 %v832, 0.2
        %v849 = vmul.f32 %v833, 0.2
        %v850 = vmul.f32 %v834, 0.2
        %v851 = vmul.f32 %v835, 0.2
        %v852 = vsel %vm836, %v828, %v844
        %v853 = vsel %vm837, %v829, %v845
        %v854 = vsel %vm838, %v830, %v846
        %v855 = vsel %vm839, %v831, %v847
        %v856 = vsel %vm840, %v832, %v848
        %v857 = vsel %vm841, %v833, %v849
        %v858 = vsel %vm842, %v834, %v850
        %v859 = vsel %vm843, %v835, %v851
        %s860 = scalar_lea.vmem %s2, 16
        %v861 = vld [vmem:[%s860] sm:$0xff]
        %v862 = vld [vmem:[%s860 + $0x8] sm:$0xff]
        %864 = vset.pattern.permute.xlu0 0
        %865 = vperm.xlu0 %864, %v861
        %v866 = vpop.permute.xlu0 %865
        %869 = vset.pattern.permute.xlu0 0
        %870 = vperm.xlu0 %869, %v862
        %v871 = vpop.permute.xlu0 %870
        %v873 = vmul.f32 %v852, %v866
        %v874 = vmul.f32 %v853, %v866
        %v875 = vmul.f32 %v854, %v866
        %v876 = vmul.f32 %v855, %v866
        %v877 = vmul.f32 %v856, %v871
        %v878 = vmul.f32 %v857, %v871
        %v879 = vmul.f32 %v858, %v871
        %v880 = vmul.f32 %v859, %v871
        %s881 = scalar_lea.vmem %s2, 32
        %v882 = vld [vmem:[%s881] sm:$0xff]
        %v883 = vld [vmem:[%s881 + $0x8] sm:$0xff]
        %885 = vset.pattern.permute.xlu0 0
        %886 = vperm.xlu0 %885, %v882
        %v887 = vpop.permute.xlu0 %886
        %890 = vset.pattern.permute.xlu0 0
        %891 = vperm.xlu0 %890, %v883
        %v892 = vpop.permute.xlu0 %891
        %v894 = vadd.f32 %v873, %v887
        %v895 = vadd.f32 %v874, %v887
        %v896 = vadd.f32 %v875, %v887
        %v897 = vadd.f32 %v876, %v887
        %v898 = vadd.f32 %v877, %v892
        %v899 = vadd.f32 %v878, %v892
        %v900 = vadd.f32 %v879, %v892
        %v901 = vadd.f32 %v880, %v892
        %v902 = vpack.c.bf16 %v898, %v894
        %v903 = vpack.c.bf16 %v899, %v895
        %v904 = vpack.c.bf16 %v900, %v896
        %v905 = vpack.c.bf16 %v901, %v897
        %v906 = vld [vmem:[#allocation7] sm:$0xff]
        %v907 = vld [vmem:[#allocation7 + $0x8] sm:$0xff]
        %v908 = vld [vmem:[#allocation7 + $0x10] sm:$0xff]
        %v909 = vld [vmem:[#allocation7 + $0x18] sm:$0xff]
        %v910 = vld [vmem:[#allocation7 + $0x20] sm:$0xff]
        %v911 = vld [vmem:[#allocation7 + $0x28] sm:$0xff]
        %v912 = vld [vmem:[#allocation7 + $0x30] sm:$0xff]
        %v913 = vld [vmem:[#allocation7 + $0x38] sm:$0xff]
        %v914 = vld [vmem:[#allocation7 + $0x40] sm:$0xff]
        %v915 = vld [vmem:[#allocation7 + $0x48] sm:$0xff]
        %v916 = vld [vmem:[#allocation7 + $0x50] sm:$0xff]
        %v917 = vld [vmem:[#allocation7 + $0x58] sm:$0xff]
        %v918 = vld [vmem:[#allocation7 + $0x60] sm:$0xff]
        %v919 = vld [vmem:[#allocation7 + $0x68] sm:$0xff]
        %v920 = vld [vmem:[#allocation7 + $0x70] sm:$0xff]
        %v921 = vld [vmem:[#allocation7 + $0x78] sm:$0xff]
        %v922 = vld [vmem:[#allocation7 + $0x80] sm:$0xff]
        %v923 = vld [vmem:[#allocation7 + $0x88] sm:$0xff]
        %v924 = vld [vmem:[#allocation7 + $0x90] sm:$0xff]
        %v925 = vld [vmem:[#allocation7 + $0x98] sm:$0xff]
        %v926 = vld [vmem:[#allocation7 + $0xa0] sm:$0xff]
        %v927 = vld [vmem:[#allocation7 + $0xa8] sm:$0xff]
        %v928 = vld [vmem:[#allocation7 + $0xb0] sm:$0xff]
        %v929 = vld [vmem:[#allocation7 + $0xb8] sm:$0xff]
        %v930 = vld [vmem:[#allocation7 + $0xc0] sm:$0xff]
        %v931 = vld [vmem:[#allocation7 + $0xc8] sm:$0xff]
        %v932 = vld [vmem:[#allocation7 + $0xd0] sm:$0xff]
        %v933 = vld [vmem:[#allocation7 + $0xd8] sm:$0xff]
        %v934 = vld [vmem:[#allocation7 + $0xe0] sm:$0xff]
        %v935 = vld [vmem:[#allocation7 + $0xe8] sm:$0xff]
        %v936 = vld [vmem:[#allocation7 + $0xf0] sm:$0xff]
        %v937 = vld [vmem:[#allocation7 + $0xf8] sm:$0xff]
        %v938 = vld [vmem:[#allocation7 + $0x100] sm:$0xff]
        %v939 = vld [vmem:[#allocation7 + $0x108] sm:$0xff]
        %v940 = vld [vmem:[#allocation7 + $0x110] sm:$0xff]
        %v941 = vld [vmem:[#allocation7 + $0x118] sm:$0xff]
        %v942 = vld [vmem:[#allocation7 + $0x120] sm:$0xff]
        %v943 = vld [vmem:[#allocation7 + $0x128] sm:$0xff]
        %v944 = vld [vmem:[#allocation7 + $0x130] sm:$0xff]
        %v945 = vld [vmem:[#allocation7 + $0x138] sm:$0xff]
        %v946 = vld [vmem:[#allocation7 + $0x140] sm:$0xff]
        %v947 = vld [vmem:[#allocation7 + $0x148] sm:$0xff]
        %v948 = vld [vmem:[#allocation7 + $0x150] sm:$0xff]
        %v949 = vld [vmem:[#allocation7 + $0x158] sm:$0xff]
        %v950 = vld [vmem:[#allocation7 + $0x160] sm:$0xff]
        %v951 = vld [vmem:[#allocation7 + $0x168] sm:$0xff]
        %v952 = vld [vmem:[#allocation7 + $0x170] sm:$0xff]
        %v953 = vld [vmem:[#allocation7 + $0x178] sm:$0xff]
        %v954 = vld [vmem:[#allocation7 + $0x180] sm:$0xff]
        %v955 = vld [vmem:[#allocation7 + $0x188] sm:$0xff]
        %v956 = vld [vmem:[#allocation7 + $0x190] sm:$0xff]
        %v957 = vld [vmem:[#allocation7 + $0x198] sm:$0xff]
        %v958 = vld [vmem:[#allocation7 + $0x1a0] sm:$0xff]
        %v959 = vld [vmem:[#allocation7 + $0x1a8] sm:$0xff]
        %v960 = vld [vmem:[#allocation7 + $0x1b0] sm:$0xff]
        %v961 = vld [vmem:[#allocation7 + $0x1b8] sm:$0xff]
        %v962 = vld [vmem:[#allocation7 + $0x1c0] sm:$0xff]
        %v963 = vld [vmem:[#allocation7 + $0x1c8] sm:$0xff]
        %v964 = vld [vmem:[#allocation7 + $0x1d0] sm:$0xff]
        %v965 = vld [vmem:[#allocation7 + $0x1d8] sm:$0xff]
        %v966 = vld [vmem:[#allocation7 + $0x1e0] sm:$0xff]
        %v967 = vld [vmem:[#allocation7 + $0x1e8] sm:$0xff]
        %v968 = vld [vmem:[#allocation7 + $0x1f0] sm:$0xff]
        %v969 = vld [vmem:[#allocation7 + $0x1f8] sm:$0xff]
        %v970 = vld [vmem:[#allocation7 + $0x200] sm:$0xff]
        %v971 = vld [vmem:[#allocation7 + $0x208] sm:$0xff]
        %v972 = vld [vmem:[#allocation7 + $0x210] sm:$0xff]
        %v973 = vld [vmem:[#allocation7 + $0x218] sm:$0xff]
        %v974 = vld [vmem:[#allocation7 + $0x220] sm:$0xff]
        %v975 = vld [vmem:[#allocation7 + $0x228] sm:$0xff]
        %v976 = vld [vmem:[#allocation7 + $0x230] sm:$0xff]
        %v977 = vld [vmem:[#allocation7 + $0x238] sm:$0xff]
        %v978 = vld [vmem:[#allocation7 + $0x240] sm:$0xff]
        %v979 = vld [vmem:[#allocation7 + $0x248] sm:$0xff]
        %v980 = vld [vmem:[#allocation7 + $0x250] sm:$0xff]
        %v981 = vld [vmem:[#allocation7 + $0x258] sm:$0xff]
        %v982 = vld [vmem:[#allocation7 + $0x260] sm:$0xff]
        %v983 = vld [vmem:[#allocation7 + $0x268] sm:$0xff]
        %v984 = vld [vmem:[#allocation7 + $0x270] sm:$0xff]
        %v985 = vld [vmem:[#allocation7 + $0x278] sm:$0xff]
        %v986 = vld [vmem:[#allocation7 + $0x280] sm:$0xff]
        %v987 = vld [vmem:[#allocation7 + $0x288] sm:$0xff]
        %v988 = vld [vmem:[#allocation7 + $0x290] sm:$0xff]
        %v989 = vld [vmem:[#allocation7 + $0x298] sm:$0xff]
        %v990 = vld [vmem:[#allocation7 + $0x2a0] sm:$0xff]
        %v991 = vld [vmem:[#allocation7 + $0x2a8] sm:$0xff]
        %v992 = vld [vmem:[#allocation7 + $0x2b0] sm:$0xff]
        %v993 = vld [vmem:[#allocation7 + $0x2b8] sm:$0xff]
        %v994 = vld [vmem:[#allocation7 + $0x2c0] sm:$0xff]
        %v995 = vld [vmem:[#allocation7 + $0x2c8] sm:$0xff]
        %v996 = vld [vmem:[#allocation7 + $0x2d0] sm:$0xff]
        %v997 = vld [vmem:[#allocation7 + $0x2d8] sm:$0xff]
        %v998 = vld [vmem:[#allocation7 + $0x2e0] sm:$0xff]
        %v999 = vld [vmem:[#allocation7 + $0x2e8] sm:$0xff]
        %v1000 = vld [vmem:[#allocation7 + $0x2f0] sm:$0xff]
        %v1001 = vld [vmem:[#allocation7 + $0x2f8] sm:$0xff]
        %v1002 = vld [vmem:[#allocation7 + $0x300] sm:$0xff]
        %v1003 = vld [vmem:[#allocation7 + $0x308] sm:$0xff]
        %v1004 = vld [vmem:[#allocation7 + $0x310] sm:$0xff]
        %v1005 = vld [vmem:[#allocation7 + $0x318] sm:$0xff]
        %v1006 = vld [vmem:[#allocation7 + $0x320] sm:$0xff]
        %v1007 = vld [vmem:[#allocation7 + $0x328] sm:$0xff]
        %v1008 = vld [vmem:[#allocation7 + $0x330] sm:$0xff]
        %v1009 = vld [vmem:[#allocation7 + $0x338] sm:$0xff]
        %v1010 = vld [vmem:[#allocation7 + $0x340] sm:$0xff]
        %v1011 = vld [vmem:[#allocation7 + $0x348] sm:$0xff]
        %v1012 = vld [vmem:[#allocation7 + $0x350] sm:$0xff]
        %v1013 = vld [vmem:[#allocation7 + $0x358] sm:$0xff]
        %v1014 = vld [vmem:[#allocation7 + $0x360] sm:$0xff]
        %v1015 = vld [vmem:[#allocation7 + $0x368] sm:$0xff]
        %v1016 = vld [vmem:[#allocation7 + $0x370] sm:$0xff]
        %v1017 = vld [vmem:[#allocation7 + $0x378] sm:$0xff]
        %v1018 = vld [vmem:[#allocation7 + $0x380] sm:$0xff]
        %v1019 = vld [vmem:[#allocation7 + $0x388] sm:$0xff]
        %v1020 = vld [vmem:[#allocation7 + $0x390] sm:$0xff]
        %v1021 = vld [vmem:[#allocation7 + $0x398] sm:$0xff]
        %v1022 = vld [vmem:[#allocation7 + $0x3a0] sm:$0xff]
        %v1023 = vld [vmem:[#allocation7 + $0x3a8] sm:$0xff]
        %v1024 = vld [vmem:[#allocation7 + $0x3b0] sm:$0xff]
        %v1025 = vld [vmem:[#allocation7 + $0x3b8] sm:$0xff]
        %v1026 = vld [vmem:[#allocation7 + $0x3c0] sm:$0xff]
        %v1027 = vld [vmem:[#allocation7 + $0x3c8] sm:$0xff]
        %v1028 = vld [vmem:[#allocation7 + $0x3d0] sm:$0xff]
        %v1029 = vld [vmem:[#allocation7 + $0x3d8] sm:$0xff]
        %v1030 = vld [vmem:[#allocation7 + $0x3e0] sm:$0xff]
        %v1031 = vld [vmem:[#allocation7 + $0x3e8] sm:$0xff]
        %v1032 = vld [vmem:[#allocation7 + $0x3f0] sm:$0xff]
        %v1033 = vld [vmem:[#allocation7 + $0x3f8] sm:$0xff]
        %v1034 = vld [vmem:[#allocation7 + $0x400] sm:$0xff]
        %v1035 = vld [vmem:[#allocation7 + $0x408] sm:$0xff]
        %v1036 = vld [vmem:[#allocation7 + $0x410] sm:$0xff]
        %v1037 = vld [vmem:[#allocation7 + $0x418] sm:$0xff]
        %v1038 = vld [vmem:[#allocation7 + $0x420] sm:$0xff]
        %v1039 = vld [vmem:[#allocation7 + $0x428] sm:$0xff]
        %v1040 = vld [vmem:[#allocation7 + $0x430] sm:$0xff]
        %v1041 = vld [vmem:[#allocation7 + $0x438] sm:$0xff]
        %v1042 = vld [vmem:[#allocation7 + $0x440] sm:$0xff]
        %v1043 = vld [vmem:[#allocation7 + $0x448] sm:$0xff]
        %v1044 = vld [vmem:[#allocation7 + $0x450] sm:$0xff]
        %v1045 = vld [vmem:[#allocation7 + $0x458] sm:$0xff]
        %v1046 = vld [vmem:[#allocation7 + $0x460] sm:$0xff]
        %v1047 = vld [vmem:[#allocation7 + $0x468] sm:$0xff]
        %v1048 = vld [vmem:[#allocation7 + $0x470] sm:$0xff]
        %v1049 = vld [vmem:[#allocation7 + $0x478] sm:$0xff]
        %v1050 = vld [vmem:[#allocation7 + $0x480] sm:$0xff]
        %v1051 = vld [vmem:[#allocation7 + $0x488] sm:$0xff]
        %v1052 = vld [vmem:[#allocation7 + $0x490] sm:$0xff]
        %v1053 = vld [vmem:[#allocation7 + $0x498] sm:$0xff]
        %v1054 = vld [vmem:[#allocation7 + $0x4a0] sm:$0xff]
        %v1055 = vld [vmem:[#allocation7 + $0x4a8] sm:$0xff]
        %v1056 = vld [vmem:[#allocation7 + $0x4b0] sm:$0xff]
        %v1057 = vld [vmem:[#allocation7 + $0x4b8] sm:$0xff]
        %v1058 = vld [vmem:[#allocation7 + $0x4c0] sm:$0xff]
        %v1059 = vld [vmem:[#allocation7 + $0x4c8] sm:$0xff]
        %v1060 = vld [vmem:[#allocation7 + $0x4d0] sm:$0xff]
        %v1061 = vld [vmem:[#allocation7 + $0x4d8] sm:$0xff]
        %v1062 = vld [vmem:[#allocation7 + $0x4e0] sm:$0xff]
        %v1063 = vld [vmem:[#allocation7 + $0x4e8] sm:$0xff]
        %v1064 = vld [vmem:[#allocation7 + $0x4f0] sm:$0xff]
        %v1065 = vld [vmem:[#allocation7 + $0x4f8] sm:$0xff]
        %v1066 = vld [vmem:[#allocation7 + $0x500] sm:$0xff]
        %v1067 = vld [vmem:[#allocation7 + $0x508] sm:$0xff]
        %v1068 = vld [vmem:[#allocation7 + $0x510] sm:$0xff]
        %v1069 = vld [vmem:[#allocation7 + $0x518] sm:$0xff]
        %v1070 = vld [vmem:[#allocation7 + $0x520] sm:$0xff]
        %v1071 = vld [vmem:[#allocation7 + $0x528] sm:$0xff]
        %v1072 = vld [vmem:[#allocation7 + $0x530] sm:$0xff]
        %v1073 = vld [vmem:[#allocation7 + $0x538] sm:$0xff]
        %v1074 = vld [vmem:[#allocation7 + $0x540] sm:$0xff]
        %v1075 = vld [vmem:[#allocation7 + $0x548] sm:$0xff]
        %v1076 = vld [vmem:[#allocation7 + $0x550] sm:$0xff]
        %v1077 = vld [vmem:[#allocation7 + $0x558] sm:$0xff]
        %v1078 = vld [vmem:[#allocation7 + $0x560] sm:$0xff]
        %v1079 = vld [vmem:[#allocation7 + $0x568] sm:$0xff]
        %v1080 = vld [vmem:[#allocation7 + $0x570] sm:$0xff]
        %v1081 = vld [vmem:[#allocation7 + $0x578] sm:$0xff]
        %v1082 = vld [vmem:[#allocation7 + $0x580] sm:$0xff]
        %v1083 = vld [vmem:[#allocation7 + $0x588] sm:$0xff]
        %v1084 = vld [vmem:[#allocation7 + $0x590] sm:$0xff]
        %v1085 = vld [vmem:[#allocation7 + $0x598] sm:$0xff]
        %v1086 = vld [vmem:[#allocation7 + $0x5a0] sm:$0xff]
        %v1087 = vld [vmem:[#allocation7 + $0x5a8] sm:$0xff]
        %v1088 = vld [vmem:[#allocation7 + $0x5b0] sm:$0xff]
        %v1089 = vld [vmem:[#allocation7 + $0x5b8] sm:$0xff]
        %v1090 = vld [vmem:[#allocation7 + $0x5c0] sm:$0xff]
        %v1091 = vld [vmem:[#allocation7 + $0x5c8] sm:$0xff]
        %v1092 = vld [vmem:[#allocation7 + $0x5d0] sm:$0xff]
        %v1093 = vld [vmem:[#allocation7 + $0x5d8] sm:$0xff]
        %v1094 = vld [vmem:[#allocation7 + $0x5e0] sm:$0xff]
        %v1095 = vld [vmem:[#allocation7 + $0x5e8] sm:$0xff]
        %v1096 = vld [vmem:[#allocation7 + $0x5f0] sm:$0xff]
        %v1097 = vld [vmem:[#allocation7 + $0x5f8] sm:$0xff]
        %v1098 = vld [vmem:[#allocation7 + $0x600] sm:$0xff]
        %v1099 = vld [vmem:[#allocation7 + $0x608] sm:$0xff]
        %v1100 = vld [vmem:[#allocation7 + $0x610] sm:$0xff]
        %v1101 = vld [vmem:[#allocation7 + $0x618] sm:$0xff]
        %v1102 = vld [vmem:[#allocation7 + $0x620] sm:$0xff]
        %v1103 = vld [vmem:[#allocation7 + $0x628] sm:$0xff]
        %v1104 = vld [vmem:[#allocation7 + $0x630] sm:$0xff]
        %v1105 = vld [vmem:[#allocation7 + $0x638] sm:$0xff]
        %v1106 = vld [vmem:[#allocation7 + $0x640] sm:$0xff]
        %v1107 = vld [vmem:[#allocation7 + $0x648] sm:$0xff]
        %v1108 = vld [vmem:[#allocation7 + $0x650] sm:$0xff]
        %v1109 = vld [vmem:[#allocation7 + $0x658] sm:$0xff]
        %v1110 = vld [vmem:[#allocation7 + $0x660] sm:$0xff]
        %v1111 = vld [vmem:[#allocation7 + $0x668] sm:$0xff]
        %v1112 = vld [vmem:[#allocation7 + $0x670] sm:$0xff]
        %v1113 = vld [vmem:[#allocation7 + $0x678] sm:$0xff]
        %v1114 = vld [vmem:[#allocation7 + $0x680] sm:$0xff]
        %v1115 = vld [vmem:[#allocation7 + $0x688] sm:$0xff]
        %v1116 = vld [vmem:[#allocation7 + $0x690] sm:$0xff]
        %v1117 = vld [vmem:[#allocation7 + $0x698] sm:$0xff]
        %v1118 = vld [vmem:[#allocation7 + $0x6a0] sm:$0xff]
        %v1119 = vld [vmem:[#allocation7 + $0x6a8] sm:$0xff]
        %v1120 = vld [vmem:[#allocation7 + $0x6b0] sm:$0xff]
        %v1121 = vld [vmem:[#allocation7 + $0x6b8] sm:$0xff]
        %v1122 = vld [vmem:[#allocation7 + $0x6c0] sm:$0xff]
        %v1123 = vld [vmem:[#allocation7 + $0x6c8] sm:$0xff]
        %v1124 = vld [vmem:[#allocation7 + $0x6d0] sm:$0xff]
        %v1125 = vld [vmem:[#allocation7 + $0x6d8] sm:$0xff]
        %v1126 = vld [vmem:[#allocation7 + $0x6e0] sm:$0xff]
        %v1127 = vld [vmem:[#allocation7 + $0x6e8] sm:$0xff]
        %v1128 = vld [vmem:[#allocation7 + $0x6f0] sm:$0xff]
        %v1129 = vld [vmem:[#allocation7 + $0x6f8] sm:$0xff]
        %v1130 = vld [vmem:[#allocation7 + $0x700] sm:$0xff]
        %v1131 = vld [vmem:[#allocation7 + $0x708] sm:$0xff]
        %v1132 = vld [vmem:[#allocation7 + $0x710] sm:$0xff]
        %v1133 = vld [vmem:[#allocation7 + $0x718] sm:$0xff]
        %v1134 = vld [vmem:[#allocation7 + $0x720] sm:$0xff]
        %v1135 = vld [vmem:[#allocation7 + $0x728] sm:$0xff]
        %v1136 = vld [vmem:[#allocation7 + $0x730] sm:$0xff]
        %v1137 = vld [vmem:[#allocation7 + $0x738] sm:$0xff]
        %v1138 = vld [vmem:[#allocation7 + $0x740] sm:$0xff]
        %v1139 = vld [vmem:[#allocation7 + $0x748] sm:$0xff]
        %v1140 = vld [vmem:[#allocation7 + $0x750] sm:$0xff]
        %v1141 = vld [vmem:[#allocation7 + $0x758] sm:$0xff]
        %v1142 = vld [vmem:[#allocation7 + $0x760] sm:$0xff]
        %v1143 = vld [vmem:[#allocation7 + $0x768] sm:$0xff]
        %v1144 = vld [vmem:[#allocation7 + $0x770] sm:$0xff]
        %v1145 = vld [vmem:[#allocation7 + $0x778] sm:$0xff]
        %v1146 = vld [vmem:[#allocation7 + $0x780] sm:$0xff]
        %v1147 = vld [vmem:[#allocation7 + $0x788] sm:$0xff]
        %v1148 = vld [vmem:[#allocation7 + $0x790] sm:$0xff]
        %v1149 = vld [vmem:[#allocation7 + $0x798] sm:$0xff]
        %v1150 = vld [vmem:[#allocation7 + $0x7a0] sm:$0xff]
        %v1151 = vld [vmem:[#allocation7 + $0x7a8] sm:$0xff]
        %v1152 = vld [vmem:[#allocation7 + $0x7b0] sm:$0xff]
        %v1153 = vld [vmem:[#allocation7 + $0x7b8] sm:$0xff]
        %v1154 = vld [vmem:[#allocation7 + $0x7c0] sm:$0xff]
        %v1155 = vld [vmem:[#allocation7 + $0x7c8] sm:$0xff]
        %v1156 = vld [vmem:[#allocation7 + $0x7d0] sm:$0xff]
        %v1157 = vld [vmem:[#allocation7 + $0x7d8] sm:$0xff]
        %v1158 = vld [vmem:[#allocation7 + $0x7e0] sm:$0xff]
        %v1159 = vld [vmem:[#allocation7 + $0x7e8] sm:$0xff]
        %v1160 = vld [vmem:[#allocation7 + $0x7f0] sm:$0xff]
        %v1161 = vld [vmem:[#allocation7 + $0x7f8] sm:$0xff]
        %v1162 = vld [vmem:[#allocation7 + $0x800] sm:$0xff]
        %v1163 = vld [vmem:[#allocation7 + $0x808] sm:$0xff]
        %v1164 = vld [vmem:[#allocation7 + $0x810] sm:$0xff]
        %v1165 = vld [vmem:[#allocation7 + $0x818] sm:$0xff]
        %v1166 = vld [vmem:[#allocation7 + $0x820] sm:$0xff]
        %v1167 = vld [vmem:[#allocation7 + $0x828] sm:$0xff]
        %v1168 = vld [vmem:[#allocation7 + $0x830] sm:$0xff]
        %v1169 = vld [vmem:[#allocation7 + $0x838] sm:$0xff]
        %v1170 = vld [vmem:[#allocation7 + $0x840] sm:$0xff]
        %v1171 = vld [vmem:[#allocation7 + $0x848] sm:$0xff]
        %v1172 = vld [vmem:[#allocation7 + $0x850] sm:$0xff]
        %v1173 = vld [vmem:[#allocation7 + $0x858] sm:$0xff]
        %v1174 = vld [vmem:[#allocation7 + $0x860] sm:$0xff]
        %v1175 = vld [vmem:[#allocation7 + $0x868] sm:$0xff]
        %v1176 = vld [vmem:[#allocation7 + $0x870] sm:$0xff]
        %v1177 = vld [vmem:[#allocation7 + $0x878] sm:$0xff]
        %v1178 = vld [vmem:[#allocation7 + $0x880] sm:$0xff]
        %v1179 = vld [vmem:[#allocation7 + $0x888] sm:$0xff]
        %v1180 = vld [vmem:[#allocation7 + $0x890] sm:$0xff]
        %v1181 = vld [vmem:[#allocation7 + $0x898] sm:$0xff]
        %v1182 = vld [vmem:[#allocation7 + $0x8a0] sm:$0xff]
        %v1183 = vld [vmem:[#allocation7 + $0x8a8] sm:$0xff]
        %v1184 = vld [vmem:[#allocation7 + $0x8b0] sm:$0xff]
        %v1185 = vld [vmem:[#allocation7 + $0x8b8] sm:$0xff]
        %v1186 = vld [vmem:[#allocation7 + $0x8c0] sm:$0xff]
        %v1187 = vld [vmem:[#allocation7 + $0x8c8] sm:$0xff]
        %v1188 = vld [vmem:[#allocation7 + $0x8d0] sm:$0xff]
        %v1189 = vld [vmem:[#allocation7 + $0x8d8] sm:$0xff]
        %v1190 = vld [vmem:[#allocation7 + $0x8e0] sm:$0xff]
        %v1191 = vld [vmem:[#allocation7 + $0x8e8] sm:$0xff]
        %v1192 = vld [vmem:[#allocation7 + $0x8f0] sm:$0xff]
        %v1193 = vld [vmem:[#allocation7 + $0x8f8] sm:$0xff]
        %v1194 = vld [vmem:[#allocation7 + $0x900] sm:$0xff]
        %v1195 = vld [vmem:[#allocation7 + $0x908] sm:$0xff]
        %v1196 = vld [vmem:[#allocation7 + $0x910] sm:$0xff]
        %v1197 = vld [vmem:[#allocation7 + $0x918] sm:$0xff]
        %v1198 = vld [vmem:[#allocation7 + $0x920] sm:$0xff]
        %v1199 = vld [vmem:[#allocation7 + $0x928] sm:$0xff]
        %v1200 = vld [vmem:[#allocation7 + $0x930] sm:$0xff]
        %v1201 = vld [vmem:[#allocation7 + $0x938] sm:$0xff]
        %v1202 = vld [vmem:[#allocation7 + $0x940] sm:$0xff]
        %v1203 = vld [vmem:[#allocation7 + $0x948] sm:$0xff]
        %v1204 = vld [vmem:[#allocation7 + $0x950] sm:$0xff]
        %v1205 = vld [vmem:[#allocation7 + $0x958] sm:$0xff]
        %v1206 = vld [vmem:[#allocation7 + $0x960] sm:$0xff]
        %v1207 = vld [vmem:[#allocation7 + $0x968] sm:$0xff]
        %v1208 = vld [vmem:[#allocation7 + $0x970] sm:$0xff]
        %v1209 = vld [vmem:[#allocation7 + $0x978] sm:$0xff]
        %v1210 = vld [vmem:[#allocation7 + $0x980] sm:$0xff]
        %v1211 = vld [vmem:[#allocation7 + $0x988] sm:$0xff]
        %v1212 = vld [vmem:[#allocation7 + $0x990] sm:$0xff]
        %v1213 = vld [vmem:[#allocation7 + $0x998] sm:$0xff]
        %v1214 = vld [vmem:[#allocation7 + $0x9a0] sm:$0xff]
        %v1215 = vld [vmem:[#allocation7 + $0x9a8] sm:$0xff]
        %v1216 = vld [vmem:[#allocation7 + $0x9b0] sm:$0xff]
        %v1217 = vld [vmem:[#allocation7 + $0x9b8] sm:$0xff]
        %v1218 = vld [vmem:[#allocation7 + $0x9c0] sm:$0xff]
        %v1219 = vld [vmem:[#allocation7 + $0x9c8] sm:$0xff]
        %v1220 = vld [vmem:[#allocation7 + $0x9d0] sm:$0xff]
        %v1221 = vld [vmem:[#allocation7 + $0x9d8] sm:$0xff]
        %v1222 = vld [vmem:[#allocation7 + $0x9e0] sm:$0xff]
        %v1223 = vld [vmem:[#allocation7 + $0x9e8] sm:$0xff]
        %v1224 = vld [vmem:[#allocation7 + $0x9f0] sm:$0xff]
        %v1225 = vld [vmem:[#allocation7 + $0x9f8] sm:$0xff]
        %v1546 = vunpack.c.l.b16 %v906
        %v1547 = vunpack.c.h.b16 %v906
        %v1548 = vunpack.c.l.b16 %v907
        %v1549 = vunpack.c.h.b16 %v907
        %v1550 = vunpack.c.l.b16 %v908
        %v1551 = vunpack.c.h.b16 %v908
        %v1552 = vunpack.c.l.b16 %v909
        %v1553 = vunpack.c.h.b16 %v909
        %v1554 = vunpack.c.l.b16 %v910
        %v1555 = vunpack.c.h.b16 %v910
        %v1556 = vunpack.c.l.b16 %v911
        %v1557 = vunpack.c.h.b16 %v911
        %v1558 = vunpack.c.l.b16 %v912
        %v1559 = vunpack.c.h.b16 %v912
        %v1560 = vunpack.c.l.b16 %v913
        %v1561 = vunpack.c.h.b16 %v913
        %v1562 = vunpack.c.l.b16 %v914
        %v1563 = vunpack.c.h.b16 %v914
        %v1564 = vunpack.c.l.b16 %v915
        %v1565 = vunpack.c.h.b16 %v915
        %v1566 = vunpack.c.l.b16 %v916
        %v1567 = vunpack.c.h.b16 %v916
        %v1568 = vunpack.c.l.b16 %v917
        %v1569 = vunpack.c.h.b16 %v917
        %v1570 = vunpack.c.l.b16 %v918
        %v1571 = vunpack.c.h.b16 %v918
        %v1572 = vunpack.c.l.b16 %v919
        %v1573 = vunpack.c.h.b16 %v919
        %v1574 = vunpack.c.l.b16 %v920
        %v1575 = vunpack.c.h.b16 %v920
        %v1576 = vunpack.c.l.b16 %v921
        %v1577 = vunpack.c.h.b16 %v921
        %v1578 = vunpack.c.l.b16 %v922
        %v1579 = vunpack.c.h.b16 %v922
        %v1580 = vunpack.c.l.b16 %v923
        %v1581 = vunpack.c.h.b16 %v923
        %v1582 = vunpack.c.l.b16 %v924
        %v1583 = vunpack.c.h.b16 %v924
        %v1584 = vunpack.c.l.b16 %v925
        %v1585 = vunpack.c.h.b16 %v925
        %v1586 = vunpack.c.l.b16 %v926
        %v1587 = vunpack.c.h.b16 %v926
        %v1588 = vunpack.c.l.b16 %v927
        %v1589 = vunpack.c.h.b16 %v927
        %v1590 = vunpack.c.l.b16 %v928
        %v1591 = vunpack.c.h.b16 %v928
        %v1592 = vunpack.c.l.b16 %v929
        %v1593 = vunpack.c.h.b16 %v929
        %v1594 = vunpack.c.l.b16 %v930
        %v1595 = vunpack.c.h.b16 %v930
        %v1596 = vunpack.c.l.b16 %v931
        %v1597 = vunpack.c.h.b16 %v931
        %v1598 = vunpack.c.l.b16 %v932
        %v1599 = vunpack.c.h.b16 %v932
        %v1600 = vunpack.c.l.b16 %v933
        %v1601 = vunpack.c.h.b16 %v933
        %v1602 = vunpack.c.l.b16 %v934
        %v1603 = vunpack.c.h.b16 %v934
        %v1604 = vunpack.c.l.b16 %v935
        %v1605 = vunpack.c.h.b16 %v935
        %v1606 = vunpack.c.l.b16 %v936
        %v1607 = vunpack.c.h.b16 %v936
        %v1608 = vunpack.c.l.b16 %v937
        %v1609 = vunpack.c.h.b16 %v937
        %v1610 = vunpack.c.l.b16 %v938
        %v1611 = vunpack.c.h.b16 %v938
        %v1612 = vunpack.c.l.b16 %v939
        %v1613 = vunpack.c.h.b16 %v939
        %v1614 = vunpack.c.l.b16 %v940
        %v1615 = vunpack.c.h.b16 %v940
        %v1616 = vunpack.c.l.b16 %v941
        %v1617 = vunpack.c.h.b16 %v941
        %v1618 = vunpack.c.l.b16 %v942
        %v1619 = vunpack.c.h.b16 %v942
        %v1620 = vunpack.c.l.b16 %v943
        %v1621 = vunpack.c.h.b16 %v943
        %v1622 = vunpack.c.l.b16 %v944
        %v1623 = vunpack.c.h.b16 %v944
        %v1624 = vunpack.c.l.b16 %v945
        %v1625 = vunpack.c.h.b16 %v945
        %v1626 = vunpack.c.l.b16 %v946
        %v1627 = vunpack.c.h.b16 %v946
        %v1628 = vunpack.c.l.b16 %v947
        %v1629 = vunpack.c.h.b16 %v947
        %v1630 = vunpack.c.l.b16 %v948
        %v1631 = vunpack.c.h.b16 %v948
        %v1632 = vunpack.c.l.b16 %v949
        %v1633 = vunpack.c.h.b16 %v949
        %v1634 = vunpack.c.l.b16 %v950
        %v1635 = vunpack.c.h.b16 %v950
        %v1636 = vunpack.c.l.b16 %v951
        %v1637 = vunpack.c.h.b16 %v951
        %v1638 = vunpack.c.l.b16 %v952
        %v1639 = vunpack.c.h.b16 %v952
        %v1640 = vunpack.c.l.b16 %v953
        %v1641 = vunpack.c.h.b16 %v953
        %v1642 = vunpack.c.l.b16 %v954
        %v1643 = vunpack.c.h.b16 %v954
        %v1644 = vunpack.c.l.b16 %v955
        %v1645 = vunpack.c.h.b16 %v955
        %v1646 = vunpack.c.l.b16 %v956
        %v1647 = vunpack.c.h.b16 %v956
        %v1648 = vunpack.c.l.b16 %v957
        %v1649 = vunpack.c.h.b16 %v957
        %v1650 = vunpack.c.l.b16 %v958
        %v1651 = vunpack.c.h.b16 %v958
        %v1652 = vunpack.c.l.b16 %v959
        %v1653 = vunpack.c.h.b16 %v959
        %v1654 = vunpack.c.l.b16 %v960
        %v1655 = vunpack.c.h.b16 %v960
        %v1656 = vunpack.c.l.b16 %v961
        %v1657 = vunpack.c.h.b16 %v961
        %v1658 = vunpack.c.l.b16 %v962
        %v1659 = vunpack.c.h.b16 %v962
        %v1660 = vunpack.c.l.b16 %v963
        %v1661 = vunpack.c.h.b16 %v963
        %v1662 = vunpack.c.l.b16 %v964
        %v1663 = vunpack.c.h.b16 %v964
        %v1664 = vunpack.c.l.b16 %v965
        %v1665 = vunpack.c.h.b16 %v965
        %v1666 = vunpack.c.l.b16 %v966
        %v1667 = vunpack.c.h.b16 %v966
        %v1668 = vunpack.c.l.b16 %v967
        %v1669 = vunpack.c.h.b16 %v967
        %v1670 = vunpack.c.l.b16 %v968
        %v1671 = vunpack.c.h.b16 %v968
        %v1672 = vunpack.c.l.b16 %v969
        %v1673 = vunpack.c.h.b16 %v969
        %v1674 = vunpack.c.l.b16 %v970
        %v1675 = vunpack.c.h.b16 %v970
        %v1676 = vunpack.c.l.b16 %v971
        %v1677 = vunpack.c.h.b16 %v971
        %v1678 = vunpack.c.l.b16 %v972
        %v1679 = vunpack.c.h.b16 %v972
        %v1680 = vunpack.c.l.b16 %v973
        %v1681 = vunpack.c.h.b16 %v973
        %v1682 = vunpack.c.l.b16 %v974
        %v1683 = vunpack.c.h.b16 %v974
        %v1684 = vunpack.c.l.b16 %v975
        %v1685 = vunpack.c.h.b16 %v975
        %v1686 = vunpack.c.l.b16 %v976
        %v1687 = vunpack.c.h.b16 %v976
        %v1688 = vunpack.c.l.b16 %v977
        %v1689 = vunpack.c.h.b16 %v977
        %v1690 = vunpack.c.l.b16 %v978
        %v1691 = vunpack.c.h.b16 %v978
        %v1692 = vunpack.c.l.b16 %v979
        %v1693 = vunpack.c.h.b16 %v979
        %v1694 = vunpack.c.l.b16 %v980
        %v1695 = vunpack.c.h.b16 %v980
        %v1696 = vunpack.c.l.b16 %v981
        %v1697 = vunpack.c.h.b16 %v981
        %v1698 = vunpack.c.l.b16 %v982
        %v1699 = vunpack.c.h.b16 %v982
        %v1700 = vunpack.c.l.b16 %v983
        %v1701 = vunpack.c.h.b16 %v983
        %v1702 = vunpack.c.l.b16 %v984
        %v1703 = vunpack.c.h.b16 %v984
        %v1704 = vunpack.c.l.b16 %v985
        %v1705 = vunpack.c.h.b16 %v985
        %v1706 = vunpack.c.l.b16 %v986
        %v1707 = vunpack.c.h.b16 %v986
        %v1708 = vunpack.c.l.b16 %v987
        %v1709 = vunpack.c.h.b16 %v987
        %v1710 = vunpack.c.l.b16 %v988
        %v1711 = vunpack.c.h.b16 %v988
        %v1712 = vunpack.c.l.b16 %v989
        %v1713 = vunpack.c.h.b16 %v989
        %v1714 = vunpack.c.l.b16 %v990
        %v1715 = vunpack.c.h.b16 %v990
        %v1716 = vunpack.c.l.b16 %v991
        %v1717 = vunpack.c.h.b16 %v991
        %v1718 = vunpack.c.l.b16 %v992
        %v1719 = vunpack.c.h.b16 %v992
        %v1720 = vunpack.c.l.b16 %v993
        %v1721 = vunpack.c.h.b16 %v993
        %v1722 = vunpack.c.l.b16 %v994
        %v1723 = vunpack.c.h.b16 %v994
        %v1724 = vunpack.c.l.b16 %v995
        %v1725 = vunpack.c.h.b16 %v995
        %v1726 = vunpack.c.l.b16 %v996
        %v1727 = vunpack.c.h.b16 %v996
        %v1728 = vunpack.c.l.b16 %v997
        %v1729 = vunpack.c.h.b16 %v997
        %v1730 = vunpack.c.l.b16 %v998
        %v1731 = vunpack.c.h.b16 %v998
        %v1732 = vunpack.c.l.b16 %v999
        %v1733 = vunpack.c.h.b16 %v999
        %v1734 = vunpack.c.l.b16 %v1000
        %v1735 = vunpack.c.h.b16 %v1000
        %v1736 = vunpack.c.l.b16 %v1001
        %v1737 = vunpack.c.h.b16 %v1001
        %v1738 = vunpack.c.l.b16 %v1002
        %v1739 = vunpack.c.h.b16 %v1002
        %v1740 = vunpack.c.l.b16 %v1003
        %v1741 = vunpack.c.h.b16 %v1003
        %v1742 = vunpack.c.l.b16 %v1004
        %v1743 = vunpack.c.h.b16 %v1004
        %v1744 = vunpack.c.l.b16 %v1005
        %v1745 = vunpack.c.h.b16 %v1005
        %v1746 = vunpack.c.l.b16 %v1006
        %v1747 = vunpack.c.h.b16 %v1006
        %v1748 = vunpack.c.l.b16 %v1007
        %v1749 = vunpack.c.h.b16 %v1007
        %v1750 = vunpack.c.l.b16 %v1008
        %v1751 = vunpack.c.h.b16 %v1008
        %v1752 = vunpack.c.l.b16 %v1009
        %v1753 = vunpack.c.h.b16 %v1009
        %v1754 = vunpack.c.l.b16 %v1010
        %v1755 = vunpack.c.h.b16 %v1010
        %v1756 = vunpack.c.l.b16 %v1011
        %v1757 = vunpack.c.h.b16 %v1011
        %v1758 = vunpack.c.l.b16 %v1012
        %v1759 = vunpack.c.h.b16 %v1012
        %v1760 = vunpack.c.l.b16 %v1013
        %v1761 = vunpack.c.h.b16 %v1013
        %v1762 = vunpack.c.l.b16 %v1014
        %v1763 = vunpack.c.h.b16 %v1014
        %v1764 = vunpack.c.l.b16 %v1015
        %v1765 = vunpack.c.h.b16 %v1015
        %v1766 = vunpack.c.l.b16 %v1016
        %v1767 = vunpack.c.h.b16 %v1016
        %v1768 = vunpack.c.l.b16 %v1017
        %v1769 = vunpack.c.h.b16 %v1017
        %v1770 = vunpack.c.l.b16 %v1018
        %v1771 = vunpack.c.h.b16 %v1018
        %v1772 = vunpack.c.l.b16 %v1019
        %v1773 = vunpack.c.h.b16 %v1019
        %v1774 = vunpack.c.l.b16 %v1020
        %v1775 = vunpack.c.h.b16 %v1020
        %v1776 = vunpack.c.l.b16 %v1021
        %v1777 = vunpack.c.h.b16 %v1021
        %v1778 = vunpack.c.l.b16 %v1022
        %v1779 = vunpack.c.h.b16 %v1022
        %v1780 = vunpack.c.l.b16 %v1023
        %v1781 = vunpack.c.h.b16 %v1023
        %v1782 = vunpack.c.l.b16 %v1024
        %v1783 = vunpack.c.h.b16 %v1024
        %v1784 = vunpack.c.l.b16 %v1025
        %v1785 = vunpack.c.h.b16 %v1025
        %v1786 = vunpack.c.l.b16 %v1026
        %v1787 = vunpack.c.h.b16 %v1026
        %v1788 = vunpack.c.l.b16 %v1027
        %v1789 = vunpack.c.h.b16 %v1027
        %v1790 = vunpack.c.l.b16 %v1028
        %v1791 = vunpack.c.h.b16 %v1028
        %v1792 = vunpack.c.l.b16 %v1029
        %v1793 = vunpack.c.h.b16 %v1029
        %v1794 = vunpack.c.l.b16 %v1030
        %v1795 = vunpack.c.h.b16 %v1030
        %v1796 = vunpack.c.l.b16 %v1031
        %v1797 = vunpack.c.h.b16 %v1031
        %v1798 = vunpack.c.l.b16 %v1032
        %v1799 = vunpack.c.h.b16 %v1032
        %v1800 = vunpack.c.l.b16 %v1033
        %v1801 = vunpack.c.h.b16 %v1033
        %v1802 = vunpack.c.l.b16 %v1034
        %v1803 = vunpack.c.h.b16 %v1034
        %v1804 = vunpack.c.l.b16 %v1035
        %v1805 = vunpack.c.h.b16 %v1035
        %v1806 = vunpack.c.l.b16 %v1036
        %v1807 = vunpack.c.h.b16 %v1036
        %v1808 = vunpack.c.l.b16 %v1037
        %v1809 = vunpack.c.h.b16 %v1037
        %v1810 = vunpack.c.l.b16 %v1038
        %v1811 = vunpack.c.h.b16 %v1038
        %v1812 = vunpack.c.l.b16 %v1039
        %v1813 = vunpack.c.h.b16 %v1039
        %v1814 = vunpack.c.l.b16 %v1040
        %v1815 = vunpack.c.h.b16 %v1040
        %v1816 = vunpack.c.l.b16 %v1041
        %v1817 = vunpack.c.h.b16 %v1041
        %v1818 = vunpack.c.l.b16 %v1042
        %v1819 = vunpack.c.h.b16 %v1042
        %v1820 = vunpack.c.l.b16 %v1043
        %v1821 = vunpack.c.h.b16 %v1043
        %v1822 = vunpack.c.l.b16 %v1044
        %v1823 = vunpack.c.h.b16 %v1044
        %v1824 = vunpack.c.l.b16 %v1045
        %v1825 = vunpack.c.h.b16 %v1045
        %v1826 = vunpack.c.l.b16 %v1046
        %v1827 = vunpack.c.h.b16 %v1046
        %v1828 = vunpack.c.l.b16 %v1047
        %v1829 = vunpack.c.h.b16 %v1047
        %v1830 = vunpack.c.l.b16 %v1048
        %v1831 = vunpack.c.h.b16 %v1048
        %v1832 = vunpack.c.l.b16 %v1049
        %v1833 = vunpack.c.h.b16 %v1049
        %v1834 = vunpack.c.l.b16 %v1050
        %v1835 = vunpack.c.h.b16 %v1050
        %v1836 = vunpack.c.l.b16 %v1051
        %v1837 = vunpack.c.h.b16 %v1051
        %v1838 = vunpack.c.l.b16 %v1052
        %v1839 = vunpack.c.h.b16 %v1052
        %v1840 = vunpack.c.l.b16 %v1053
        %v1841 = vunpack.c.h.b16 %v1053
        %v1842 = vunpack.c.l.b16 %v1054
        %v1843 = vunpack.c.h.b16 %v1054
        %v1844 = vunpack.c.l.b16 %v1055
        %v1845 = vunpack.c.h.b16 %v1055
        %v1846 = vunpack.c.l.b16 %v1056
        %v1847 = vunpack.c.h.b16 %v1056
        %v1848 = vunpack.c.l.b16 %v1057
        %v1849 = vunpack.c.h.b16 %v1057
        %v1850 = vunpack.c.l.b16 %v1058
        %v1851 = vunpack.c.h.b16 %v1058
        %v1852 = vunpack.c.l.b16 %v1059
        %v1853 = vunpack.c.h.b16 %v1059
        %v1854 = vunpack.c.l.b16 %v1060
        %v1855 = vunpack.c.h.b16 %v1060
        %v1856 = vunpack.c.l.b16 %v1061
        %v1857 = vunpack.c.h.b16 %v1061
        %v1858 = vunpack.c.l.b16 %v1062
        %v1859 = vunpack.c.h.b16 %v1062
        %v1860 = vunpack.c.l.b16 %v1063
        %v1861 = vunpack.c.h.b16 %v1063
        %v1862 = vunpack.c.l.b16 %v1064
        %v1863 = vunpack.c.h.b16 %v1064
        %v1864 = vunpack.c.l.b16 %v1065
        %v1865 = vunpack.c.h.b16 %v1065
        %v1866 = vunpack.c.l.b16 %v1066
        %v1867 = vunpack.c.h.b16 %v1066
        %v1868 = vunpack.c.l.b16 %v1067
        %v1869 = vunpack.c.h.b16 %v1067
        %v1870 = vunpack.c.l.b16 %v1068
        %v1871 = vunpack.c.h.b16 %v1068
        %v1872 = vunpack.c.l.b16 %v1069
        %v1873 = vunpack.c.h.b16 %v1069
        %v1874 = vunpack.c.l.b16 %v1070
        %v1875 = vunpack.c.h.b16 %v1070
        %v1876 = vunpack.c.l.b16 %v1071
        %v1877 = vunpack.c.h.b16 %v1071
        %v1878 = vunpack.c.l.b16 %v1072
        %v1879 = vunpack.c.h.b16 %v1072
        %v1880 = vunpack.c.l.b16 %v1073
        %v1881 = vunpack.c.h.b16 %v1073
        %v1882 = vunpack.c.l.b16 %v1074
        %v1883 = vunpack.c.h.b16 %v1074
        %v1884 = vunpack.c.l.b16 %v1075
        %v1885 = vunpack.c.h.b16 %v1075
        %v1886 = vunpack.c.l.b16 %v1076
        %v1887 = vunpack.c.h.b16 %v1076
        %v1888 = vunpack.c.l.b16 %v1077
        %v1889 = vunpack.c.h.b16 %v1077
        %v1890 = vunpack.c.l.b16 %v1078
        %v1891 = vunpack.c.h.b16 %v1078
        %v1892 = vunpack.c.l.b16 %v1079
        %v1893 = vunpack.c.h.b16 %v1079
        %v1894 = vunpack.c.l.b16 %v1080
        %v1895 = vunpack.c.h.b16 %v1080
        %v1896 = vunpack.c.l.b16 %v1081
        %v1897 = vunpack.c.h.b16 %v1081
        %v1898 = vunpack.c.l.b16 %v1082
        %v1899 = vunpack.c.h.b16 %v1082
        %v1900 = vunpack.c.l.b16 %v1083
        %v1901 = vunpack.c.h.b16 %v1083
        %v1902 = vunpack.c.l.b16 %v1084
        %v1903 = vunpack.c.h.b16 %v1084
        %v1904 = vunpack.c.l.b16 %v1085
        %v1905 = vunpack.c.h.b16 %v1085
        %v1906 = vunpack.c.l.b16 %v1086
        %v1907 = vunpack.c.h.b16 %v1086
        %v1908 = vunpack.c.l.b16 %v1087
        %v1909 = vunpack.c.h.b16 %v1087
        %v1910 = vunpack.c.l.b16 %v1088
        %v1911 = vunpack.c.h.b16 %v1088
        %v1912 = vunpack.c.l.b16 %v1089
        %v1913 = vunpack.c.h.b16 %v1089
        %v1914 = vunpack.c.l.b16 %v1090
        %v1915 = vunpack.c.h.b16 %v1090
        %v1916 = vunpack.c.l.b16 %v1091
        %v1917 = vunpack.c.h.b16 %v1091
        %v1918 = vunpack.c.l.b16 %v1092
        %v1919 = vunpack.c.h.b16 %v1092
        %v1920 = vunpack.c.l.b16 %v1093
        %v1921 = vunpack.c.h.b16 %v1093
        %v1922 = vunpack.c.l.b16 %v1094
        %v1923 = vunpack.c.h.b16 %v1094
        %v1924 = vunpack.c.l.b16 %v1095
        %v1925 = vunpack.c.h.b16 %v1095
        %v1926 = vunpack.c.l.b16 %v1096
        %v1927 = vunpack.c.h.b16 %v1096
        %v1928 = vunpack.c.l.b16 %v1097
        %v1929 = vunpack.c.h.b16 %v1097
        %v1930 = vunpack.c.l.b16 %v1098
        %v1931 = vunpack.c.h.b16 %v1098
        %v1932 = vunpack.c.l.b16 %v1099
        %v1933 = vunpack.c.h.b16 %v1099
        %v1934 = vunpack.c.l.b16 %v1100
        %v1935 = vunpack.c.h.b16 %v1100
        %v1936 = vunpack.c.l.b16 %v1101
        %v1937 = vunpack.c.h.b16 %v1101
        %v1938 = vunpack.c.l.b16 %v1102
        %v1939 = vunpack.c.h.b16 %v1102
        %v1940 = vunpack.c.l.b16 %v1103
        %v1941 = vunpack.c.h.b16 %v1103
        %v1942 = vunpack.c.l.b16 %v1104
        %v1943 = vunpack.c.h.b16 %v1104
        %v1944 = vunpack.c.l.b16 %v1105
        %v1945 = vunpack.c.h.b16 %v1105
        %v1946 = vunpack.c.l.b16 %v1106
        %v1947 = vunpack.c.h.b16 %v1106
        %v1948 = vunpack.c.l.b16 %v1107
        %v1949 = vunpack.c.h.b16 %v1107
        %v1950 = vunpack.c.l.b16 %v1108
        %v1951 = vunpack.c.h.b16 %v1108
        %v1952 = vunpack.c.l.b16 %v1109
        %v1953 = vunpack.c.h.b16 %v1109
        %v1954 = vunpack.c.l.b16 %v1110
        %v1955 = vunpack.c.h.b16 %v1110
        %v1956 = vunpack.c.l.b16 %v1111
        %v1957 = vunpack.c.h.b16 %v1111
        %v1958 = vunpack.c.l.b16 %v1112
        %v1959 = vunpack.c.h.b16 %v1112
        %v1960 = vunpack.c.l.b16 %v1113
        %v1961 = vunpack.c.h.b16 %v1113
        %v1962 = vunpack.c.l.b16 %v1114
        %v1963 = vunpack.c.h.b16 %v1114
        %v1964 = vunpack.c.l.b16 %v1115
        %v1965 = vunpack.c.h.b16 %v1115
        %v1966 = vunpack.c.l.b16 %v1116
        %v1967 = vunpack.c.h.b16 %v1116
        %v1968 = vunpack.c.l.b16 %v1117
        %v1969 = vunpack.c.h.b16 %v1117
        %v1970 = vunpack.c.l.b16 %v1118
        %v1971 = vunpack.c.h.b16 %v1118
        %v1972 = vunpack.c.l.b16 %v1119
        %v1973 = vunpack.c.h.b16 %v1119
        %v1974 = vunpack.c.l.b16 %v1120
        %v1975 = vunpack.c.h.b16 %v1120
        %v1976 = vunpack.c.l.b16 %v1121
        %v1977 = vunpack.c.h.b16 %v1121
        %v1978 = vunpack.c.l.b16 %v1122
        %v1979 = vunpack.c.h.b16 %v1122
        %v1980 = vunpack.c.l.b16 %v1123
        %v1981 = vunpack.c.h.b16 %v1123
        %v1982 = vunpack.c.l.b16 %v1124
        %v1983 = vunpack.c.h.b16 %v1124
        %v1984 = vunpack.c.l.b16 %v1125
        %v1985 = vunpack.c.h.b16 %v1125
        %v1986 = vunpack.c.l.b16 %v1126
        %v1987 = vunpack.c.h.b16 %v1126
        %v1988 = vunpack.c.l.b16 %v1127
        %v1989 = vunpack.c.h.b16 %v1127
        %v1990 = vunpack.c.l.b16 %v1128
        %v1991 = vunpack.c.h.b16 %v1128
        %v1992 = vunpack.c.l.b16 %v1129
        %v1993 = vunpack.c.h.b16 %v1129
        %v1994 = vunpack.c.l.b16 %v1130
        %v1995 = vunpack.c.h.b16 %v1130
        %v1996 = vunpack.c.l.b16 %v1131
        %v1997 = vunpack.c.h.b16 %v1131
        %v1998 = vunpack.c.l.b16 %v1132
        %v1999 = vunpack.c.h.b16 %v1132
        %v2000 = vunpack.c.l.b16 %v1133
        %v2001 = vunpack.c.h.b16 %v1133
        %v2002 = vunpack.c.l.b16 %v1134
        %v2003 = vunpack.c.h.b16 %v1134
        %v2004 = vunpack.c.l.b16 %v1135
        %v2005 = vunpack.c.h.b16 %v1135
        %v2006 = vunpack.c.l.b16 %v1136
        %v2007 = vunpack.c.h.b16 %v1136
        %v2008 = vunpack.c.l.b16 %v1137
        %v2009 = vunpack.c.h.b16 %v1137
        %v2010 = vunpack.c.l.b16 %v1138
        %v2011 = vunpack.c.h.b16 %v1138
        %v2012 = vunpack.c.l.b16 %v1139
        %v2013 = vunpack.c.h.b16 %v1139
        %v2014 = vunpack.c.l.b16 %v1140
        %v2015 = vunpack.c.h.b16 %v1140
        %v2016 = vunpack.c.l.b16 %v1141
        %v2017 = vunpack.c.h.b16 %v1141
        %v2018 = vunpack.c.l.b16 %v1142
        %v2019 = vunpack.c.h.b16 %v1142
        %v2020 = vunpack.c.l.b16 %v1143
        %v2021 = vunpack.c.h.b16 %v1143
        %v2022 = vunpack.c.l.b16 %v1144
        %v2023 = vunpack.c.h.b16 %v1144
        %v2024 = vunpack.c.l.b16 %v1145
        %v2025 = vunpack.c.h.b16 %v1145
        %v2026 = vunpack.c.l.b16 %v1146
        %v2027 = vunpack.c.h.b16 %v1146
        %v2028 = vunpack.c.l.b16 %v1147
        %v2029 = vunpack.c.h.b16 %v1147
        %v2030 = vunpack.c.l.b16 %v1148
        %v2031 = vunpack.c.h.b16 %v1148
        %v2032 = vunpack.c.l.b16 %v1149
        %v2033 = vunpack.c.h.b16 %v1149
        %v2034 = vunpack.c.l.b16 %v1150
        %v2035 = vunpack.c.h.b16 %v1150
        %v2036 = vunpack.c.l.b16 %v1151
        %v2037 = vunpack.c.h.b16 %v1151
        %v2038 = vunpack.c.l.b16 %v1152
        %v2039 = vunpack.c.h.b16 %v1152
        %v2040 = vunpack.c.l.b16 %v1153
        %v2041 = vunpack.c.h.b16 %v1153
        %v2042 = vunpack.c.l.b16 %v1154
        %v2043 = vunpack.c.h.b16 %v1154
        %v2044 = vunpack.c.l.b16 %v1155
        %v2045 = vunpack.c.h.b16 %v1155
        %v2046 = vunpack.c.l.b16 %v1156
        %v2047 = vunpack.c.h.b16 %v1156
        %v2048 = vunpack.c.l.b16 %v1157
        %v2049 = vunpack.c.h.b16 %v1157
        %v2050 = vunpack.c.l.b16 %v1158
        %v2051 = vunpack.c.h.b16 %v1158
        %v2052 = vunpack.c.l.b16 %v1159
        %v2053 = vunpack.c.h.b16 %v1159
        %v2054 = vunpack.c.l.b16 %v1160
        %v2055 = vunpack.c.h.b16 %v1160
        %v2056 = vunpack.c.l.b16 %v1161
        %v2057 = vunpack.c.h.b16 %v1161
        %v2058 = vunpack.c.l.b16 %v1162
        %v2059 = vunpack.c.h.b16 %v1162
        %v2060 = vunpack.c.l.b16 %v1163
        %v2061 = vunpack.c.h.b16 %v1163
        %v2062 = vunpack.c.l.b16 %v1164
        %v2063 = vunpack.c.h.b16 %v1164
        %v2064 = vunpack.c.l.b16 %v1165
        %v2065 = vunpack.c.h.b16 %v1165
        %v2066 = vunpack.c.l.b16 %v1166
        %v2067 = vunpack.c.h.b16 %v1166
        %v2068 = vunpack.c.l.b16 %v1167
        %v2069 = vunpack.c.h.b16 %v1167
        %v2070 = vunpack.c.l.b16 %v1168
        %v2071 = vunpack.c.h.b16 %v1168
        %v2072 = vunpack.c.l.b16 %v1169
        %v2073 = vunpack.c.h.b16 %v1169
        %v2074 = vunpack.c.l.b16 %v1170
        %v2075 = vunpack.c.h.b16 %v1170
        %v2076 = vunpack.c.l.b16 %v1171
        %v2077 = vunpack.c.h.b16 %v1171
        %v2078 = vunpack.c.l.b16 %v1172
        %v2079 = vunpack.c.h.b16 %v1172
        %v2080 = vunpack.c.l.b16 %v1173
        %v2081 = vunpack.c.h.b16 %v1173
        %v2082 = vunpack.c.l.b16 %v1174
        %v2083 = vunpack.c.h.b16 %v1174
        %v2084 = vunpack.c.l.b16 %v1175
        %v2085 = vunpack.c.h.b16 %v1175
        %v2086 = vunpack.c.l.b16 %v1176
        %v2087 = vunpack.c.h.b16 %v1176
        %v2088 = vunpack.c.l.b16 %v1177
        %v2089 = vunpack.c.h.b16 %v1177
        %v2090 = vunpack.c.l.b16 %v1178
        %v2091 = vunpack.c.h.b16 %v1178
        %v2092 = vunpack.c.l.b16 %v1179
        %v2093 = vunpack.c.h.b16 %v1179
        %v2094 = vunpack.c.l.b16 %v1180
        %v2095 = vunpack.c.h.b16 %v1180
        %v2096 = vunpack.c.l.b16 %v1181
        %v2097 = vunpack.c.h.b16 %v1181
        %v2098 = vunpack.c.l.b16 %v1182
        %v2099 = vunpack.c.h.b16 %v1182
        %v2100 = vunpack.c.l.b16 %v1183
        %v2101 = vunpack.c.h.b16 %v1183
        %v2102 = vunpack.c.l.b16 %v1184
        %v2103 = vunpack.c.h.b16 %v1184
        %v2104 = vunpack.c.l.b16 %v1185
        %v2105 = vunpack.c.h.b16 %v1185
        %v2106 = vunpack.c.l.b16 %v1186
        %v2107 = vunpack.c.h.b16 %v1186
        %v2108 = vunpack.c.l.b16 %v1187
        %v2109 = vunpack.c.h.b16 %v1187
        %v2110 = vunpack.c.l.b16 %v1188
        %v2111 = vunpack.c.h.b16 %v1188
        %v2112 = vunpack.c.l.b16 %v1189
        %v2113 = vunpack.c.h.b16 %v1189
        %v2114 = vunpack.c.l.b16 %v1190
        %v2115 = vunpack.c.h.b16 %v1190
        %v2116 = vunpack.c.l.b16 %v1191
        %v2117 = vunpack.c.h.b16 %v1191
        %v2118 = vunpack.c.l.b16 %v1192
        %v2119 = vunpack.c.h.b16 %v1192
        %v2120 = vunpack.c.l.b16 %v1193
        %v2121 = vunpack.c.h.b16 %v1193
        %v2122 = vunpack.c.l.b16 %v1194
        %v2123 = vunpack.c.h.b16 %v1194
        %v2124 = vunpack.c.l.b16 %v1195
        %v2125 = vunpack.c.h.b16 %v1195
        %v2126 = vunpack.c.l.b16 %v1196
        %v2127 = vunpack.c.h.b16 %v1196
        %v2128 = vunpack.c.l.b16 %v1197
        %v2129 = vunpack.c.h.b16 %v1197
        %v2130 = vunpack.c.l.b16 %v1198
        %v2131 = vunpack.c.h.b16 %v1198
        %v2132 = vunpack.c.l.b16 %v1199
        %v2133 = vunpack.c.h.b16 %v1199
        %v2134 = vunpack.c.l.b16 %v1200
        %v2135 = vunpack.c.h.b16 %v1200
        %v2136 = vunpack.c.l.b16 %v1201
        %v2137 = vunpack.c.h.b16 %v1201
        %v2138 = vunpack.c.l.b16 %v1202
        %v2139 = vunpack.c.h.b16 %v1202
        %v2140 = vunpack.c.l.b16 %v1203
        %v2141 = vunpack.c.h.b16 %v1203
        %v2142 = vunpack.c.l.b16 %v1204
        %v2143 = vunpack.c.h.b16 %v1204
        %v2144 = vunpack.c.l.b16 %v1205
        %v2145 = vunpack.c.h.b16 %v1205
        %v2146 = vunpack.c.l.b16 %v1206
        %v2147 = vunpack.c.h.b16 %v1206
        %v2148 = vunpack.c.l.b16 %v1207
        %v2149 = vunpack.c.h.b16 %v1207
        %v2150 = vunpack.c.l.b16 %v1208
        %v2151 = vunpack.c.h.b16 %v1208
        %v2152 = vunpack.c.l.b16 %v1209
        %v2153 = vunpack.c.h.b16 %v1209
        %v2154 = vunpack.c.l.b16 %v1210
        %v2155 = vunpack.c.h.b16 %v1210
        %v2156 = vunpack.c.l.b16 %v1211
        %v2157 = vunpack.c.h.b16 %v1211
        %v2158 = vunpack.c.l.b16 %v1212
        %v2159 = vunpack.c.h.b16 %v1212
        %v2160 = vunpack.c.l.b16 %v1213
        %v2161 = vunpack.c.h.b16 %v1213
        %v2162 = vunpack.c.l.b16 %v1214
        %v2163 = vunpack.c.h.b16 %v1214
        %v2164 = vunpack.c.l.b16 %v1215
        %v2165 = vunpack.c.h.b16 %v1215
        %v2166 = vunpack.c.l.b16 %v1216
        %v2167 = vunpack.c.h.b16 %v1216
        %v2168 = vunpack.c.l.b16 %v1217
        %v2169 = vunpack.c.h.b16 %v1217
        %v2170 = vunpack.c.l.b16 %v1218
        %v2171 = vunpack.c.h.b16 %v1218
        %v2172 = vunpack.c.l.b16 %v1219
        %v2173 = vunpack.c.h.b16 %v1219
        %v2174 = vunpack.c.l.b16 %v1220
        %v2175 = vunpack.c.h.b16 %v1220
        %v2176 = vunpack.c.l.b16 %v1221
        %v2177 = vunpack.c.h.b16 %v1221
        %v2178 = vunpack.c.l.b16 %v1222
        %v2179 = vunpack.c.h.b16 %v1222
        %v2180 = vunpack.c.l.b16 %v1223
        %v2181 = vunpack.c.h.b16 %v1223
        %v2182 = vunpack.c.l.b16 %v1224
        %v2183 = vunpack.c.h.b16 %v1224
        %v2184 = vunpack.c.l.b16 %v1225
        %v2185 = vunpack.c.h.b16 %v1225
        %v2186 = vpack.c.b16 %v1556, %v1546
        %v2187 = vpack.c.b16 %v1557, %v1547
        %v2188 = vpack.c.b16 %v1558, %v1548
        %v2189 = vpack.c.b16 %v1559, %v1549
        %v2190 = vpack.c.b16 %v1560, %v1550
        %v2191 = vpack.c.b16 %v1561, %v1551
        %v2192 = vpack.c.b16 %v1562, %v1552
        %v2193 = vpack.c.b16 %v1563, %v1553
        %v2194 = vpack.c.b16 %v1564, %v1554
        %v2195 = vpack.c.b16 %v1565, %v1555
        %v2196 = vpack.c.b16 %v1576, %v1566
        %v2197 = vpack.c.b16 %v1577, %v1567
        %v2198 = vpack.c.b16 %v1578, %v1568
        %v2199 = vpack.c.b16 %v1579, %v1569
        %v2200 = vpack.c.b16 %v1580, %v1570
        %v2201 = vpack.c.b16 %v1581, %v1571
        %v2202 = vpack.c.b16 %v1582, %v1572
        %v2203 = vpack.c.b16 %v1583, %v1573
        %v2204 = vpack.c.b16 %v1584, %v1574
        %v2205 = vpack.c.b16 %v1585, %v1575
        %v2206 = vpack.c.b16 %v1596, %v1586
        %v2207 = vpack.c.b16 %v1597, %v1587
        %v2208 = vpack.c.b16 %v1598, %v1588
        %v2209 = vpack.c.b16 %v1599, %v1589
        %v2210 = vpack.c.b16 %v1600, %v1590
        %v2211 = vpack.c.b16 %v1601, %v1591
        %v2212 = vpack.c.b16 %v1602, %v1592
        %v2213 = vpack.c.b16 %v1603, %v1593
        %v2214 = vpack.c.b16 %v1604, %v1594
        %v2215 = vpack.c.b16 %v1605, %v1595
        %v2216 = vpack.c.b16 %v1616, %v1606
        %v2217 = vpack.c.b16 %v1617, %v1607
        %v2218 = vpack.c.b16 %v1618, %v1608
        %v2219 = vpack.c.b16 %v1619, %v1609
        %v2220 = vpack.c.b16 %v1620, %v1610
        %v2221 = vpack.c.b16 %v1621, %v1611
        %v2222 = vpack.c.b16 %v1622, %v1612
        %v2223 = vpack.c.b16 %v1623, %v1613
        %v2224 = vpack.c.b16 %v1624, %v1614
        %v2225 = vpack.c.b16 %v1625, %v1615
        %v2226 = vpack.c.b16 %v1636, %v1626
        %v2227 = vpack.c.b16 %v1637, %v1627
        %v2228 = vpack.c.b16 %v1638, %v1628
        %v2229 = vpack.c.b16 %v1639, %v1629
        %v2230 = vpack.c.b16 %v1640, %v1630
        %v2231 = vpack.c.b16 %v1641, %v1631
        %v2232 = vpack.c.b16 %v1642, %v1632
        %v2233 = vpack.c.b16 %v1643, %v1633
        %v2234 = vpack.c.b16 %v1644, %v1634
        %v2235 = vpack.c.b16 %v1645, %v1635
        %v2236 = vpack.c.b16 %v1656, %v1646
        %v2237 = vpack.c.b16 %v1657, %v1647
        %v2238 = vpack.c.b16 %v1658, %v1648
        %v2239 = vpack.c.b16 %v1659, %v1649
        %v2240 = vpack.c.b16 %v1660, %v1650
        %v2241 = vpack.c.b16 %v1661, %v1651
        %v2242 = vpack.c.b16 %v1662, %v1652
        %v2243 = vpack.c.b16 %v1663, %v1653
        %v2244 = vpack.c.b16 %v1664, %v1654
        %v2245 = vpack.c.b16 %v1665, %v1655
        %v2246 = vpack.c.b16 %v1676, %v1666
        %v2247 = vpack.c.b16 %v1677, %v1667
        %v2248 = vpack.c.b16 %v1678, %v1668
        %v2249 = vpack.c.b16 %v1679, %v1669
        %v2250 = vpack.c.b16 %v1680, %v1670
        %v2251 = vpack.c.b16 %v1681, %v1671
        %v2252 = vpack.c.b16 %v1682, %v1672
        %v2253 = vpack.c.b16 %v1683, %v1673
        %v2254 = vpack.c.b16 %v1684, %v1674
        %v2255 = vpack.c.b16 %v1685, %v1675
        %v2256 = vpack.c.b16 %v1696, %v1686
        %v2257 = vpack.c.b16 %v1697, %v1687
        %v2258 = vpack.c.b16 %v1698, %v1688
        %v2259 = vpack.c.b16 %v1699, %v1689
        %v2260 = vpack.c.b16 %v1700, %v1690
        %v2261 = vpack.c.b16 %v1701, %v1691
        %v2262 = vpack.c.b16 %v1702, %v1692
        %v2263 = vpack.c.b16 %v1703, %v1693
        %v2264 = vpack.c.b16 %v1704, %v1694
        %v2265 = vpack.c.b16 %v1705, %v1695
        %v2266 = vpack.c.b16 %v1716, %v1706
        %v2267 = vpack.c.b16 %v1717, %v1707
        %v2268 = vpack.c.b16 %v1718, %v1708
        %v2269 = vpack.c.b16 %v1719, %v1709
        %v2270 = vpack.c.b16 %v1720, %v1710
        %v2271 = vpack.c.b16 %v1721, %v1711
        %v2272 = vpack.c.b16 %v1722, %v1712
        %v2273 = vpack.c.b16 %v1723, %v1713
        %v2274 = vpack.c.b16 %v1724, %v1714
        %v2275 = vpack.c.b16 %v1725, %v1715
        %v2276 = vpack.c.b16 %v1736, %v1726
        %v2277 = vpack.c.b16 %v1737, %v1727
        %v2278 = vpack.c.b16 %v1738, %v1728
        %v2279 = vpack.c.b16 %v1739, %v1729
        %v2280 = vpack.c.b16 %v1740, %v1730
        %v2281 = vpack.c.b16 %v1741, %v1731
        %v2282 = vpack.c.b16 %v1742, %v1732
        %v2283 = vpack.c.b16 %v1743, %v1733
        %v2284 = vpack.c.b16 %v1744, %v1734
        %v2285 = vpack.c.b16 %v1745, %v1735
        %v2286 = vpack.c.b16 %v1756, %v1746
        %v2287 = vpack.c.b16 %v1757, %v1747
        %v2288 = vpack.c.b16 %v1758, %v1748
        %v2289 = vpack.c.b16 %v1759, %v1749
        %v2290 = vpack.c.b16 %v1760, %v1750
        %v2291 = vpack.c.b16 %v1761, %v1751
        %v2292 = vpack.c.b16 %v1762, %v1752
        %v2293 = vpack.c.b16 %v1763, %v1753
        %v2294 = vpack.c.b16 %v1764, %v1754
        %v2295 = vpack.c.b16 %v1765, %v1755
        %v2296 = vpack.c.b16 %v1776, %v1766
        %v2297 = vpack.c.b16 %v1777, %v1767
        %v2298 = vpack.c.b16 %v1778, %v1768
        %v2299 = vpack.c.b16 %v1779, %v1769
        %v2300 = vpack.c.b16 %v1780, %v1770
        %v2301 = vpack.c.b16 %v1781, %v1771
        %v2302 = vpack.c.b16 %v1782, %v1772
        %v2303 = vpack.c.b16 %v1783, %v1773
        %v2304 = vpack.c.b16 %v1784, %v1774
        %v2305 = vpack.c.b16 %v1785, %v1775
        %v2306 = vpack.c.b16 %v1796, %v1786
        %v2307 = vpack.c.b16 %v1797, %v1787
        %v2308 = vpack.c.b16 %v1798, %v1788
        %v2309 = vpack.c.b16 %v1799, %v1789
        %v2310 = vpack.c.b16 %v1800, %v1790
        %v2311 = vpack.c.b16 %v1801, %v1791
        %v2312 = vpack.c.b16 %v1802, %v1792
        %v2313 = vpack.c.b16 %v1803, %v1793
        %v2314 = vpack.c.b16 %v1804, %v1794
        %v2315 = vpack.c.b16 %v1805, %v1795
        %v2316 = vpack.c.b16 %v1816, %v1806
        %v2317 = vpack.c.b16 %v1817, %v1807
        %v2318 = vpack.c.b16 %v1818, %v1808
        %v2319 = vpack.c.b16 %v1819, %v1809
        %v2320 = vpack.c.b16 %v1820, %v1810
        %v2321 = vpack.c.b16 %v1821, %v1811
        %v2322 = vpack.c.b16 %v1822, %v1812
        %v2323 = vpack.c.b16 %v1823, %v1813
        %v2324 = vpack.c.b16 %v1824, %v1814
        %v2325 = vpack.c.b16 %v1825, %v1815
        %v2326 = vpack.c.b16 %v1836, %v1826
        %v2327 = vpack.c.b16 %v1837, %v1827
        %v2328 = vpack.c.b16 %v1838, %v1828
        %v2329 = vpack.c.b16 %v1839, %v1829
        %v2330 = vpack.c.b16 %v1840, %v1830
        %v2331 = vpack.c.b16 %v1841, %v1831
        %v2332 = vpack.c.b16 %v1842, %v1832
        %v2333 = vpack.c.b16 %v1843, %v1833
        %v2334 = vpack.c.b16 %v1844, %v1834
        %v2335 = vpack.c.b16 %v1845, %v1835
        %v2336 = vpack.c.b16 %v1856, %v1846
        %v2337 = vpack.c.b16 %v1857, %v1847
        %v2338 = vpack.c.b16 %v1858, %v1848
        %v2339 = vpack.c.b16 %v1859, %v1849
        %v2340 = vpack.c.b16 %v1860, %v1850
        %v2341 = vpack.c.b16 %v1861, %v1851
        %v2342 = vpack.c.b16 %v1862, %v1852
        %v2343 = vpack.c.b16 %v1863, %v1853
        %v2344 = vpack.c.b16 %v1864, %v1854
        %v2345 = vpack.c.b16 %v1865, %v1855
        %v2346 = vpack.c.b16 %v1876, %v1866
        %v2347 = vpack.c.b16 %v1877, %v1867
        %v2348 = vpack.c.b16 %v1878, %v1868
        %v2349 = vpack.c.b16 %v1879, %v1869
        %v2350 = vpack.c.b16 %v1880, %v1870
        %v2351 = vpack.c.b16 %v1881, %v1871
        %v2352 = vpack.c.b16 %v1882, %v1872
        %v2353 = vpack.c.b16 %v1883, %v1873
        %v2354 = vpack.c.b16 %v1884, %v1874
        %v2355 = vpack.c.b16 %v1885, %v1875
        %v2356 = vpack.c.b16 %v1896, %v1886
        %v2357 = vpack.c.b16 %v1897, %v1887
        %v2358 = vpack.c.b16 %v1898, %v1888
        %v2359 = vpack.c.b16 %v1899, %v1889
        %v2360 = vpack.c.b16 %v1900, %v1890
        %v2361 = vpack.c.b16 %v1901, %v1891
        %v2362 = vpack.c.b16 %v1902, %v1892
        %v2363 = vpack.c.b16 %v1903, %v1893
        %v2364 = vpack.c.b16 %v1904, %v1894
        %v2365 = vpack.c.b16 %v1905, %v1895
        %v2366 = vpack.c.b16 %v1916, %v1906
        %v2367 = vpack.c.b16 %v1917, %v1907
        %v2368 = vpack.c.b16 %v1918, %v1908
        %v2369 = vpack.c.b16 %v1919, %v1909
        %v2370 = vpack.c.b16 %v1920, %v1910
        %v2371 = vpack.c.b16 %v1921, %v1911
        %v2372 = vpack.c.b16 %v1922, %v1912
        %v2373 = vpack.c.b16 %v1923, %v1913
        %v2374 = vpack.c.b16 %v1924, %v1914
        %v2375 = vpack.c.b16 %v1925, %v1915
        %v2376 = vpack.c.b16 %v1936, %v1926
        %v2377 = vpack.c.b16 %v1937, %v1927
        %v2378 = vpack.c.b16 %v1938, %v1928
        %v2379 = vpack.c.b16 %v1939, %v1929
        %v2380 = vpack.c.b16 %v1940, %v1930
        %v2381 = vpack.c.b16 %v1941, %v1931
        %v2382 = vpack.c.b16 %v1942, %v1932
        %v2383 = vpack.c.b16 %v1943, %v1933
        %v2384 = vpack.c.b16 %v1944, %v1934
        %v2385 = vpack.c.b16 %v1945, %v1935
        %v2386 = vpack.c.b16 %v1956, %v1946
        %v2387 = vpack.c.b16 %v1957, %v1947
        %v2388 = vpack.c.b16 %v1958, %v1948
        %v2389 = vpack.c.b16 %v1959, %v1949
        %v2390 = vpack.c.b16 %v1960, %v1950
        %v2391 = vpack.c.b16 %v1961, %v1951
        %v2392 = vpack.c.b16 %v1962, %v1952
        %v2393 = vpack.c.b16 %v1963, %v1953
        %v2394 = vpack.c.b16 %v1964, %v1954
        %v2395 = vpack.c.b16 %v1965, %v1955
        %v2396 = vpack.c.b16 %v1976, %v1966
        %v2397 = vpack.c.b16 %v1977, %v1967
        %v2398 = vpack.c.b16 %v1978, %v1968
        %v2399 = vpack.c.b16 %v1979, %v1969
        %v2400 = vpack.c.b16 %v1980, %v1970
        %v2401 = vpack.c.b16 %v1981, %v1971
        %v2402 = vpack.c.b16 %v1982, %v1972
        %v2403 = vpack.c.b16 %v1983, %v1973
        %v2404 = vpack.c.b16 %v1984, %v1974
        %v2405 = vpack.c.b16 %v1985, %v1975
        %v2406 = vpack.c.b16 %v1996, %v1986
        %v2407 = vpack.c.b16 %v1997, %v1987
        %v2408 = vpack.c.b16 %v1998, %v1988
        %v2409 = vpack.c.b16 %v1999, %v1989
        %v2410 = vpack.c.b16 %v2000, %v1990
        %v2411 = vpack.c.b16 %v2001, %v1991
        %v2412 = vpack.c.b16 %v2002, %v1992
        %v2413 = vpack.c.b16 %v2003, %v1993
        %v2414 = vpack.c.b16 %v2004, %v1994
        %v2415 = vpack.c.b16 %v2005, %v1995
        %v2416 = vpack.c.b16 %v2016, %v2006
        %v2417 = vpack.c.b16 %v2017, %v2007
        %v2418 = vpack.c.b16 %v2018, %v2008
        %v2419 = vpack.c.b16 %v2019, %v2009
        %v2420 = vpack.c.b16 %v2020, %v2010
        %v2421 = vpack.c.b16 %v2021, %v2011
        %v2422 = vpack.c.b16 %v2022, %v2012
        %v2423 = vpack.c.b16 %v2023, %v2013
        %v2424 = vpack.c.b16 %v2024, %v2014
        %v2425 = vpack.c.b16 %v2025, %v2015
        %v2426 = vpack.c.b16 %v2036, %v2026
        %v2427 = vpack.c.b16 %v2037, %v2027
        %v2428 = vpack.c.b16 %v2038, %v2028
        %v2429 = vpack.c.b16 %v2039, %v2029
        %v2430 = vpack.c.b16 %v2040, %v2030
        %v2431 = vpack.c.b16 %v2041, %v2031
        %v2432 = vpack.c.b16 %v2042, %v2032
        %v2433 = vpack.c.b16 %v2043, %v2033
        %v2434 = vpack.c.b16 %v2044, %v2034
        %v2435 = vpack.c.b16 %v2045, %v2035
        %v2436 = vpack.c.b16 %v2056, %v2046
        %v2437 = vpack.c.b16 %v2057, %v2047
        %v2438 = vpack.c.b16 %v2058, %v2048
        %v2439 = vpack.c.b16 %v2059, %v2049
        %v2440 = vpack.c.b16 %v2060, %v2050
        %v2441 = vpack.c.b16 %v2061, %v2051
        %v2442 = vpack.c.b16 %v2062, %v2052
        %v2443 = vpack.c.b16 %v2063, %v2053
        %v2444 = vpack.c.b16 %v2064, %v2054
        %v2445 = vpack.c.b16 %v2065, %v2055
        %v2446 = vpack.c.b16 %v2076, %v2066
        %v2447 = vpack.c.b16 %v2077, %v2067
        %v2448 = vpack.c.b16 %v2078, %v2068
        %v2449 = vpack.c.b16 %v2079, %v2069
        %v2450 = vpack.c.b16 %v2080, %v2070
        %v2451 = vpack.c.b16 %v2081, %v2071
        %v2452 = vpack.c.b16 %v2082, %v2072
        %v2453 = vpack.c.b16 %v2083, %v2073
        %v2454 = vpack.c.b16 %v2084, %v2074
        %v2455 = vpack.c.b16 %v2085, %v2075
        %v2456 = vpack.c.b16 %v2096, %v2086
        %v2457 = vpack.c.b16 %v2097, %v2087
        %v2458 = vpack.c.b16 %v2098, %v2088
        %v2459 = vpack.c.b16 %v2099, %v2089
        %v2460 = vpack.c.b16 %v2100, %v2090
        %v2461 = vpack.c.b16 %v2101, %v2091
        %v2462 = vpack.c.b16 %v2102, %v2092
        %v2463 = vpack.c.b16 %v2103, %v2093
        %v2464 = vpack.c.b16 %v2104, %v2094
        %v2465 = vpack.c.b16 %v2105, %v2095
        %v2466 = vpack.c.b16 %v2116, %v2106
        %v2467 = vpack.c.b16 %v2117, %v2107
        %v2468 = vpack.c.b16 %v2118, %v2108
        %v2469 = vpack.c.b16 %v2119, %v2109
        %v2470 = vpack.c.b16 %v2120, %v2110
        %v2471 = vpack.c.b16 %v2121, %v2111
        %v2472 = vpack.c.b16 %v2122, %v2112
        %v2473 = vpack.c.b16 %v2123, %v2113
        %v2474 = vpack.c.b16 %v2124, %v2114
        %v2475 = vpack.c.b16 %v2125, %v2115
        %v2476 = vpack.c.b16 %v2136, %v2126
        %v2477 = vpack.c.b16 %v2137, %v2127
        %v2478 = vpack.c.b16 %v2138, %v2128
        %v2479 = vpack.c.b16 %v2139, %v2129
        %v2480 = vpack.c.b16 %v2140, %v2130
        %v2481 = vpack.c.b16 %v2141, %v2131
        %v2482 = vpack.c.b16 %v2142, %v2132
        %v2483 = vpack.c.b16 %v2143, %v2133
        %v2484 = vpack.c.b16 %v2144, %v2134
        %v2485 = vpack.c.b16 %v2145, %v2135
        %v2486 = vpack.c.b16 %v2156, %v2146
        %v2487 = vpack.c.b16 %v2157, %v2147
        %v2488 = vpack.c.b16 %v2158, %v2148
        %v2489 = vpack.c.b16 %v2159, %v2149
        %v2490 = vpack.c.b16 %v2160, %v2150
        %v2491 = vpack.c.b16 %v2161, %v2151
        %v2492 = vpack.c.b16 %v2162, %v2152
        %v2493 = vpack.c.b16 %v2163, %v2153
        %v2494 = vpack.c.b16 %v2164, %v2154
        %v2495 = vpack.c.b16 %v2165, %v2155
        %v2496 = vpack.c.b16 %v2176, %v2166
        %v2497 = vpack.c.b16 %v2177, %v2167
        %v2498 = vpack.c.b16 %v2178, %v2168
        %v2499 = vpack.c.b16 %v2179, %v2169
        %v2500 = vpack.c.b16 %v2180, %v2170
        %v2501 = vpack.c.b16 %v2181, %v2171
        %v2502 = vpack.c.b16 %v2182, %v2172
        %v2503 = vpack.c.b16 %v2183, %v2173
        %v2504 = vpack.c.b16 %v2184, %v2174
        %v2505 = vpack.c.b16 %v2185, %v2175
        %2826 = vmatprep.subr.bf16.mxu0 %v2257
        %2827 = vmatpush1.bf16.msra.mxu0 %v2256
        %2828 = vmatprep.subr.bf16.mxu0 %v2247
        %2829 = vmatpush1.bf16.msra.mxu0 %v2246
        %2830 = vmatprep.subr.bf16.mxu0 %v2237
        %2831 = vmatpush1.bf16.msra.mxu0 %v2236
        %2832 = vmatprep.subr.bf16.mxu0 %v2227
        %2833 = vmatpush1.bf16.msra.mxu0 %v2226
        %2834 = vmatprep.subr.bf16.mxu0 %v2217
        %2835 = vmatpush1.bf16.msra.mxu0 %v2216
        %2836 = vmatprep.subr.bf16.mxu0 %v2207
        %2837 = vmatpush1.bf16.msra.mxu0 %v2206
        %2838 = vmatprep.subr.bf16.mxu0 %v2197
        %2839 = vmatpush1.bf16.msra.mxu0 %v2196
        %2840 = vmatprep.subr.bf16.mxu0 %v2187
        %2841 = vmatpush1.bf16.msra.mxu0 %v2186
        %2842 = vmatprep.subr.bf16.mxu0 %v2337
        %2843 = vmatpush2.bf16.msra.mxu0 %v2336
        %2844 = vmatprep.subr.bf16.mxu0 %v2327
        %2845 = vmatpush2.bf16.msra.mxu0 %v2326
        %2846 = vmatprep.subr.bf16.mxu0 %v2317
        %2847 = vmatpush2.bf16.msra.mxu0 %v2316
        %2848 = vmatprep.subr.bf16.mxu0 %v2307
        %2849 = vmatpush2.bf16.msra.mxu0 %v2306
        %2850 = vmatprep.subr.bf16.mxu0 %v2297
        %2851 = vmatpush2.bf16.msra.mxu0 %v2296
        %2852 = vmatprep.subr.bf16.mxu0 %v2287
        %2853 = vmatpush2.bf16.msra.mxu0 %v2286
        %2854 = vmatprep.subr.bf16.mxu0 %v2277
        %2855 = vmatpush2.bf16.msra.mxu0 %v2276
        %2856 = vmatprep.subr.bf16.mxu0 %v2267
        %2857 = vmatpush2.bf16.msra.mxu0 %v2266
        %2858 = vmatprep.mubr.bf16.mxu0 %v903
        %2859 = vmatmul.mubr.bf16.gmra.mxu0 %v902
        %v2860 = vpop.f32.mrf.mxu0
        %v2861 = vadd.f32 0.0, %v2860
        %v2862 = vpop.f32.mrf.mxu0
        %v2863 = vadd.f32 0.0, %v2862
        %v2864 = vpop.f32.mrf.mxu0
        %v2865 = vadd.f32 0.0, %v2864
        %v2866 = vpop.f32.mrf.mxu0
        %v2867 = vadd.f32 0.0, %v2866
        %2868 = vdwg.mxu0
        %2869 = vmatprep.subr.bf16.mxu0 %v2417
        %2870 = vmatpush1.bf16.msra.mxu0 %v2416
        %2871 = vmatprep.subr.bf16.mxu0 %v2407
        %2872 = vmatpush1.bf16.msra.mxu0 %v2406
        %2873 = vmatprep.subr.bf16.mxu0 %v2397
        %2874 = vmatpush1.bf16.msra.mxu0 %v2396
        %2875 = vmatprep.subr.bf16.mxu0 %v2387
        %2876 = vmatpush1.bf16.msra.mxu0 %v2386
        %2877 = vmatprep.subr.bf16.mxu0 %v2377
        %2878 = vmatpush1.bf16.msra.mxu0 %v2376
        %2879 = vmatprep.subr.bf16.mxu0 %v2367
        %2880 = vmatpush1.bf16.msra.mxu0 %v2366
        %2881 = vmatprep.subr.bf16.mxu0 %v2357
        %2882 = vmatpush1.bf16.msra.mxu0 %v2356
        %2883 = vmatprep.subr.bf16.mxu0 %v2347
        %2884 = vmatpush1.bf16.msra.mxu0 %v2346
        %2885 = vmatprep.subr.bf16.mxu0 %v2497
        %2886 = vmatpush2.bf16.msra.mxu0 %v2496
        %2887 = vmatprep.subr.bf16.mxu0 %v2487
        %2888 = vmatpush2.bf16.msra.mxu0 %v2486
        %2889 = vmatprep.subr.bf16.mxu0 %v2477
        %2890 = vmatpush2.bf16.msra.mxu0 %v2476
        %2891 = vmatprep.subr.bf16.mxu0 %v2467
        %2892 = vmatpush2.bf16.msra.mxu0 %v2466
        %2893 = vmatprep.subr.bf16.mxu0 %v2457
        %2894 = vmatpush2.bf16.msra.mxu0 %v2456
        %2895 = vmatprep.subr.bf16.mxu0 %v2447
        %2896 = vmatpush2.bf16.msra.mxu0 %v2446
        %2897 = vmatprep.subr.bf16.mxu0 %v2437
        %2898 = vmatpush2.bf16.msra.mxu0 %v2436
        %2899 = vmatprep.subr.bf16.mxu0 %v2427
        %2900 = vmatpush2.bf16.msra.mxu0 %v2426
        %2901 = vmatprep.mubr.bf16.mxu0 %v905
        %2902 = vmatmul.mubr.bf16.gmra.mxu0 %v904
        %v2903 = vpop.f32.mrf.mxu0
        %v2904 = vadd.f32 %v2861, %v2903
        %v2905 = vpop.f32.mrf.mxu0
        %v2906 = vadd.f32 %v2863, %v2905
        %v2907 = vpop.f32.mrf.mxu0
        %v2908 = vadd.f32 %v2865, %v2907
        %v2909 = vpop.f32.mrf.mxu0
        %v2910 = vadd.f32 %v2867, %v2909
        %2911 = vdwg.mxu0
        %2912 = vmatprep.subr.bf16.mxu0 %v2259
        %2913 = vmatpush1.bf16.msra.mxu0 %v2258
        %2914 = vmatprep.subr.bf16.mxu0 %v2249
        %2915 = vmatpush1.bf16.msra.mxu0 %v2248
        %2916 = vmatprep.subr.bf16.mxu0 %v2239
        %2917 = vmatpush1.bf16.msra.mxu0 %v2238
        %2918 = vmatprep.subr.bf16.mxu0 %v2229
        %2919 = vmatpush1.bf16.msra.mxu0 %v2228
        %2920 = vmatprep.subr.bf16.mxu0 %v2219
        %2921 = vmatpush1.bf16.msra.mxu0 %v2218
        %2922 = vmatprep.subr.bf16.mxu0 %v2209
        %2923 = vmatpush1.bf16.msra.mxu0 %v2208
        %2924 = vmatprep.subr.bf16.mxu0 %v2199
        %2925 = vmatpush1.bf16.msra.mxu0 %v2198
        %2926 = vmatprep.subr.bf16.mxu0 %v2189
        %2927 = vmatpush1.bf16.msra.mxu0 %v2188
        %2928 = vmatprep.subr.bf16.mxu0 %v2339
        %2929 = vmatpush2.bf16.msra.mxu0 %v2338
        %2930 = vmatprep.subr.bf16.mxu0 %v2329
        %2931 = vmatpush2.bf16.msra.mxu0 %v2328
        %2932 = vmatprep.subr.bf16.mxu0 %v2319
        %2933 = vmatpush2.bf16.msra.mxu0 %v2318
        %2934 = vmatprep.subr.bf16.mxu0 %v2309
        %2935 = vmatpush2.bf16.msra.mxu0 %v2308
        %2936 = vmatprep.subr.bf16.mxu0 %v2299
        %2937 = vmatpush2.bf16.msra.mxu0 %v2298
        %2938 = vmatprep.subr.bf16.mxu0 %v2289
        %2939 = vmatpush2.bf16.msra.mxu0 %v2288
        %2940 = vmatprep.subr.bf16.mxu0 %v2279
        %2941 = vmatpush2.bf16.msra.mxu0 %v2278
        %2942 = vmatprep.subr.bf16.mxu0 %v2269
        %2943 = vmatpush2.bf16.msra.mxu0 %v2268
        %2944 = vmatprep.mubr.bf16.mxu0 %v903
        %2945 = vmatmul.mubr.bf16.gmra.mxu0 %v902
        %v2946 = vpop.f32.mrf.mxu0
        %v2947 = vadd.f32 0.0, %v2946
        %v2948 = vpop.f32.mrf.mxu0
        %v2949 = vadd.f32 0.0, %v2948
        %v2950 = vpop.f32.mrf.mxu0
        %v2951 = vadd.f32 0.0, %v2950
        %v2952 = vpop.f32.mrf.mxu0
        %v2953 = vadd.f32 0.0, %v2952
        %2954 = vdwg.mxu0
        %2955 = vmatprep.subr.bf16.mxu0 %v2419
        %2956 = vmatpush1.bf16.msra.mxu0 %v2418
        %2957 = vmatprep.subr.bf16.mxu0 %v2409
        %2958 = vmatpush1.bf16.msra.mxu0 %v2408
        %2959 = vmatprep.subr.bf16.mxu0 %v2399
        %2960 = vmatpush1.bf16.msra.mxu0 %v2398
        %2961 = vmatprep.subr.bf16.mxu0 %v2389
        %2962 = vmatpush1.bf16.msra.mxu0 %v2388
        %2963 = vmatprep.subr.bf16.mxu0 %v2379
        %2964 = vmatpush1.bf16.msra.mxu0 %v2378
        %2965 = vmatprep.subr.bf16.mxu0 %v2369
        %2966 = vmatpush1.bf16.msra.mxu0 %v2368
        %2967 = vmatprep.subr.bf16.mxu0 %v2359
        %2968 = vmatpush1.bf16.msra.mxu0 %v2358
        %2969 = vmatprep.subr.bf16.mxu0 %v2349
        %2970 = vmatpush1.bf16.msra.mxu0 %v2348
        %2971 = vmatprep.subr.bf16.mxu0 %v2499
        %2972 = vmatpush2.bf16.msra.mxu0 %v2498
        %2973 = vmatprep.subr.bf16.mxu0 %v2489
        %2974 = vmatpush2.bf16.msra.mxu0 %v2488
        %2975 = vmatprep.subr.bf16.mxu0 %v2479
        %2976 = vmatpush2.bf16.msra.mxu0 %v2478
        %2977 = vmatprep.subr.bf16.mxu0 %v2469
        %2978 = vmatpush2.bf16.msra.mxu0 %v2468
        %2979 = vmatprep.subr.bf16.mxu0 %v2459
        %2980 = vmatpush2.bf16.msra.mxu0 %v2458
        %2981 = vmatprep.subr.bf16.mxu0 %v2449
        %2982 = vmatpush2.bf16.msra.mxu0 %v2448
        %2983 = vmatprep.subr.bf16.mxu0 %v2439
        %2984 = vmatpush2.bf16.msra.mxu0 %v2438
        %2985 = vmatprep.subr.bf16.mxu0 %v2429
        %2986 = vmatpush2.bf16.msra.mxu0 %v2428
        %2987 = vmatprep.mubr.bf16.mxu0 %v905
        %2988 = vmatmul.mubr.bf16.gmra.mxu0 %v904
        %v2989 = vpop.f32.mrf.mxu0
        %v2990 = vadd.f32 %v2947, %v2989
        %v2991 = vpop.f32.mrf.mxu0
        %v2992 = vadd.f32 %v2949, %v2991
        %v2993 = vpop.f32.mrf.mxu0
        %v2994 = vadd.f32 %v2951, %v2993
        %v2995 = vpop.f32.mrf.mxu0
        %v2996 = vadd.f32 %v2953, %v2995
        %2997 = vdwg.mxu0
        %2998 = vmatprep.subr.bf16.mxu0 %v2261
        %2999 = vmatpush1.bf16.msra.mxu0 %v2260
        %3000 = vmatprep.subr.bf16.mxu0 %v2251
        %3001 = vmatpush1.bf16.msra.mxu0 %v2250
        %3002 = vmatprep.subr.bf16.mxu0 %v2241
        %3003 = vmatpush1.bf16.msra.mxu0 %v2240
        %3004 = vmatprep.subr.bf16.mxu0 %v2231
        %3005 = vmatpush1.bf16.msra.mxu0 %v2230
        %3006 = vmatprep.subr.bf16.mxu0 %v2221
        %3007 = vmatpush1.bf16.msra.mxu0 %v2220
        %3008 = vmatprep.subr.bf16.mxu0 %v2211
        %3009 = vmatpush1.bf16.msra.mxu0 %v2210
        %3010 = vmatprep.subr.bf16.mxu0 %v2201
        %3011 = vmatpush1.bf16.msra.mxu0 %v2200
        %3012 = vmatprep.subr.bf16.mxu0 %v2191
        %3013 = vmatpush1.bf16.msra.mxu0 %v2190
        %3014 = vmatprep.subr.bf16.mxu0 %v2341
        %3015 = vmatpush2.bf16.msra.mxu0 %v2340
        %3016 = vmatprep.subr.bf16.mxu0 %v2331
        %3017 = vmatpush2.bf16.msra.mxu0 %v2330
        %3018 = vmatprep.subr.bf16.mxu0 %v2321
        %3019 = vmatpush2.bf16.msra.mxu0 %v2320
        %3020 = vmatprep.subr.bf16.mxu0 %v2311
        %3021 = vmatpush2.bf16.msra.mxu0 %v2310
        %3022 = vmatprep.subr.bf16.mxu0 %v2301
        %3023 = vmatpush2.bf16.msra.mxu0 %v2300
        %3024 = vmatprep.subr.bf16.mxu0 %v2291
        %3025 = vmatpush2.bf16.msra.mxu0 %v2290
        %3026 = vmatprep.subr.bf16.mxu0 %v2281
        %3027 = vmatpush2.bf16.msra.mxu0 %v2280
        %3028 = vmatprep.subr.bf16.mxu0 %v2271
        %3029 = vmatpush2.bf16.msra.mxu0 %v2270
        %3030 = vmatprep.mubr.bf16.mxu0 %v903
        %3031 = vmatmul.mubr.bf16.gmra.mxu0 %v902
        %v3032 = vpop.f32.mrf.mxu0
        %v3033 = vadd.f32 0.0, %v3032
        %v3034 = vpop.f32.mrf.mxu0
        %v3035 = vadd.f32 0.0, %v3034
        %v3036 = vpop.f32.mrf.mxu0
        %v3037 = vadd.f32 0.0, %v3036
        %v3038 = vpop.f32.mrf.mxu0
        %v3039 = vadd.f32 0.0, %v3038
        %3040 = vdwg.mxu0
        %3041 = vmatprep.subr.bf16.mxu0 %v2421
        %3042 = vmatpush1.bf16.msra.mxu0 %v2420
        %3043 = vmatprep.subr.bf16.mxu0 %v2411
        %3044 = vmatpush1.bf16.msra.mxu0 %v2410
        %3045 = vmatprep.subr.bf16.mxu0 %v2401
        %3046 = vmatpush1.bf16.msra.mxu0 %v2400
        %3047 = vmatprep.subr.bf16.mxu0 %v2391
        %3048 = vmatpush1.bf16.msra.mxu0 %v2390
        %3049 = vmatprep.subr.bf16.mxu0 %v2381
        %3050 = vmatpush1.bf16.msra.mxu0 %v2380
        %3051 = vmatprep.subr.bf16.mxu0 %v2371
        %3052 = vmatpush1.bf16.msra.mxu0 %v2370
        %3053 = vmatprep.subr.bf16.mxu0 %v2361
        %3054 = vmatpush1.bf16.msra.mxu0 %v2360
        %3055 = vmatprep.subr.bf16.mxu0 %v2351
        %3056 = vmatpush1.bf16.msra.mxu0 %v2350
        %3057 = vmatprep.subr.bf16.mxu0 %v2501
        %3058 = vmatpush2.bf16.msra.mxu0 %v2500
        %3059 = vmatprep.subr.bf16.mxu0 %v2491
        %3060 = vmatpush2.bf16.msra.mxu0 %v2490
        %3061 = vmatprep.subr.bf16.mxu0 %v2481
        %3062 = vmatpush2.bf16.msra.mxu0 %v2480
        %3063 = vmatprep.subr.bf16.mxu0 %v2471
        %3064 = vmatpush2.bf16.msra.mxu0 %v2470
        %3065 = vmatprep.subr.bf16.mxu0 %v2461
        %3066 = vmatpush2.bf16.msra.mxu0 %v2460
        %3067 = vmatprep.subr.bf16.mxu0 %v2451
        %3068 = vmatpush2.bf16.msra.mxu0 %v2450
        %3069 = vmatprep.subr.bf16.mxu0 %v2441
        %3070 = vmatpush2.bf16.msra.mxu0 %v2440
        %3071 = vmatprep.subr.bf16.mxu0 %v2431
        %3072 = vmatpush2.bf16.msra.mxu0 %v2430
        %3073 = vmatprep.mubr.bf16.mxu0 %v905
        %3074 = vmatmul.mubr.bf16.gmra.mxu0 %v904
        %v3075 = vpop.f32.mrf.mxu0
        %v3076 = vadd.f32 %v3033, %v3075
        %v3077 = vpop.f32.mrf.mxu0
        %v3078 = vadd.f32 %v3035, %v3077
        %v3079 = vpop.f32.mrf.mxu0
        %v3080 = vadd.f32 %v3037, %v3079
        %v3081 = vpop.f32.mrf.mxu0
        %v3082 = vadd.f32 %v3039, %v3081
        %3083 = vdwg.mxu0
        %3084 = vmatprep.subr.bf16.mxu0 %v2263
        %3085 = vmatpush1.bf16.msra.mxu0 %v2262
        %3086 = vmatprep.subr.bf16.mxu0 %v2253
        %3087 = vmatpush1.bf16.msra.mxu0 %v2252
        %3088 = vmatprep.subr.bf16.mxu0 %v2243
        %3089 = vmatpush1.bf16.msra.mxu0 %v2242
        %3090 = vmatprep.subr.bf16.mxu0 %v2233
        %3091 = vmatpush1.bf16.msra.mxu0 %v2232
        %3092 = vmatprep.subr.bf16.mxu0 %v2223
        %3093 = vmatpush1.bf16.msra.mxu0 %v2222
        %3094 = vmatprep.subr.bf16.mxu0 %v2213
        %3095 = vmatpush1.bf16.msra.mxu0 %v2212
        %3096 = vmatprep.subr.bf16.mxu0 %v2203
        %3097 = vmatpush1.bf16.msra.mxu0 %v2202
        %3098 = vmatprep.subr.bf16.mxu0 %v2193
        %3099 = vmatpush1.bf16.msra.mxu0 %v2192
        %3100 = vmatprep.subr.bf16.mxu0 %v2343
        %3101 = vmatpush2.bf16.msra.mxu0 %v2342
        %3102 = vmatprep.subr.bf16.mxu0 %v2333
        %3103 = vmatpush2.bf16.msra.mxu0 %v2332
        %3104 = vmatprep.subr.bf16.mxu0 %v2323
        %3105 = vmatpush2.bf16.msra.mxu0 %v2322
        %3106 = vmatprep.subr.bf16.mxu0 %v2313
        %3107 = vmatpush2.bf16.msra.mxu0 %v2312
        %3108 = vmatprep.subr.bf16.mxu0 %v2303
        %3109 = vmatpush2.bf16.msra.mxu0 %v2302
        %3110 = vmatprep.subr.bf16.mxu0 %v2293
        %3111 = vmatpush2.bf16.msra.mxu0 %v2292
        %3112 = vmatprep.subr.bf16.mxu0 %v2283
        %3113 = vmatpush2.bf16.msra.mxu0 %v2282
        %3114 = vmatprep.subr.bf16.mxu0 %v2273
        %3115 = vmatpush2.bf16.msra.mxu0 %v2272
        %3116 = vmatprep.mubr.bf16.mxu0 %v903
        %3117 = vmatmul.mubr.bf16.gmra.mxu0 %v902
        %v3118 = vpop.f32.mrf.mxu0
        %v3119 = vadd.f32 0.0, %v3118
        %v3120 = vpop.f32.mrf.mxu0
        %v3121 = vadd.f32 0.0, %v3120
        %v3122 = vpop.f32.mrf.mxu0
        %v3123 = vadd.f32 0.0, %v3122
        %v3124 = vpop.f32.mrf.mxu0
        %v3125 = vadd.f32 0.0, %v3124
        %3126 = vdwg.mxu0
        %3127 = vmatprep.subr.bf16.mxu0 %v2423
        %3128 = vmatpush1.bf16.msra.mxu0 %v2422
        %3129 = vmatprep.subr.bf16.mxu0 %v2413
        %3130 = vmatpush1.bf16.msra.mxu0 %v2412
        %3131 = vmatprep.subr.bf16.mxu0 %v2403
        %3132 = vmatpush1.bf16.msra.mxu0 %v2402
        %3133 = vmatprep.subr.bf16.mxu0 %v2393
        %3134 = vmatpush1.bf16.msra.mxu0 %v2392
        %3135 = vmatprep.subr.bf16.mxu0 %v2383
        %3136 = vmatpush1.bf16.msra.mxu0 %v2382
        %3137 = vmatprep.subr.bf16.mxu0 %v2373
        %3138 = vmatpush1.bf16.msra.mxu0 %v2372
        %3139 = vmatprep.subr.bf16.mxu0 %v2363
        %3140 = vmatpush1.bf16.msra.mxu0 %v2362
        %3141 = vmatprep.subr.bf16.mxu0 %v2353
        %3142 = vmatpush1.bf16.msra.mxu0 %v2352
        %3143 = vmatprep.subr.bf16.mxu0 %v2503
        %3144 = vmatpush2.bf16.msra.mxu0 %v2502
        %3145 = vmatprep.subr.bf16.mxu0 %v2493
        %3146 = vmatpush2.bf16.msra.mxu0 %v2492
        %3147 = vmatprep.subr.bf16.mxu0 %v2483
        %3148 = vmatpush2.bf16.msra.mxu0 %v2482
        %3149 = vmatprep.subr.bf16.mxu0 %v2473
        %3150 = vmatpush2.bf16.msra.mxu0 %v2472
        %3151 = vmatprep.subr.bf16.mxu0 %v2463
        %3152 = vmatpush2.bf16.msra.mxu0 %v2462
        %3153 = vmatprep.subr.bf16.mxu0 %v2453
        %3154 = vmatpush2.bf16.msra.mxu0 %v2452
        %3155 = vmatprep.subr.bf16.mxu0 %v2443
        %3156 = vmatpush2.bf16.msra.mxu0 %v2442
        %3157 = vmatprep.subr.bf16.mxu0 %v2433
        %3158 = vmatpush2.bf16.msra.mxu0 %v2432
        %3159 = vmatprep.mubr.bf16.mxu0 %v905
        %3160 = vmatmul.mubr.bf16.gmra.mxu0 %v904
        %v3161 = vpop.f32.mrf.mxu0
        %v3162 = vadd.f32 %v3119, %v3161
        %v3163 = vpop.f32.mrf.mxu0
        %v3164 = vadd.f32 %v3121, %v3163
        %v3165 = vpop.f32.mrf.mxu0
        %v3166 = vadd.f32 %v3123, %v3165
        %v3167 = vpop.f32.mrf.mxu0
        %v3168 = vadd.f32 %v3125, %v3167
        %3169 = vdwg.mxu0
        %3170 = vmatprep.subr.bf16.mxu0 %v2265
        %3171 = vmatpush1.bf16.msra.mxu0 %v2264
        %3172 = vmatprep.subr.bf16.mxu0 %v2255
        %3173 = vmatpush1.bf16.msra.mxu0 %v2254
        %3174 = vmatprep.subr.bf16.mxu0 %v2245
        %3175 = vmatpush1.bf16.msra.mxu0 %v2244
        %3176 = vmatprep.subr.bf16.mxu0 %v2235
        %3177 = vmatpush1.bf16.msra.mxu0 %v2234
        %3178 = vmatprep.subr.bf16.mxu0 %v2225
        %3179 = vmatpush1.bf16.msra.mxu0 %v2224
        %3180 = vmatprep.subr.bf16.mxu0 %v2215
        %3181 = vmatpush1.bf16.msra.mxu0 %v2214
        %3182 = vmatprep.subr.bf16.mxu0 %v2205
        %3183 = vmatpush1.bf16.msra.mxu0 %v2204
        %3184 = vmatprep.subr.bf16.mxu0 %v2195
        %3185 = vmatpush1.bf16.msra.mxu0 %v2194
        %3186 = vmatprep.subr.bf16.mxu0 %v2345
        %3187 = vmatpush2.bf16.msra.mxu0 %v2344
        %3188 = vmatprep.subr.bf16.mxu0 %v2335
        %3189 = vmatpush2.bf16.msra.mxu0 %v2334
        %3190 = vmatprep.subr.bf16.mxu0 %v2325
        %3191 = vmatpush2.bf16.msra.mxu0 %v2324
        %3192 = vmatprep.subr.bf16.mxu0 %v2315
        %3193 = vmatpush2.bf16.msra.mxu0 %v2314
        %3194 = vmatprep.subr.bf16.mxu0 %v2305
        %3195 = vmatpush2.bf16.msra.mxu0 %v2304
        %3196 = vmatprep.subr.bf16.mxu0 %v2295
        %3197 = vmatpush2.bf16.msra.mxu0 %v2294
        %3198 = vmatprep.subr.bf16.mxu0 %v2285
        %3199 = vmatpush2.bf16.msra.mxu0 %v2284
        %3200 = vmatprep.subr.bf16.mxu0 %v2275
        %3201 = vmatpush2.bf16.msra.mxu0 %v2274
        %3202 = vmatprep.mubr.bf16.mxu0 %v903
        %3203 = vmatmul.mubr.bf16.gmra.mxu0 %v902
        %v3204 = vpop.f32.mrf.mxu0
        %v3205 = vadd.f32 0.0, %v3204
        %v3206 = vpop.f32.mrf.mxu0
        %v3207 = vadd.f32 0.0, %v3206
        %v3208 = vpop.f32.mrf.mxu0
        %v3209 = vadd.f32 0.0, %v3208
        %v3210 = vpop.f32.mrf.mxu0
        %v3211 = vadd.f32 0.0, %v3210
        %3212 = vdwg.mxu0
        %3213 = vmatprep.subr.bf16.mxu0 %v2425
        %3214 = vmatpush1.bf16.msra.mxu0 %v2424
        %3215 = vmatprep.subr.bf16.mxu0 %v2415
        %3216 = vmatpush1.bf16.msra.mxu0 %v2414
        %3217 = vmatprep.subr.bf16.mxu0 %v2405
        %3218 = vmatpush1.bf16.msra.mxu0 %v2404
        %3219 = vmatprep.subr.bf16.mxu0 %v2395
        %3220 = vmatpush1.bf16.msra.mxu0 %v2394
        %3221 = vmatprep.subr.bf16.mxu0 %v2385
        %3222 = vmatpush1.bf16.msra.mxu0 %v2384
        %3223 = vmatprep.subr.bf16.mxu0 %v2375
        %3224 = vmatpush1.bf16.msra.mxu0 %v2374
        %3225 = vmatprep.subr.bf16.mxu0 %v2365
        %3226 = vmatpush1.bf16.msra.mxu0 %v2364
        %3227 = vmatprep.subr.bf16.mxu0 %v2355
        %3228 = vmatpush1.bf16.msra.mxu0 %v2354
        %3229 = vmatprep.subr.bf16.mxu0 %v2505
        %3230 = vmatpush2.bf16.msra.mxu0 %v2504
        %3231 = vmatprep.subr.bf16.mxu0 %v2495
        %3232 = vmatpush2.bf16.msra.mxu0 %v2494
        %3233 = vmatprep.subr.bf16.mxu0 %v2485
        %3234 = vmatpush2.bf16.msra.mxu0 %v2484
        %3235 = vmatprep.subr.bf16.mxu0 %v2475
        %3236 = vmatpush2.bf16.msra.mxu0 %v2474
        %3237 = vmatprep.subr.bf16.mxu0 %v2465
        %3238 = vmatpush2.bf16.msra.mxu0 %v2464
        %3239 = vmatprep.subr.bf16.mxu0 %v2455
        %3240 = vmatpush2.bf16.msra.mxu0 %v2454
        %3241 = vmatprep.subr.bf16.mxu0 %v2445
        %3242 = vmatpush2.bf16.msra.mxu0 %v2444
        %3243 = vmatprep.subr.bf16.mxu0 %v2435
        %3244 = vmatpush2.bf16.msra.mxu0 %v2434
        %3245 = vmatprep.mubr.bf16.mxu0 %v905
        %3246 = vmatmul.mubr.bf16.gmra.mxu0 %v904
        %v3247 = vpop.f32.mrf.mxu0
        %v3248 = vadd.f32 %v3205, %v3247
        %v3249 = vpop.f32.mrf.mxu0
        %v3250 = vadd.f32 %v3207, %v3249
        %v3251 = vpop.f32.mrf.mxu0
        %v3252 = vadd.f32 %v3209, %v3251
        %v3253 = vpop.f32.mrf.mxu0
        %v3254 = vadd.f32 %v3211, %v3253
        %3255 = vdwg.mxu0
        %v3256 = vpack.c.bf16 %v2908, %v2904
        %v3257 = vpack.c.bf16 %v2910, %v2906
        %v3258 = vpack.c.bf16 %v2994, %v2990
        %v3259 = vpack.c.bf16 %v2996, %v2992
        %v3260 = vpack.c.bf16 %v3080, %v3076
        %v3261 = vpack.c.bf16 %v3082, %v3078
        %v3262 = vpack.c.bf16 %v3166, %v3162
        %v3263 = vpack.c.bf16 %v3168, %v3164
        %v3264 = vpack.c.bf16 %v3252, %v3248
        %v3265 = vpack.c.bf16 %v3254, %v3250
        %v3266 = vld [vmem:[#allocation3] sm:$0xf]
        %v3267 = vld [vmem:[#allocation3 + $0x4] sm:$0xf]
        %v3268 = vld [vmem:[#allocation3 + $0x8] sm:$0xf]
        %v3269 = vld [vmem:[#allocation3 + $0xc] sm:$0xf]
        %v3270 = vld [vmem:[%s4] sm:$0xff]
        %v3271 = vld [vmem:[%s4 + $0x8] sm:$0xff]
        %v3272 = vld [vmem:[%s4 + $0x10] sm:$0xff]
        %v3273 = vld [vmem:[%s4 + $0x18] sm:$0xff]
        %3275 = vset.pattern.permute.xlu0 0
        %3276 = vperm.xlu0 %3275, %v3270
        %v3277 = vpop.permute.xlu0 %3276
        %3280 = vset.pattern.permute.xlu0 0
        %3281 = vperm.xlu0 %3280, %v3271
        %v3282 = vpop.permute.xlu0 %3281
        %3285 = vset.pattern.permute.xlu0 0
        %3286 = vperm.xlu0 %3285, %v3272
        %v3287 = vpop.permute.xlu0 %3286
        %3290 = vset.pattern.permute.xlu0 0
        %3291 = vperm.xlu0 %3290, %v3273
        %v3292 = vpop.permute.xlu0 %3291
        %v3298 = vunpack.c.l.b16 %v3266
        %v3299 = vunpack.c.l.b16 %v3267
        %v3300 = vunpack.c.l.b16 %v3268
        %v3301 = vunpack.c.l.b16 %v3269
        %v3302 = vpack.c.b16 %v3299, %v3298
        %v3303 = vpack.c.b16 %v3301, %v3300
        %vm3304 = vcmask 654336
        %v3306 = vsel %vm3304, %v3302, 0
        %v3309 = vsel %vm3304, %v3303, 0
        %3311 = vmatprep.subr.bf16.mxu0 0
        %3312 = vmatpush1.bf16.msra.mxu0 0
        %3313 = vmatprep.subr.bf16.mxu0 0
        %3314 = vmatpush1.bf16.msra.mxu0 0
        %3315 = vmatprep.subr.bf16.mxu0 0
        %3316 = vmatpush1.bf16.msra.mxu0 0
        %3317 = vmatprep.subr.bf16.mxu0 %v3265
        %3318 = vmatpush1.bf16.msra.mxu0 %v3264
        %3319 = vmatprep.subr.bf16.mxu0 %v3263
        %3320 = vmatpush1.bf16.msra.mxu0 %v3262
        %3321 = vmatprep.subr.bf16.mxu0 %v3261
        %3322 = vmatpush1.bf16.msra.mxu0 %v3260
        %3323 = vmatprep.subr.bf16.mxu0 %v3259
        %3324 = vmatpush1.bf16.msra.mxu0 %v3258
        %3325 = vmatprep.subr.bf16.mxu0 %v3257
        %3326 = vmatpush1.bf16.msra.mxu0 %v3256
        %3327 = vmatprep.subr.bf16.mxu0 0
        %3328 = vmatpush2.bf16.msra.mxu0 0
        %3329 = vmatprep.subr.bf16.mxu0 0
        %3330 = vmatpush2.bf16.msra.mxu0 0
        %3331 = vmatprep.subr.bf16.mxu0 0
        %3332 = vmatpush2.bf16.msra.mxu0 0
        %3333 = vmatprep.subr.bf16.mxu0 0
        %3334 = vmatpush2.bf16.msra.mxu0 0
        %3335 = vmatprep.subr.bf16.mxu0 0
        %3336 = vmatpush2.bf16.msra.mxu0 0
        %3337 = vmatprep.subr.bf16.mxu0 0
        %3338 = vmatpush2.bf16.msra.mxu0 0
        %3339 = vmatprep.subr.bf16.mxu0 0
        %3340 = vmatpush2.bf16.msra.mxu0 0
        %3341 = vmatprep.subr.bf16.mxu0 0
        %3342 = vmatpush2.bf16.msra.mxu0 0
        %3343 = vmatprep.mubr.bf16.mxu0 0
        %3344 = vmatmul.mubr.bf16.gmra.mxu0 %v3306
        %v3345 = vpop.f32.mrf.mxu0
        %v3346 = vadd.f32 %v3277, %v3345
        %v3347 = vpop.f32.mrf.mxu0
        %v3348 = vadd.f32 %v3277, %v3347
        %v3349 = vpop.f32.mrf.mxu0
        %v3350 = vadd.f32 %v3282, %v3349
        %v3351 = vpop.f32.mrf.mxu0
        %v3352 = vadd.f32 %v3282, %v3351
        %3353 = vmatprep.mubr.bf16.mxu0 0
        %3354 = vmatmul.mubr.bf16.gmra.mxu0 %v3309
        %v3355 = vpop.f32.mrf.mxu0
        %v3356 = vadd.f32 %v3287, %v3355
        %v3357 = vpop.f32.mrf.mxu0
        %v3358 = vadd.f32 %v3287, %v3357
        %v3359 = vpop.f32.mrf.mxu0
        %v3360 = vadd.f32 %v3292, %v3359
        %v3361 = vpop.f32.mrf.mxu0
        %v3362 = vadd.f32 %v3292, %v3361
        %3363 = vdwg.mxu0
        %vm3364 = vcmp.ge.f32.partialorder %v3346, 0.0
        %vm3365 = vcmp.ge.f32.partialorder %v3348, 0.0
        %vm3366 = vcmp.ge.f32.partialorder %v3350, 0.0
        %vm3367 = vcmp.ge.f32.partialorder %v3352, 0.0
        %vm3368 = vcmp.ge.f32.partialorder %v3356, 0.0
        %vm3369 = vcmp.ge.f32.partialorder %v3358, 0.0
        %vm3370 = vcmp.ge.f32.partialorder %v3360, 0.0
        %vm3371 = vcmp.ge.f32.partialorder %v3362, 0.0
        %v3372 = vmul.f32 %v3346, 0.2
        %v3373 = vmul.f32 %v3348, 0.2
        %v3374 = vmul.f32 %v3350, 0.2
        %v3375 = vmul.f32 %v3352, 0.2
        %v3376 = vmul.f32 %v3356, 0.2
        %v3377 = vmul.f32 %v3358, 0.2
        %v3378 = vmul.f32 %v3360, 0.2
        %v3379 = vmul.f32 %v3362, 0.2
        %v3380 = vsel %vm3364, %v3346, %v3372
        %v3381 = vsel %vm3365, %v3348, %v3373
        %v3382 = vsel %vm3366, %v3350, %v3374
        %v3383 = vsel %vm3367, %v3352, %v3375
        %v3384 = vsel %vm3368, %v3356, %v3376
        %v3385 = vsel %vm3369, %v3358, %v3377
        %v3386 = vsel %vm3370, %v3360, %v3378
        %v3387 = vsel %vm3371, %v3362, %v3379
        %s3388 = scalar_lea.vmem %s4, 32
        %v3389 = vld [vmem:[%s3388] sm:$0xff]
        %v3390 = vld [vmem:[%s3388 + $0x8] sm:$0xff]
        %v3391 = vld [vmem:[%s3388 + $0x10] sm:$0xff]
        %v3392 = vld [vmem:[%s3388 + $0x18] sm:$0xff]
        %3394 = vset.pattern.permute.xlu0 0
        %3395 = vperm.xlu0 %3394, %v3389
        %v3396 = vpop.permute.xlu0 %3395
        %3399 = vset.pattern.permute.xlu0 0
        %3400 = vperm.xlu0 %3399, %v3390
        %v3401 = vpop.permute.xlu0 %3400
        %3404 = vset.pattern.permute.xlu0 0
        %3405 = vperm.xlu0 %3404, %v3391
        %v3406 = vpop.permute.xlu0 %3405
        %3409 = vset.pattern.permute.xlu0 0
        %3410 = vperm.xlu0 %3409, %v3392
        %v3411 = vpop.permute.xlu0 %3410
        %v3413 = vmul.f32 %v3380, %v3396
        %v3414 = vmul.f32 %v3381, %v3396
        %v3415 = vmul.f32 %v3382, %v3401
        %v3416 = vmul.f32 %v3383, %v3401
        %v3417 = vmul.f32 %v3384, %v3406
        %v3418 = vmul.f32 %v3385, %v3406
        %v3419 = vmul.f32 %v3386, %v3411
        %v3420 = vmul.f32 %v3387, %v3411
        %s3421 = scalar_lea.vmem %s4, 64
        %v3422 = vld [vmem:[%s3421] sm:$0xff]
        %v3423 = vld [vmem:[%s3421 + $0x8] sm:$0xff]
        %v3424 = vld [vmem:[%s3421 + $0x10] sm:$0xff]
        %v3425 = vld [vmem:[%s3421 + $0x18] sm:$0xff]
        %3427 = vset.pattern.permute.xlu0 0
        %3428 = vperm.xlu0 %3427, %v3422
        %v3429 = vpop.permute.xlu0 %3428
        %3432 = vset.pattern.permute.xlu0 0
        %3433 = vperm.xlu0 %3432, %v3423
        %v3434 = vpop.permute.xlu0 %3433
        %3437 = vset.pattern.permute.xlu0 0
        %3438 = vperm.xlu0 %3437, %v3424
        %v3439 = vpop.permute.xlu0 %3438
        %3442 = vset.pattern.permute.xlu0 0
        %3443 = vperm.xlu0 %3442, %v3425
        %v3444 = vpop.permute.xlu0 %3443
        %v3446 = vadd.f32 %v3413, %v3429
        %v3447 = vadd.f32 %v3414, %v3429
        %v3448 = vadd.f32 %v3415, %v3434
        %v3449 = vadd.f32 %v3416, %v3434
        %v3450 = vadd.f32 %v3417, %v3439
        %v3451 = vadd.f32 %v3418, %v3439
        %v3452 = vadd.f32 %v3419, %v3444
        %v3453 = vadd.f32 %v3420, %v3444
        %v3454 = vpack.c.bf16 %v3448, %v3446
        %v3455 = vpack.c.bf16 %v3449, %v3447
        %v3456 = vpack.c.bf16 %v3452, %v3450
        %v3457 = vpack.c.bf16 %v3453, %v3451
        %v3458 = vld [vmem:[#allocation8] sm:$0xff]
        %v3459 = vld [vmem:[#allocation8 + $0x8] sm:$0xff]
        %v3460 = vld [vmem:[#allocation8 + $0x10] sm:$0xf]
        %v3461 = vld [vmem:[#allocation8 + $0x14] sm:$0xff]
        %v3462 = vld [vmem:[#allocation8 + $0x1c] sm:$0xff]
        %v3463 = vld [vmem:[#allocation8 + $0x24] sm:$0xf]
        %v3464 = vld [vmem:[#allocation8 + $0x28] sm:$0xff]
        %v3465 = vld [vmem:[#allocation8 + $0x30] sm:$0xff]
        %v3466 = vld [vmem:[#allocation8 + $0x38] sm:$0xf]
        %v3467 = vld [vmem:[#allocation8 + $0x3c] sm:$0xff]
        %v3468 = vld [vmem:[#allocation8 + $0x44] sm:$0xff]
        %v3469 = vld [vmem:[#allocation8 + $0x4c] sm:$0xf]
        %v3470 = vld [vmem:[#allocation8 + $0x50] sm:$0xff]
        %v3471 = vld [vmem:[#allocation8 + $0x58] sm:$0xff]
        %v3472 = vld [vmem:[#allocation8 + $0x60] sm:$0xf]
        %v3473 = vld [vmem:[#allocation8 + $0x64] sm:$0xff]
        %v3474 = vld [vmem:[#allocation8 + $0x6c] sm:$0xff]
        %v3475 = vld [vmem:[#allocation8 + $0x74] sm:$0xf]
        %v3476 = vld [vmem:[#allocation8 + $0x78] sm:$0xff]
        %v3477 = vld [vmem:[#allocation8 + $0x80] sm:$0xff]
        %v3478 = vld [vmem:[#allocation8 + $0x88] sm:$0xf]
        %v3479 = vld [vmem:[#allocation8 + $0x8c] sm:$0xff]
        %v3480 = vld [vmem:[#allocation8 + $0x94] sm:$0xff]
        %v3481 = vld [vmem:[#allocation8 + $0x9c] sm:$0xf]
        %v3482 = vld [vmem:[#allocation8 + $0xa0] sm:$0xff]
        %v3483 = vld [vmem:[#allocation8 + $0xa8] sm:$0xff]
        %v3484 = vld [vmem:[#allocation8 + $0xb0] sm:$0xf]
        %v3485 = vld [vmem:[#allocation8 + $0xb4] sm:$0xff]
        %v3486 = vld [vmem:[#allocation8 + $0xbc] sm:$0xff]
        %v3487 = vld [vmem:[#allocation8 + $0xc4] sm:$0xf]
        %v3488 = vld [vmem:[#allocation8 + $0xc8] sm:$0xff]
        %v3489 = vld [vmem:[#allocation8 + $0xd0] sm:$0xff]
        %v3490 = vld [vmem:[#allocation8 + $0xd8] sm:$0xf]
        %v3491 = vld [vmem:[#allocation8 + $0xdc] sm:$0xff]
        %v3492 = vld [vmem:[#allocation8 + $0xe4] sm:$0xff]
        %v3493 = vld [vmem:[#allocation8 + $0xec] sm:$0xf]
        %v3494 = vld [vmem:[#allocation8 + $0xf0] sm:$0xff]
        %v3495 = vld [vmem:[#allocation8 + $0xf8] sm:$0xff]
        %v3496 = vld [vmem:[#allocation8 + $0x100] sm:$0xf]
        %v3497 = vld [vmem:[#allocation8 + $0x104] sm:$0xff]
        %v3498 = vld [vmem:[#allocation8 + $0x10c] sm:$0xff]
        %v3499 = vld [vmem:[#allocation8 + $0x114] sm:$0xf]
        %v3500 = vld [vmem:[#allocation8 + $0x118] sm:$0xff]
        %v3501 = vld [vmem:[#allocation8 + $0x120] sm:$0xff]
        %v3502 = vld [vmem:[#allocation8 + $0x128] sm:$0xf]
        %v3503 = vld [vmem:[#allocation8 + $0x12c] sm:$0xff]
        %v3504 = vld [vmem:[#allocation8 + $0x134] sm:$0xff]
        %v3505 = vld [vmem:[#allocation8 + $0x13c] sm:$0xf]
        %v3506 = vld [vmem:[#allocation8 + $0x140] sm:$0xff]
        %v3507 = vld [vmem:[#allocation8 + $0x148] sm:$0xff]
        %v3508 = vld [vmem:[#allocation8 + $0x150] sm:$0xf]
        %v3509 = vld [vmem:[#allocation8 + $0x154] sm:$0xff]
        %v3510 = vld [vmem:[#allocation8 + $0x15c] sm:$0xff]
        %v3511 = vld [vmem:[#allocation8 + $0x164] sm:$0xf]
        %v3512 = vld [vmem:[#allocation8 + $0x168] sm:$0xff]
        %v3513 = vld [vmem:[#allocation8 + $0x170] sm:$0xff]
        %v3514 = vld [vmem:[#allocation8 + $0x178] sm:$0xf]
        %v3515 = vld [vmem:[#allocation8 + $0x17c] sm:$0xff]
        %v3516 = vld [vmem:[#allocation8 + $0x184] sm:$0xff]
        %v3517 = vld [vmem:[#allocation8 + $0x18c] sm:$0xf]
        %v3518 = vld [vmem:[#allocation8 + $0x190] sm:$0xff]
        %v3519 = vld [vmem:[#allocation8 + $0x198] sm:$0xff]
        %v3520 = vld [vmem:[#allocation8 + $0x1a0] sm:$0xf]
        %v3521 = vld [vmem:[#allocation8 + $0x1a4] sm:$0xff]
        %v3522 = vld [vmem:[#allocation8 + $0x1ac] sm:$0xff]
        %v3523 = vld [vmem:[#allocation8 + $0x1b4] sm:$0xf]
        %v3524 = vld [vmem:[#allocation8 + $0x1b8] sm:$0xff]
        %v3525 = vld [vmem:[#allocation8 + $0x1c0] sm:$0xff]
        %v3526 = vld [vmem:[#allocation8 + $0x1c8] sm:$0xf]
        %v3527 = vld [vmem:[#allocation8 + $0x1cc] sm:$0xff]
        %v3528 = vld [vmem:[#allocation8 + $0x1d4] sm:$0xff]
        %v3529 = vld [vmem:[#allocation8 + $0x1dc] sm:$0xf]
        %v3530 = vld [vmem:[#allocation8 + $0x1e0] sm:$0xff]
        %v3531 = vld [vmem:[#allocation8 + $0x1e8] sm:$0xff]
        %v3532 = vld [vmem:[#allocation8 + $0x1f0] sm:$0xf]
        %v3533 = vld [vmem:[#allocation8 + $0x1f4] sm:$0xff]
        %v3534 = vld [vmem:[#allocation8 + $0x1fc] sm:$0xff]
        %v3535 = vld [vmem:[#allocation8 + $0x204] sm:$0xf]
        %v3536 = vld [vmem:[#allocation8 + $0x208] sm:$0xff]
        %v3537 = vld [vmem:[#allocation8 + $0x210] sm:$0xff]
        %v3538 = vld [vmem:[#allocation8 + $0x218] sm:$0xf]
        %v3539 = vld [vmem:[#allocation8 + $0x21c] sm:$0xff]
        %v3540 = vld [vmem:[#allocation8 + $0x224] sm:$0xff]
        %v3541 = vld [vmem:[#allocation8 + $0x22c] sm:$0xf]
        %v3542 = vld [vmem:[#allocation8 + $0x230] sm:$0xff]
        %v3543 = vld [vmem:[#allocation8 + $0x238] sm:$0xff]
        %v3544 = vld [vmem:[#allocation8 + $0x240] sm:$0xf]
        %v3545 = vld [vmem:[#allocation8 + $0x244] sm:$0xff]
        %v3546 = vld [vmem:[#allocation8 + $0x24c] sm:$0xff]
        %v3547 = vld [vmem:[#allocation8 + $0x254] sm:$0xf]
        %v3548 = vld [vmem:[#allocation8 + $0x258] sm:$0xff]
        %v3549 = vld [vmem:[#allocation8 + $0x260] sm:$0xff]
        %v3550 = vld [vmem:[#allocation8 + $0x268] sm:$0xf]
        %v3551 = vld [vmem:[#allocation8 + $0x26c] sm:$0xff]
        %v3552 = vld [vmem:[#allocation8 + $0x274] sm:$0xff]
        %v3553 = vld [vmem:[#allocation8 + $0x27c] sm:$0xf]
        %v3650 = vunpack.c.l.b16 %v3458
        %v3651 = vunpack.c.h.b16 %v3458
        %v3652 = vunpack.c.l.b16 %v3459
        %v3653 = vunpack.c.h.b16 %v3459
        %v3654 = vunpack.c.l.b16 %v3460
        %v3655 = vunpack.c.l.b16 %v3461
        %v3656 = vunpack.c.h.b16 %v3461
        %v3657 = vunpack.c.l.b16 %v3462
        %v3658 = vunpack.c.h.b16 %v3462
        %v3659 = vunpack.c.l.b16 %v3463
        %v3660 = vunpack.c.l.b16 %v3464
        %v3661 = vunpack.c.h.b16 %v3464
        %v3662 = vunpack.c.l.b16 %v3465
        %v3663 = vunpack.c.h.b16 %v3465
        %v3664 = vunpack.c.l.b16 %v3466
        %v3665 = vunpack.c.l.b16 %v3467
        %v3666 = vunpack.c.h.b16 %v3467
        %v3667 = vunpack.c.l.b16 %v3468
        %v3668 = vunpack.c.h.b16 %v3468
        %v3669 = vunpack.c.l.b16 %v3469
        %v3670 = vunpack.c.l.b16 %v3470
        %v3671 = vunpack.c.h.b16 %v3470
        %v3672 = vunpack.c.l.b16 %v3471
        %v3673 = vunpack.c.h.b16 %v3471
        %v3674 = vunpack.c.l.b16 %v3472
        %v3675 = vunpack.c.l.b16 %v3473
        %v3676 = vunpack.c.h.b16 %v3473
        %v3677 = vunpack.c.l.b16 %v3474
        %v3678 = vunpack.c.h.b16 %v3474
        %v3679 = vunpack.c.l.b16 %v3475
        %v3680 = vunpack.c.l.b16 %v3476
        %v3681 = vunpack.c.h.b16 %v3476
        %v3682 = vunpack.c.l.b16 %v3477
        %v3683 = vunpack.c.h.b16 %v3477
        %v3684 = vunpack.c.l.b16 %v3478
        %v3685 = vunpack.c.l.b16 %v3479
        %v3686 = vunpack.c.h.b16 %v3479
        %v3687 = vunpack.c.l.b16 %v3480
        %v3688 = vunpack.c.h.b16 %v3480
        %v3689 = vunpack.c.l.b16 %v3481
        %v3690 = vunpack.c.l.b16 %v3482
        %v3691 = vunpack.c.h.b16 %v3482
        %v3692 = vunpack.c.l.b16 %v3483
        %v3693 = vunpack.c.h.b16 %v3483
        %v3694 = vunpack.c.l.b16 %v3484
        %v3695 = vunpack.c.l.b16 %v3485
        %v3696 = vunpack.c.h.b16 %v3485
        %v3697 = vunpack.c.l.b16 %v3486
        %v3698 = vunpack.c.h.b16 %v3486
        %v3699 = vunpack.c.l.b16 %v3487
        %v3700 = vunpack.c.l.b16 %v3488
        %v3701 = vunpack.c.h.b16 %v3488
        %v3702 = vunpack.c.l.b16 %v3489
        %v3703 = vunpack.c.h.b16 %v3489
        %v3704 = vunpack.c.l.b16 %v3490
        %v3705 = vunpack.c.l.b16 %v3491
        %v3706 = vunpack.c.h.b16 %v3491
        %v3707 = vunpack.c.l.b16 %v3492
        %v3708 = vunpack.c.h.b16 %v3492
        %v3709 = vunpack.c.l.b16 %v3493
        %v3710 = vunpack.c.l.b16 %v3494
        %v3711 = vunpack.c.h.b16 %v3494
        %v3712 = vunpack.c.l.b16 %v3495
        %v3713 = vunpack.c.h.b16 %v3495
        %v3714 = vunpack.c.l.b16 %v3496
        %v3715 = vunpack.c.l.b16 %v3497
        %v3716 = vunpack.c.h.b16 %v3497
        %v3717 = vunpack.c.l.b16 %v3498
        %v3718 = vunpack.c.h.b16 %v3498
        %v3719 = vunpack.c.l.b16 %v3499
        %v3720 = vunpack.c.l.b16 %v3500
        %v3721 = vunpack.c.h.b16 %v3500
        %v3722 = vunpack.c.l.b16 %v3501
        %v3723 = vunpack.c.h.b16 %v3501
        %v3724 = vunpack.c.l.b16 %v3502
        %v3725 = vunpack.c.l.b16 %v3503
        %v3726 = vunpack.c.h.b16 %v3503
        %v3727 = vunpack.c.l.b16 %v3504
        %v3728 = vunpack.c.h.b16 %v3504
        %v3729 = vunpack.c.l.b16 %v3505
        %v3730 = vunpack.c.l.b16 %v3506
        %v3731 = vunpack.c.h.b16 %v3506
        %v3732 = vunpack.c.l.b16 %v3507
        %v3733 = vunpack.c.h.b16 %v3507
        %v3734 = vunpack.c.l.b16 %v3508
        %v3735 = vunpack.c.l.b16 %v3509
        %v3736 = vunpack.c.h.b16 %v3509
        %v3737 = vunpack.c.l.b16 %v3510
        %v3738 = vunpack.c.h.b16 %v3510
        %v3739 = vunpack.c.l.b16 %v3511
        %v3740 = vunpack.c.l.b16 %v3512
        %v3741 = vunpack.c.h.b16 %v3512
        %v3742 = vunpack.c.l.b16 %v3513
        %v3743 = vunpack.c.h.b16 %v3513
        %v3744 = vunpack.c.l.b16 %v3514
        %v3745 = vunpack.c.l.b16 %v3515
        %v3746 = vunpack.c.h.b16 %v3515
        %v3747 = vunpack.c.l.b16 %v3516
        %v3748 = vunpack.c.h.b16 %v3516
        %v3749 = vunpack.c.l.b16 %v3517
        %v3750 = vunpack.c.l.b16 %v3518
        %v3751 = vunpack.c.h.b16 %v3518
        %v3752 = vunpack.c.l.b16 %v3519
        %v3753 = vunpack.c.h.b16 %v3519
        %v3754 = vunpack.c.l.b16 %v3520
        %v3755 = vunpack.c.l.b16 %v3521
        %v3756 = vunpack.c.h.b16 %v3521
        %v3757 = vunpack.c.l.b16 %v3522
        %v3758 = vunpack.c.h.b16 %v3522
        %v3759 = vunpack.c.l.b16 %v3523
        %v3760 = vunpack.c.l.b16 %v3524
        %v3761 = vunpack.c.h.b16 %v3524
        %v3762 = vunpack.c.l.b16 %v3525
        %v3763 = vunpack.c.h.b16 %v3525
        %v3764 = vunpack.c.l.b16 %v3526
        %v3765 = vunpack.c.l.b16 %v3527
        %v3766 = vunpack.c.h.b16 %v3527
        %v3767 = vunpack.c.l.b16 %v3528
        %v3768 = vunpack.c.h.b16 %v3528
        %v3769 = vunpack.c.l.b16 %v3529
        %v3770 = vunpack.c.l.b16 %v3530
        %v3771 = vunpack.c.h.b16 %v3530
        %v3772 = vunpack.c.l.b16 %v3531
        %v3773 = vunpack.c.h.b16 %v3531
        %v3774 = vunpack.c.l.b16 %v3532
        %v3775 = vunpack.c.l.b16 %v3533
        %v3776 = vunpack.c.h.b16 %v3533
        %v3777 = vunpack.c.l.b16 %v3534
        %v3778 = vunpack.c.h.b16 %v3534
        %v3779 = vunpack.c.l.b16 %v3535
        %v3780 = vunpack.c.l.b16 %v3536
        %v3781 = vunpack.c.h.b16 %v3536
        %v3782 = vunpack.c.l.b16 %v3537
        %v3783 = vunpack.c.h.b16 %v3537
        %v3784 = vunpack.c.l.b16 %v3538
        %v3785 = vunpack.c.l.b16 %v3539
        %v3786 = vunpack.c.h.b16 %v3539
        %v3787 = vunpack.c.l.b16 %v3540
        %v3788 = vunpack.c.h.b16 %v3540
        %v3789 = vunpack.c.l.b16 %v3541
        %v3790 = vunpack.c.l.b16 %v3542
        %v3791 = vunpack.c.h.b16 %v3542
        %v3792 = vunpack.c.l.b16 %v3543
        %v3793 = vunpack.c.h.b16 %v3543
        %v3794 = vunpack.c.l.b16 %v3544
        %v3795 = vunpack.c.l.b16 %v3545
        %v3796 = vunpack.c.h.b16 %v3545
        %v3797 = vunpack.c.l.b16 %v3546
        %v3798 = vunpack.c.h.b16 %v3546
        %v3799 = vunpack.c.l.b16 %v3547
        %v3800 = vunpack.c.l.b16 %v3548
        %v3801 = vunpack.c.h.b16 %v3548
        %v3802 = vunpack.c.l.b16 %v3549
        %v3803 = vunpack.c.h.b16 %v3549
        %v3804 = vunpack.c.l.b16 %v3550
        %v3805 = vunpack.c.l.b16 %v3551
        %v3806 = vunpack.c.h.b16 %v3551
        %v3807 = vunpack.c.l.b16 %v3552
        %v3808 = vunpack.c.h.b16 %v3552
        %v3809 = vunpack.c.l.b16 %v3553
        %v3810 = vpack.c.b16 %v3655, %v3650
        %v3811 = vpack.c.b16 %v3656, %v3651
        %v3812 = vpack.c.b16 %v3657, %v3652
        %v3813 = vpack.c.b16 %v3658, %v3653
        %v3814 = vpack.c.b16 %v3659, %v3654
        %v3815 = vpack.c.b16 %v3665, %v3660
        %v3816 = vpack.c.b16 %v3666, %v3661
        %v3817 = vpack.c.b16 %v3667, %v3662
        %v3818 = vpack.c.b16 %v3668, %v3663
        %v3819 = vpack.c.b16 %v3669, %v3664
        %v3820 = vpack.c.b16 %v3675, %v3670
        %v3821 = vpack.c.b16 %v3676, %v3671
        %v3822 = vpack.c.b16 %v3677, %v3672
        %v3823 = vpack.c.b16 %v3678, %v3673
        %v3824 = vpack.c.b16 %v3679, %v3674
        %v3825 = vpack.c.b16 %v3685, %v3680
        %v3826 = vpack.c.b16 %v3686, %v3681
        %v3827 = vpack.c.b16 %v3687, %v3682
        %v3828 = vpack.c.b16 %v3688, %v3683
        %v3829 = vpack.c.b16 %v3689, %v3684
        %v3830 = vpack.c.b16 %v3695, %v3690
        %v3831 = vpack.c.b16 %v3696, %v3691
        %v3832 = vpack.c.b16 %v3697, %v3692
        %v3833 = vpack.c.b16 %v3698, %v3693
        %v3834 = vpack.c.b16 %v3699, %v3694
        %v3835 = vpack.c.b16 %v3705, %v3700
        %v3836 = vpack.c.b16 %v3706, %v3701
        %v3837 = vpack.c.b16 %v3707, %v3702
        %v3838 = vpack.c.b16 %v3708, %v3703
        %v3839 = vpack.c.b16 %v3709, %v3704
        %v3840 = vpack.c.b16 %v3715, %v3710
        %v3841 = vpack.c.b16 %v3716, %v3711
        %v3842 = vpack.c.b16 %v3717, %v3712
        %v3843 = vpack.c.b16 %v3718, %v3713
        %v3844 = vpack.c.b16 %v3719, %v3714
        %v3845 = vpack.c.b16 %v3725, %v3720
        %v3846 = vpack.c.b16 %v3726, %v3721
        %v3847 = vpack.c.b16 %v3727, %v3722
        %v3848 = vpack.c.b16 %v3728, %v3723
        %v3849 = vpack.c.b16 %v3729, %v3724
        %v3850 = vpack.c.b16 %v3735, %v3730
        %v3851 = vpack.c.b16 %v3736, %v3731
        %v3852 = vpack.c.b16 %v3737, %v3732
        %v3853 = vpack.c.b16 %v3738, %v3733
        %v3854 = vpack.c.b16 %v3739, %v3734
        %v3855 = vpack.c.b16 %v3745, %v3740
        %v3856 = vpack.c.b16 %v3746, %v3741
        %v3857 = vpack.c.b16 %v3747, %v3742
        %v3858 = vpack.c.b16 %v3748, %v3743
        %v3859 = vpack.c.b16 %v3749, %v3744
        %v3860 = vpack.c.b16 %v3755, %v3750
        %v3861 = vpack.c.b16 %v3756, %v3751
        %v3862 = vpack.c.b16 %v3757, %v3752
        %v3863 = vpack.c.b16 %v3758, %v3753
        %v3864 = vpack.c.b16 %v3759, %v3754
        %v3865 = vpack.c.b16 %v3765, %v3760
        %v3866 = vpack.c.b16 %v3766, %v3761
        %v3867 = vpack.c.b16 %v3767, %v3762
        %v3868 = vpack.c.b16 %v3768, %v3763
        %v3869 = vpack.c.b16 %v3769, %v3764
        %v3870 = vpack.c.b16 %v3775, %v3770
        %v3871 = vpack.c.b16 %v3776, %v3771
        %v3872 = vpack.c.b16 %v3777, %v3772
        %v3873 = vpack.c.b16 %v3778, %v3773
        %v3874 = vpack.c.b16 %v3779, %v3774
        %v3875 = vpack.c.b16 %v3785, %v3780
        %v3876 = vpack.c.b16 %v3786, %v3781
        %v3877 = vpack.c.b16 %v3787, %v3782
        %v3878 = vpack.c.b16 %v3788, %v3783
        %v3879 = vpack.c.b16 %v3789, %v3784
        %v3880 = vpack.c.b16 %v3795, %v3790
        %v3881 = vpack.c.b16 %v3796, %v3791
        %v3882 = vpack.c.b16 %v3797, %v3792
        %v3883 = vpack.c.b16 %v3798, %v3793
        %v3884 = vpack.c.b16 %v3799, %v3794
        %v3885 = vpack.c.b16 %v3805, %v3800
        %v3886 = vpack.c.b16 %v3806, %v3801
        %v3887 = vpack.c.b16 %v3807, %v3802
        %v3888 = vpack.c.b16 %v3808, %v3803
        %v3889 = vpack.c.b16 %v3809, %v3804
        %3970 = vmatprep.subr.bf16.mxu0 %v3846
        %3971 = vmatpush1.bf16.msra.mxu0 %v3845
        %3972 = vmatprep.subr.bf16.mxu0 %v3841
        %3973 = vmatpush1.bf16.msra.mxu0 %v3840
        %3974 = vmatprep.subr.bf16.mxu0 %v3836
        %3975 = vmatpush1.bf16.msra.mxu0 %v3835
        %3976 = vmatprep.subr.bf16.mxu0 %v3831
        %3977 = vmatpush1.bf16.msra.mxu0 %v3830
        %3978 = vmatprep.subr.bf16.mxu0 %v3826
        %3979 = vmatpush1.bf16.msra.mxu0 %v3825
        %3980 = vmatprep.subr.bf16.mxu0 %v3821
        %3981 = vmatpush1.bf16.msra.mxu0 %v3820
        %3982 = vmatprep.subr.bf16.mxu0 %v3816
        %3983 = vmatpush1.bf16.msra.mxu0 %v3815
        %3984 = vmatprep.subr.bf16.mxu0 %v3811
        %3985 = vmatpush1.bf16.msra.mxu0 %v3810
        %3986 = vmatprep.subr.bf16.mxu0 %v3886
        %3987 = vmatpush2.bf16.msra.mxu0 %v3885
        %3988 = vmatprep.subr.bf16.mxu0 %v3881
        %3989 = vmatpush2.bf16.msra.mxu0 %v3880
        %3990 = vmatprep.subr.bf16.mxu0 %v3876
        %3991 = vmatpush2.bf16.msra.mxu0 %v3875
        %3992 = vmatprep.subr.bf16.mxu0 %v3871
        %3993 = vmatpush2.bf16.msra.mxu0 %v3870
        %3994 = vmatprep.subr.bf16.mxu0 %v3866
        %3995 = vmatpush2.bf16.msra.mxu0 %v3865
        %3996 = vmatprep.subr.bf16.mxu0 %v3861
        %3997 = vmatpush2.bf16.msra.mxu0 %v3860
        %3998 = vmatprep.subr.bf16.mxu0 %v3856
        %3999 = vmatpush2.bf16.msra.mxu0 %v3855
        %4000 = vmatprep.subr.bf16.mxu0 %v3851
        %4001 = vmatpush2.bf16.msra.mxu0 %v3850
        %4002 = vmatprep.mubr.bf16.mxu0 %v3455
        %4003 = vmatmul.mubr.bf16.gmra.mxu0 %v3454
        %v4004 = vpop.f32.mrf.mxu0
        %v4005 = vadd.f32 0.0, %v4004
        %v4006 = vpop.f32.mrf.mxu0
        %v4007 = vadd.f32 0.0, %v4006
        %v4008 = vpop.f32.mrf.mxu0
        %v4009 = vadd.f32 0.0, %v4008
        %v4010 = vpop.f32.mrf.mxu0
        %v4011 = vadd.f32 0.0, %v4010
        %4012 = vmatprep.mubr.bf16.mxu0 %v3457
        %4013 = vmatmul.mubr.bf16.gmra.mxu0 %v3456
        %v4014 = vpop.f32.mrf.mxu0
        %v4015 = vadd.f32 0.0, %v4014
        %v4016 = vpop.f32.mrf.mxu0
        %v4017 = vadd.f32 0.0, %v4016
        %v4018 = vpop.f32.mrf.mxu0
        %v4019 = vadd.f32 0.0, %v4018
        %v4020 = vpop.f32.mrf.mxu0
        %v4021 = vadd.f32 0.0, %v4020
        %4022 = vdwg.mxu0
        %4023 = vmatprep.subr.bf16.mxu0 %v3848
        %4024 = vmatpush1.bf16.msra.mxu0 %v3847
        %4025 = vmatprep.subr.bf16.mxu0 %v3843
        %4026 = vmatpush1.bf16.msra.mxu0 %v3842
        %4027 = vmatprep.subr.bf16.mxu0 %v3838
        %4028 = vmatpush1.bf16.msra.mxu0 %v3837
        %4029 = vmatprep.subr.bf16.mxu0 %v3833
        %4030 = vmatpush1.bf16.msra.mxu0 %v3832
        %4031 = vmatprep.subr.bf16.mxu0 %v3828
        %4032 = vmatpush1.bf16.msra.mxu0 %v3827
        %4033 = vmatprep.subr.bf16.mxu0 %v3823
        %4034 = vmatpush1.bf16.msra.mxu0 %v3822
        %4035 = vmatprep.subr.bf16.mxu0 %v3818
        %4036 = vmatpush1.bf16.msra.mxu0 %v3817
        %4037 = vmatprep.subr.bf16.mxu0 %v3813
        %4038 = vmatpush1.bf16.msra.mxu0 %v3812
        %4039 = vmatprep.subr.bf16.mxu0 %v3888
        %4040 = vmatpush2.bf16.msra.mxu0 %v3887
        %4041 = vmatprep.subr.bf16.mxu0 %v3883
        %4042 = vmatpush2.bf16.msra.mxu0 %v3882
        %4043 = vmatprep.subr.bf16.mxu0 %v3878
        %4044 = vmatpush2.bf16.msra.mxu0 %v3877
        %4045 = vmatprep.subr.bf16.mxu0 %v3873
        %4046 = vmatpush2.bf16.msra.mxu0 %v3872
        %4047 = vmatprep.subr.bf16.mxu0 %v3868
        %4048 = vmatpush2.bf16.msra.mxu0 %v3867
        %4049 = vmatprep.subr.bf16.mxu0 %v3863
        %4050 = vmatpush2.bf16.msra.mxu0 %v3862
        %4051 = vmatprep.subr.bf16.mxu0 %v3858
        %4052 = vmatpush2.bf16.msra.mxu0 %v3857
        %4053 = vmatprep.subr.bf16.mxu0 %v3853
        %4054 = vmatpush2.bf16.msra.mxu0 %v3852
        %4055 = vmatprep.mubr.bf16.mxu0 %v3455
        %4056 = vmatmul.mubr.bf16.gmra.mxu0 %v3454
        %v4057 = vpop.f32.mrf.mxu0
        %v4058 = vadd.f32 0.0, %v4057
        %v4059 = vpop.f32.mrf.mxu0
        %v4060 = vadd.f32 0.0, %v4059
        %v4061 = vpop.f32.mrf.mxu0
        %v4062 = vadd.f32 0.0, %v4061
        %v4063 = vpop.f32.mrf.mxu0
        %v4064 = vadd.f32 0.0, %v4063
        %4065 = vmatprep.mubr.bf16.mxu0 %v3457
        %4066 = vmatmul.mubr.bf16.gmra.mxu0 %v3456
        %v4067 = vpop.f32.mrf.mxu0
        %v4068 = vadd.f32 0.0, %v4067
        %v4069 = vpop.f32.mrf.mxu0
        %v4070 = vadd.f32 0.0, %v4069
        %v4071 = vpop.f32.mrf.mxu0
        %v4072 = vadd.f32 0.0, %v4071
        %v4073 = vpop.f32.mrf.mxu0
        %v4074 = vadd.f32 0.0, %v4073
        %4075 = vdwg.mxu0
        %4076 = vmatprep.subr.bf16.mxu0 0
        %4077 = vmatpush1.bf16.msra.mxu0 %v3849
        %4078 = vmatprep.subr.bf16.mxu0 0
        %4079 = vmatpush1.bf16.msra.mxu0 %v3844
        %4080 = vmatprep.subr.bf16.mxu0 0
        %4081 = vmatpush1.bf16.msra.mxu0 %v3839
        %4082 = vmatprep.subr.bf16.mxu0 0
        %4083 = vmatpush1.bf16.msra.mxu0 %v3834
        %4084 = vmatprep.subr.bf16.mxu0 0
        %4085 = vmatpush1.bf16.msra.mxu0 %v3829
        %4086 = vmatprep.subr.bf16.mxu0 0
        %4087 = vmatpush1.bf16.msra.mxu0 %v3824
        %4088 = vmatprep.subr.bf16.mxu0 0
        %4089 = vmatpush1.bf16.msra.mxu0 %v3819
        %4090 = vmatprep.subr.bf16.mxu0 0
        %4091 = vmatpush1.bf16.msra.mxu0 %v3814
        %4092 = vmatprep.subr.bf16.mxu0 0
        %4093 = vmatpush2.bf16.msra.mxu0 %v3889
        %4094 = vmatprep.subr.bf16.mxu0 0
        %4095 = vmatpush2.bf16.msra.mxu0 %v3884
        %4096 = vmatprep.subr.bf16.mxu0 0
        %4097 = vmatpush2.bf16.msra.mxu0 %v3879
        %4098 = vmatprep.subr.bf16.mxu0 0
        %4099 = vmatpush2.bf16.msra.mxu0 %v3874
        %4100 = vmatprep.subr.bf16.mxu0 0
        %4101 = vmatpush2.bf16.msra.mxu0 %v3869
        %4102 = vmatprep.subr.bf16.mxu0 0
        %4103 = vmatpush2.bf16.msra.mxu0 %v3864
        %4104 = vmatprep.subr.bf16.mxu0 0
        %4105 = vmatpush2.bf16.msra.mxu0 %v3859
        %4106 = vmatprep.subr.bf16.mxu0 0
        %4107 = vmatpush2.bf16.msra.mxu0 %v3854
        %4108 = vmatprep.mubr.bf16.mxu0 %v3455
        %4109 = vmatmul.mubr.bf16.gmra.mxu0 %v3454
        %v4110 = vpop.f32.mrf.mxu0
        %v4111 = vadd.f32 0.0, %v4110
        %v4112 = vpop.f32.mrf.mxu0
        %v4113 = vpop.f32.mrf.mxu0
        %v4114 = vadd.f32 0.0, %v4113
        %v4115 = vpop.f32.mrf.mxu0
        %4116 = vmatprep.mubr.bf16.mxu0 %v3457
        %4117 = vmatmul.mubr.bf16.gmra.mxu0 %v3456
        %v4118 = vpop.f32.mrf.mxu0
        %v4119 = vadd.f32 0.0, %v4118
        %v4120 = vpop.f32.mrf.mxu0
        %v4121 = vpop.f32.mrf.mxu0
        %v4122 = vadd.f32 0.0, %v4121
        %v4123 = vpop.f32.mrf.mxu0
        %4124 = vdwg.mxu0
        %v4125 = vpack.c.bf16 %v4009, %v4005
        %v4126 = vpack.c.bf16 %v4011, %v4007
        %v4127 = vpack.c.bf16 %v4062, %v4058
        %v4128 = vpack.c.bf16 %v4064, %v4060
        %v4129 = vpack.c.bf16 %v4114, %v4111
        %v4130 = vpack.c.bf16 %v4019, %v4015
        %v4131 = vpack.c.bf16 %v4021, %v4017
        %v4132 = vpack.c.bf16 %v4072, %v4068
        %v4133 = vpack.c.bf16 %v4074, %v4070
        %v4134 = vpack.c.bf16 %v4122, %v4119
        %v4135 = vld [vmem:[#allocation5] sm:$0xff]
        %v4136 = vld [vmem:[#allocation5 + $0x8] sm:$0xff]
        %v4137 = vld [vmem:[#allocation5 + $0x10] sm:$0xff]
        %v4138 = vld [vmem:[#allocation5 + $0x18] sm:$0xff]
        %v4139 = vld [vmem:[#allocation5 + $0x20] sm:$0xff]
        %v4140 = vld [vmem:[#allocation5 + $0x28] sm:$0xff]
        %v4141 = vld [vmem:[#allocation5 + $0x30] sm:$0xff]
        %v4142 = vld [vmem:[#allocation5 + $0x38] sm:$0xff]
        %v4143 = vld [vmem:[%s6] sm:$0xff]
        %v4144 = vld [vmem:[%s6 + $0x8] sm:$0xff]
        %v4145 = vld [vmem:[%s6 + $0x10] sm:$0xff]
        %v4146 = vld [vmem:[%s6 + $0x18] sm:$0xff]
        %v4147 = vld [vmem:[%s6 + $0x20] sm:$0xff]
        %v4148 = vld [vmem:[%s6 + $0x28] sm:$0xff]
        %v4149 = vld [vmem:[%s6 + $0x30] sm:$0xff]
        %v4150 = vld [vmem:[%s6 + $0x38] sm:$0xff]
        %4152 = vset.pattern.permute.xlu0 0
        %4153 = vperm.xlu0 %4152, %v4143
        %v4154 = vpop.permute.xlu0 %4153
        %4157 = vset.pattern.permute.xlu0 0
        %4158 = vperm.xlu0 %4157, %v4144
        %v4159 = vpop.permute.xlu0 %4158
        %4162 = vset.pattern.permute.xlu0 0
        %4163 = vperm.xlu0 %4162, %v4145
        %v4164 = vpop.permute.xlu0 %4163
        %4167 = vset.pattern.permute.xlu0 0
        %4168 = vperm.xlu0 %4167, %v4146
        %v4169 = vpop.permute.xlu0 %4168
        %4172 = vset.pattern.permute.xlu0 0
        %4173 = vperm.xlu0 %4172, %v4147
        %v4174 = vpop.permute.xlu0 %4173
        %4177 = vset.pattern.permute.xlu0 0
        %4178 = vperm.xlu0 %4177, %v4148
        %v4179 = vpop.permute.xlu0 %4178
        %4182 = vset.pattern.permute.xlu0 0
        %4183 = vperm.xlu0 %4182, %v4149
        %v4184 = vpop.permute.xlu0 %4183
        %4187 = vset.pattern.permute.xlu0 0
        %4188 = vperm.xlu0 %4187, %v4150
        %v4189 = vpop.permute.xlu0 %4188
        %v4199 = vunpack.c.l.b16 %v4135
        %v4200 = vunpack.c.h.b16 %v4135
        %v4201 = vunpack.c.l.b16 %v4136
        %v4202 = vunpack.c.h.b16 %v4136
        %v4203 = vunpack.c.l.b16 %v4137
        %v4204 = vunpack.c.h.b16 %v4137
        %v4205 = vunpack.c.l.b16 %v4138
        %v4206 = vunpack.c.h.b16 %v4138
        %v4207 = vunpack.c.l.b16 %v4139
        %v4208 = vunpack.c.h.b16 %v4139
        %v4209 = vunpack.c.l.b16 %v4140
        %v4210 = vunpack.c.h.b16 %v4140
        %v4211 = vunpack.c.l.b16 %v4141
        %v4212 = vunpack.c.h.b16 %v4141
        %v4213 = vunpack.c.l.b16 %v4142
        %v4214 = vunpack.c.h.b16 %v4142
        %v4215 = vpack.c.b16 %v4201, %v4199
        %v4216 = vpack.c.b16 %v4202, %v4200
        %v4217 = vpack.c.b16 %v4205, %v4203
        %v4218 = vpack.c.b16 %v4206, %v4204
        %v4219 = vpack.c.b16 %v4209, %v4207
        %v4220 = vpack.c.b16 %v4210, %v4208
        %v4221 = vpack.c.b16 %v4213, %v4211
        %v4222 = vpack.c.b16 %v4214, %v4212
        %vm4227 = vcmask 261120
        %v4229 = vsel %vm4227, %v4216, 0
        %v4232 = vsel %vm4227, %v4218, 0
        %v4235 = vsel %vm4227, %v4220, 0
        %v4238 = vsel %vm4227, %v4222, 0
        %4240 = vmatprep.subr.bf16.mxu0 0
        %4241 = vmatpush1.bf16.msra.mxu0 %v4133
        %4242 = vmatprep.subr.bf16.mxu0 0
        %4243 = vmatpush1.bf16.msra.mxu0 %v4128
        %4244 = vmatprep.subr.bf16.mxu0 0
        %4245 = vmatpush1.bf16.msra.mxu0 %v4132
        %4246 = vmatprep.subr.bf16.mxu0 0
        %4247 = vmatpush1.bf16.msra.mxu0 %v4127
        %4248 = vmatprep.subr.bf16.mxu0 0
        %4249 = vmatpush1.bf16.msra.mxu0 %v4131
        %4250 = vmatprep.subr.bf16.mxu0 0
        %4251 = vmatpush1.bf16.msra.mxu0 %v4126
        %4252 = vmatprep.subr.bf16.mxu0 0
        %4253 = vmatpush1.bf16.msra.mxu0 %v4130
        %4254 = vmatprep.subr.bf16.mxu0 0
        %4255 = vmatpush1.bf16.msra.mxu0 %v4125
        %4256 = vmatprep.subr.bf16.mxu0 0
        %4257 = vmatpush2.bf16.msra.mxu0 0
        %4258 = vmatprep.subr.bf16.mxu0 0
        %4259 = vmatpush2.bf16.msra.mxu0 0
        %4260 = vmatprep.subr.bf16.mxu0 0
        %4261 = vmatpush2.bf16.msra.mxu0 0
        %4262 = vmatprep.subr.bf16.mxu0 0
        %4263 = vmatpush2.bf16.msra.mxu0 0
        %4264 = vmatprep.subr.bf16.mxu0 0
        %4265 = vmatpush2.bf16.msra.mxu0 0
        %4266 = vmatprep.subr.bf16.mxu0 0
        %4267 = vmatpush2.bf16.msra.mxu0 0
        %4268 = vmatprep.subr.bf16.mxu0 0
        %4269 = vmatpush2.bf16.msra.mxu0 %v4134
        %4270 = vmatprep.subr.bf16.mxu0 0
        %4271 = vmatpush2.bf16.msra.mxu0 %v4129
        %4272 = vmatprep.mubr.bf16.mxu0 %v4229
        %4273 = vmatmul.mubr.bf16.gmra.mxu0 %v4215
        %v4274 = vpop.f32.mrf.mxu0
        %v4275 = vadd.f32 %v4154, %v4274
        %v4276 = vpop.f32.mrf.mxu0
        %v4277 = vpop.f32.mrf.mxu0
        %v4278 = vadd.f32 %v4159, %v4277
        %v4279 = vpop.f32.mrf.mxu0
        %4280 = vmatprep.mubr.bf16.mxu0 %v4232
        %4281 = vmatmul.mubr.bf16.gmra.mxu0 %v4217
        %v4282 = vpop.f32.mrf.mxu0
        %v4283 = vadd.f32 %v4164, %v4282
        %v4284 = vpop.f32.mrf.mxu0
        %v4285 = vpop.f32.mrf.mxu0
        %v4286 = vadd.f32 %v4169, %v4285
        %v4287 = vpop.f32.mrf.mxu0
        %4288 = vmatprep.mubr.bf16.mxu0 %v4235
        %4289 = vmatmul.mubr.bf16.gmra.mxu0 %v4219
        %v4290 = vpop.f32.mrf.mxu0
        %v4291 = vadd.f32 %v4174, %v4290
        %v4292 = vpop.f32.mrf.mxu0
        %v4293 = vpop.f32.mrf.mxu0
        %v4294 = vadd.f32 %v4179, %v4293
        %v4295 = vpop.f32.mrf.mxu0
        %4296 = vmatprep.mubr.bf16.mxu0 %v4238
        %4297 = vmatmul.mubr.bf16.gmra.mxu0 %v4221
        %v4298 = vpop.f32.mrf.mxu0
        %v4299 = vadd.f32 %v4184, %v4298
        %v4300 = vpop.f32.mrf.mxu0
        %v4301 = vpop.f32.mrf.mxu0
        %v4302 = vadd.f32 %v4189, %v4301
        %v4303 = vpop.f32.mrf.mxu0
        %4304 = vdwg.mxu0
        %vm4305 = vcmp.ge.f32.partialorder %v4275, 0.0
        %vm4306 = vcmp.ge.f32.partialorder %v4278, 0.0
        %vm4307 = vcmp.ge.f32.partialorder %v4283, 0.0
        %vm4308 = vcmp.ge.f32.partialorder %v4286, 0.0
        %vm4309 = vcmp.ge.f32.partialorder %v4291, 0.0
        %vm4310 = vcmp.ge.f32.partialorder %v4294, 0.0
        %vm4311 = vcmp.ge.f32.partialorder %v4299, 0.0
        %vm4312 = vcmp.ge.f32.partialorder %v4302, 0.0
        %v4313 = vmul.f32 %v4275, 0.2
        %v4314 = vmul.f32 %v4278, 0.2
        %v4315 = vmul.f32 %v4283, 0.2
        %v4316 = vmul.f32 %v4286, 0.2
        %v4317 = vmul.f32 %v4291, 0.2
        %v4318 = vmul.f32 %v4294, 0.2
        %v4319 = vmul.f32 %v4299, 0.2
        %v4320 = vmul.f32 %v4302, 0.2
        %v4321 = vsel %vm4305, %v4275, %v4313
        %v4322 = vsel %vm4306, %v4278, %v4314
        %v4323 = vsel %vm4307, %v4283, %v4315
        %v4324 = vsel %vm4308, %v4286, %v4316
        %v4325 = vsel %vm4309, %v4291, %v4317
        %v4326 = vsel %vm4310, %v4294, %v4318
        %v4327 = vsel %vm4311, %v4299, %v4319
        %v4328 = vsel %vm4312, %v4302, %v4320
        %s4329 = scalar_lea.vmem %s6, 64
        %v4330 = vld [vmem:[%s4329] sm:$0xff]
        %v4331 = vld [vmem:[%s4329 + $0x8] sm:$0xff]
        %v4332 = vld [vmem:[%s4329 + $0x10] sm:$0xff]
        %v4333 = vld [vmem:[%s4329 + $0x18] sm:$0xff]
        %v4334 = vld [vmem:[%s4329 + $0x20] sm:$0xff]
        %v4335 = vld [vmem:[%s4329 + $0x28] sm:$0xff]
        %v4336 = vld [vmem:[%s4329 + $0x30] sm:$0xff]
        %v4337 = vld [vmem:[%s4329 + $0x38] sm:$0xff]
        %4339 = vset.pattern.permute.xlu0 0
        %4340 = vperm.xlu0 %4339, %v4330
        %v4341 = vpop.permute.xlu0 %4340
        %4344 = vset.pattern.permute.xlu0 0
        %4345 = vperm.xlu0 %4344, %v4331
        %v4346 = vpop.permute.xlu0 %4345
        %4349 = vset.pattern.permute.xlu0 0
        %4350 = vperm.xlu0 %4349, %v4332
        %v4351 = vpop.permute.xlu0 %4350
        %4354 = vset.pattern.permute.xlu0 0
        %4355 = vperm.xlu0 %4354, %v4333
        %v4356 = vpop.permute.xlu0 %4355
        %4359 = vset.pattern.permute.xlu0 0
        %4360 = vperm.xlu0 %4359, %v4334
        %v4361 = vpop.permute.xlu0 %4360
        %4364 = vset.pattern.permute.xlu0 0
        %4365 = vperm.xlu0 %4364, %v4335
        %v4366 = vpop.permute.xlu0 %4365
        %4369 = vset.pattern.permute.xlu0 0
        %4370 = vperm.xlu0 %4369, %v4336
        %v4371 = vpop.permute.xlu0 %4370
        %4374 = vset.pattern.permute.xlu0 0
        %4375 = vperm.xlu0 %4374, %v4337
        %v4376 = vpop.permute.xlu0 %4375
        %v4378 = vmul.f32 %v4321, %v4341
        %v4379 = vmul.f32 %v4322, %v4346
        %v4380 = vmul.f32 %v4323, %v4351
        %v4381 = vmul.f32 %v4324, %v4356
        %v4382 = vmul.f32 %v4325, %v4361
        %v4383 = vmul.f32 %v4326, %v4366
        %v4384 = vmul.f32 %v4327, %v4371
        %v4385 = vmul.f32 %v4328, %v4376
        %s4386 = scalar_lea.vmem %s6, 128
        %v4387 = vld [vmem:[%s4386] sm:$0xff]
        %v4388 = vld [vmem:[%s4386 + $0x8] sm:$0xff]
        %v4389 = vld [vmem:[%s4386 + $0x10] sm:$0xff]
        %v4390 = vld [vmem:[%s4386 + $0x18] sm:$0xff]
        %v4391 = vld [vmem:[%s4386 + $0x20] sm:$0xff]
        %v4392 = vld [vmem:[%s4386 + $0x28] sm:$0xff]
        %v4393 = vld [vmem:[%s4386 + $0x30] sm:$0xff]
        %v4394 = vld [vmem:[%s4386 + $0x38] sm:$0xff]
        %4396 = vset.pattern.permute.xlu0 0
        %4397 = vperm.xlu0 %4396, %v4387
        %v4398 = vpop.permute.xlu0 %4397
        %4401 = vset.pattern.permute.xlu0 0
        %4402 = vperm.xlu0 %4401, %v4388
        %v4403 = vpop.permute.xlu0 %4402
        %4406 = vset.pattern.permute.xlu0 0
        %4407 = vperm.xlu0 %4406, %v4389
        %v4408 = vpop.permute.xlu0 %4407
        %4411 = vset.pattern.permute.xlu0 0
        %4412 = vperm.xlu0 %4411, %v4390
        %v4413 = vpop.permute.xlu0 %4412
        %4416 = vset.pattern.permute.xlu0 0
        %4417 = vperm.xlu0 %4416, %v4391
        %v4418 = vpop.permute.xlu0 %4417
        %4421 = vset.pattern.permute.xlu0 0
        %4422 = vperm.xlu0 %4421, %v4392
        %v4423 = vpop.permute.xlu0 %4422
        %4426 = vset.pattern.permute.xlu0 0
        %4427 = vperm.xlu0 %4426, %v4393
        %v4428 = vpop.permute.xlu0 %4427
        %4431 = vset.pattern.permute.xlu0 0
        %4432 = vperm.xlu0 %4431, %v4394
        %v4433 = vpop.permute.xlu0 %4432
        %v4435 = vadd.f32 %v4378, %v4398
        %v4436 = vadd.f32 %v4379, %v4403
        %v4437 = vadd.f32 %v4380, %v4408
        %v4438 = vadd.f32 %v4381, %v4413
        %v4439 = vadd.f32 %v4382, %v4418
        %v4440 = vadd.f32 %v4383, %v4423
        %v4441 = vadd.f32 %v4384, %v4428
        %v4442 = vadd.f32 %v4385, %v4433
        %v4443 = vpack.c.bf16 %v4436, %v4435
        %v4444 = vpack.c.bf16 %v4438, %v4437
        %v4445 = vpack.c.bf16 %v4440, %v4439
        %v4446 = vpack.c.bf16 %v4442, %v4441
        %v4447 = vld [vmem:[%s11] sm:$0xff]
        %v4448 = vld [vmem:[%s11 + $0x8] sm:$0xff]
        %v4449 = vld [vmem:[%s11 + $0x10] sm:$0xff]
        %v4450 = vld [vmem:[%s11 + $0x18] sm:$0xff]
        %v4451 = vld [vmem:[%s11 + $0x20] sm:$0xff]
        %v4452 = vld [vmem:[%s11 + $0x28] sm:$0xff]
        %v4453 = vld [vmem:[%s11 + $0x30] sm:$0xff]
        %v4454 = vld [vmem:[%s11 + $0x38] sm:$0xff]
        %v4455 = vld [vmem:[%s11 + $0x40] sm:$0xff]
        %v4456 = vld [vmem:[%s11 + $0x48] sm:$0xff]
        %v4457 = vld [vmem:[%s11 + $0x50] sm:$0xff]
        %v4458 = vld [vmem:[%s11 + $0x58] sm:$0xff]
        %v4459 = vld [vmem:[%s11 + $0x60] sm:$0xff]
        %v4460 = vld [vmem:[%s11 + $0x68] sm:$0xff]
        %v4461 = vld [vmem:[%s11 + $0x70] sm:$0xff]
        %v4462 = vld [vmem:[%s11 + $0x78] sm:$0xff]
        %v4479 = vunpack.c.l.b16 %v4447
        %v4480 = vunpack.c.h.b16 %v4447
        %v4481 = vunpack.c.l.b16 %v4448
        %v4482 = vunpack.c.h.b16 %v4448
        %v4483 = vunpack.c.l.b16 %v4449
        %v4484 = vunpack.c.h.b16 %v4449
        %v4485 = vunpack.c.l.b16 %v4450
        %v4486 = vunpack.c.h.b16 %v4450
        %v4487 = vunpack.c.l.b16 %v4451
        %v4488 = vunpack.c.h.b16 %v4451
        %v4489 = vunpack.c.l.b16 %v4452
        %v4490 = vunpack.c.h.b16 %v4452
        %v4491 = vunpack.c.l.b16 %v4453
        %v4492 = vunpack.c.h.b16 %v4453
        %v4493 = vunpack.c.l.b16 %v4454
        %v4494 = vunpack.c.h.b16 %v4454
        %v4495 = vunpack.c.l.b16 %v4455
        %v4496 = vunpack.c.h.b16 %v4455
        %v4497 = vunpack.c.l.b16 %v4456
        %v4498 = vunpack.c.h.b16 %v4456
        %v4499 = vunpack.c.l.b16 %v4457
        %v4500 = vunpack.c.h.b16 %v4457
        %v4501 = vunpack.c.l.b16 %v4458
        %v4502 = vunpack.c.h.b16 %v4458
        %v4503 = vunpack.c.l.b16 %v4459
        %v4504 = vunpack.c.h.b16 %v4459
        %v4505 = vunpack.c.l.b16 %v4460
        %v4506 = vunpack.c.h.b16 %v4460
        %v4507 = vunpack.c.l.b16 %v4461
        %v4508 = vunpack.c.h.b16 %v4461
        %v4509 = vunpack.c.l.b16 %v4462
        %v4510 = vunpack.c.h.b16 %v4462
        %v4511 = vpack.c.b16 %v4481, %v4479
        %v4512 = vpack.c.b16 %v4482, %v4480
        %v4513 = vpack.c.b16 %v4485, %v4483
        %v4514 = vpack.c.b16 %v4486, %v4484
        %v4515 = vpack.c.b16 %v4489, %v4487
        %v4516 = vpack.c.b16 %v4490, %v4488
        %v4517 = vpack.c.b16 %v4493, %v4491
        %v4518 = vpack.c.b16 %v4494, %v4492
        %v4519 = vpack.c.b16 %v4497, %v4495
        %v4520 = vpack.c.b16 %v4498, %v4496
        %v4521 = vpack.c.b16 %v4501, %v4499
        %v4522 = vpack.c.b16 %v4502, %v4500
        %v4523 = vpack.c.b16 %v4505, %v4503
        %v4524 = vpack.c.b16 %v4506, %v4504
        %v4525 = vpack.c.b16 %v4509, %v4507
        %v4526 = vpack.c.b16 %v4510, %v4508
        %4543 = vmatprep.subr.bf16.mxu0 %v4526
        %4544 = vmatpush1.bf16.msra.mxu0 %v4525
        %4545 = vmatprep.subr.bf16.mxu0 %v4524
        %4546 = vmatpush1.bf16.msra.mxu0 %v4523
        %4547 = vmatprep.subr.bf16.mxu0 %v4522
        %4548 = vmatpush1.bf16.msra.mxu0 %v4521
        %4549 = vmatprep.subr.bf16.mxu0 %v4520
        %4550 = vmatpush1.bf16.msra.mxu0 %v4519
        %4551 = vmatprep.subr.bf16.mxu0 %v4518
        %4552 = vmatpush1.bf16.msra.mxu0 %v4517
        %4553 = vmatprep.subr.bf16.mxu0 %v4516
        %4554 = vmatpush1.bf16.msra.mxu0 %v4515
        %4555 = vmatprep.subr.bf16.mxu0 %v4514
        %4556 = vmatpush1.bf16.msra.mxu0 %v4513
        %4557 = vmatprep.subr.bf16.mxu0 %v4512
        %4558 = vmatpush1.bf16.msra.mxu0 %v4511
        %4559 = vmatprep.subr.bf16.mxu0 0
        %4560 = vmatpush2.bf16.msra.mxu0 0
        %4561 = vmatprep.subr.bf16.mxu0 0
        %4562 = vmatpush2.bf16.msra.mxu0 0
        %4563 = vmatprep.subr.bf16.mxu0 0
        %4564 = vmatpush2.bf16.msra.mxu0 0
        %4565 = vmatprep.subr.bf16.mxu0 0
        %4566 = vmatpush2.bf16.msra.mxu0 0
        %4567 = vmatprep.subr.bf16.mxu0 0
        %4568 = vmatpush2.bf16.msra.mxu0 0
        %4569 = vmatprep.subr.bf16.mxu0 0
        %4570 = vmatpush2.bf16.msra.mxu0 0
        %4571 = vmatprep.subr.bf16.mxu0 0
        %4572 = vmatpush2.bf16.msra.mxu0 0
        %4573 = vmatprep.subr.bf16.mxu0 0
        %4574 = vmatpush2.bf16.msra.mxu0 0
        %4575 = vmatprep.mubr.bf16.mxu0 0
        %4576 = vmatmul.mubr.bf16.gmra.mxu0 %v4443
        %v4577 = vpop.f32.mrf.mxu0
        %v4578 = vadd.f32 0.0, %v4577
        %v4579 = vpop.f32.mrf.mxu0
        %v4580 = vadd.f32 0.0, %v4579
        %v4581 = vpop.f32.mrf.mxu0
        %v4582 = vadd.f32 0.0, %v4581
        %v4583 = vpop.f32.mrf.mxu0
        %v4584 = vadd.f32 0.0, %v4583
        %4585 = vmatprep.mubr.bf16.mxu0 0
        %4586 = vmatmul.mubr.bf16.gmra.mxu0 %v4444
        %v4587 = vpop.f32.mrf.mxu0
        %v4588 = vadd.f32 0.0, %v4587
        %v4589 = vpop.f32.mrf.mxu0
        %v4590 = vadd.f32 0.0, %v4589
        %v4591 = vpop.f32.mrf.mxu0
        %v4592 = vadd.f32 0.0, %v4591
        %v4593 = vpop.f32.mrf.mxu0
        %v4594 = vadd.f32 0.0, %v4593
        %4595 = vmatprep.mubr.bf16.mxu0 0
        %4596 = vmatmul.mubr.bf16.gmra.mxu0 %v4445
        %v4597 = vpop.f32.mrf.mxu0
        %v4598 = vadd.f32 0.0, %v4597
        %v4599 = vpop.f32.mrf.mxu0
        %v4600 = vadd.f32 0.0, %v4599
        %v4601 = vpop.f32.mrf.mxu0
        %v4602 = vadd.f32 0.0, %v4601
        %v4603 = vpop.f32.mrf.mxu0
        %v4604 = vadd.f32 0.0, %v4603
        %4605 = vmatprep.mubr.bf16.mxu0 0
        %4606 = vmatmul.mubr.bf16.gmra.mxu0 %v4446
        %v4607 = vpop.f32.mrf.mxu0
        %v4608 = vadd.f32 0.0, %v4607
        %v4609 = vpop.f32.mrf.mxu0
        %v4610 = vadd.f32 0.0, %v4609
        %v4611 = vpop.f32.mrf.mxu0
        %v4612 = vadd.f32 0.0, %v4611
        %v4613 = vpop.f32.mrf.mxu0
        %v4614 = vadd.f32 0.0, %v4613
        %4615 = vdwg.mxu0
        %v4616 = vpack.c.bf16 %v4582, %v4578
        %v4617 = vpack.c.bf16 %v4584, %v4580
        %v4618 = vpack.c.bf16 %v4592, %v4588
        %v4619 = vpack.c.bf16 %v4594, %v4590
        %v4620 = vpack.c.bf16 %v4602, %v4598
        %v4621 = vpack.c.bf16 %v4604, %v4600
        %v4622 = vpack.c.bf16 %v4612, %v4608
        %v4623 = vpack.c.bf16 %v4614, %v4610
        %4628 = vrot.lane.b32.xlu0 %v4616, 64
        %v4629 = vpop.permute.xlu0 %4628
        %4630 = vrot.lane.b32.xlu0 %v4618, 64
        %v4631 = vpop.permute.xlu0 %4630
        %4632 = vrot.lane.b32.xlu0 %v4620, 64
        %v4633 = vpop.permute.xlu0 %4632
        %4634 = vrot.lane.b32.xlu0 %v4622, 64
        %v4635 = vpop.permute.xlu0 %4634
        %v4640 = vld [vmem:[%s7] sm:$0xff]
        %v4641 = vld [vmem:[%s7 + $0x8] sm:$0xff]
        %v4642 = vld [vmem:[%s7 + $0x10] sm:$0xff]
        %v4643 = vld [vmem:[%s7 + $0x18] sm:$0xff]
        %v4644 = vld [vmem:[%s7 + $0x20] sm:$0xff]
        %v4645 = vld [vmem:[%s7 + $0x28] sm:$0xff]
        %v4646 = vld [vmem:[%s7 + $0x30] sm:$0xff]
        %v4647 = vld [vmem:[%s7 + $0x38] sm:$0xff]
        %v4648 = vld [vmem:[%s7 + $0x40] sm:$0xff]
        %v4649 = vld [vmem:[%s7 + $0x48] sm:$0xff]
        %v4650 = vld [vmem:[%s7 + $0x50] sm:$0xff]
        %v4651 = vld [vmem:[%s7 + $0x58] sm:$0xff]
        %v4652 = vld [vmem:[%s7 + $0x60] sm:$0xff]
        %v4653 = vld [vmem:[%s7 + $0x68] sm:$0xff]
        %v4654 = vld [vmem:[%s7 + $0x70] sm:$0xff]
        %v4655 = vld [vmem:[%s7 + $0x78] sm:$0xff]
        %v4656 = vld [vmem:[%s8] sm:$0xff]
        %v4657 = vld [vmem:[%s8 + $0x8] sm:$0xff]
        %v4658 = vld [vmem:[%s8 + $0x10] sm:$0xff]
        %v4659 = vld [vmem:[%s8 + $0x18] sm:$0xff]
        %v4660 = vld [vmem:[%s8 + $0x20] sm:$0xff]
        %v4661 = vld [vmem:[%s8 + $0x28] sm:$0xff]
        %v4662 = vld [vmem:[%s8 + $0x30] sm:$0xff]
        %v4663 = vld [vmem:[%s8 + $0x38] sm:$0xff]
        %v4664 = vld [vmem:[%s8 + $0x40] sm:$0xff]
        %v4665 = vld [vmem:[%s8 + $0x48] sm:$0xff]
        %v4666 = vld [vmem:[%s8 + $0x50] sm:$0xff]
        %v4667 = vld [vmem:[%s8 + $0x58] sm:$0xff]
        %v4668 = vld [vmem:[%s8 + $0x60] sm:$0xff]
        %v4669 = vld [vmem:[%s8 + $0x68] sm:$0xff]
        %v4670 = vld [vmem:[%s8 + $0x70] sm:$0xff]
        %v4671 = vld [vmem:[%s8 + $0x78] sm:$0xff]
        %4673 = vset.pattern.permute.xlu0 0
        %4674 = vperm.xlu0 %4673, %v4656
        %v4675 = vpop.permute.xlu0 %4674
        %4678 = vset.pattern.permute.xlu0 0
        %4679 = vperm.xlu0 %4678, %v4657
        %v4680 = vpop.permute.xlu0 %4679
        %4683 = vset.pattern.permute.xlu0 0
        %4684 = vperm.xlu0 %4683, %v4658
        %v4685 = vpop.permute.xlu0 %4684
        %4688 = vset.pattern.permute.xlu0 0
        %4689 = vperm.xlu0 %4688, %v4659
        %v4690 = vpop.permute.xlu0 %4689
        %4693 = vset.pattern.permute.xlu0 0
        %4694 = vperm.xlu0 %4693, %v4660
        %v4695 = vpop.permute.xlu0 %4694
        %4698 = vset.pattern.permute.xlu0 0
        %4699 = vperm.xlu0 %4698, %v4661
        %v4700 = vpop.permute.xlu0 %4699
        %4703 = vset.pattern.permute.xlu0 0
        %4704 = vperm.xlu0 %4703, %v4662
        %v4705 = vpop.permute.xlu0 %4704
        %4708 = vset.pattern.permute.xlu0 0
        %4709 = vperm.xlu0 %4708, %v4663
        %v4710 = vpop.permute.xlu0 %4709
        %4713 = vset.pattern.permute.xlu0 0
        %4714 = vperm.xlu0 %4713, %v4664
        %v4715 = vpop.permute.xlu0 %4714
        %4718 = vset.pattern.permute.xlu0 0
        %4719 = vperm.xlu0 %4718, %v4665
        %v4720 = vpop.permute.xlu0 %4719
        %4723 = vset.pattern.permute.xlu0 0
        %4724 = vperm.xlu0 %4723, %v4666
        %v4725 = vpop.permute.xlu0 %4724
        %4728 = vset.pattern.permute.xlu0 0
        %4729 = vperm.xlu0 %4728, %v4667
        %v4730 = vpop.permute.xlu0 %4729
        %4733 = vset.pattern.permute.xlu0 0
        %4734 = vperm.xlu0 %4733, %v4668
        %v4735 = vpop.permute.xlu0 %4734
        %4738 = vset.pattern.permute.xlu0 0
        %4739 = vperm.xlu0 %4738, %v4669
        %v4740 = vpop.permute.xlu0 %4739
        %4743 = vset.pattern.permute.xlu0 0
        %4744 = vperm.xlu0 %4743, %v4670
        %v4745 = vpop.permute.xlu0 %4744
        %4748 = vset.pattern.permute.xlu0 0
        %4749 = vperm.xlu0 %4748, %v4671
        %v4750 = vpop.permute.xlu0 %4749
        %v4768 = vunpack.c.l.b16 %v4640
        %v4769 = vunpack.c.h.b16 %v4640
        %v4770 = vunpack.c.l.b16 %v4641
        %v4771 = vunpack.c.h.b16 %v4641
        %v4772 = vunpack.c.l.b16 %v4642
        %v4773 = vunpack.c.h.b16 %v4642
        %v4774 = vunpack.c.l.b16 %v4643
        %v4775 = vunpack.c.h.b16 %v4643
        %v4776 = vunpack.c.l.b16 %v4644
        %v4777 = vunpack.c.h.b16 %v4644
        %v4778 = vunpack.c.l.b16 %v4645
        %v4779 = vunpack.c.h.b16 %v4645
        %v4780 = vunpack.c.l.b16 %v4646
        %v4781 = vunpack.c.h.b16 %v4646
        %v4782 = vunpack.c.l.b16 %v4647
        %v4783 = vunpack.c.h.b16 %v4647
        %v4784 = vunpack.c.l.b16 %v4648
        %v4785 = vunpack.c.h.b16 %v4648
        %v4786 = vunpack.c.l.b16 %v4649
        %v4787 = vunpack.c.h.b16 %v4649
        %v4788 = vunpack.c.l.b16 %v4650
        %v4789 = vunpack.c.h.b16 %v4650
        %v4790 = vunpack.c.l.b16 %v4651
        %v4791 = vunpack.c.h.b16 %v4651
        %v4792 = vunpack.c.l.b16 %v4652
        %v4793 = vunpack.c.h.b16 %v4652
        %v4794 = vunpack.c.l.b16 %v4653
        %v4795 = vunpack.c.h.b16 %v4653
        %v4796 = vunpack.c.l.b16 %v4654
        %v4797 = vunpack.c.h.b16 %v4654
        %v4798 = vunpack.c.l.b16 %v4655
        %v4799 = vunpack.c.h.b16 %v4655
        %v4800 = vpack.c.b16 %v4770, %v4768
        %v4801 = vpack.c.b16 %v4771, %v4769
        %v4802 = vpack.c.b16 %v4774, %v4772
        %v4803 = vpack.c.b16 %v4775, %v4773
        %v4804 = vpack.c.b16 %v4778, %v4776
        %v4805 = vpack.c.b16 %v4779, %v4777
        %v4806 = vpack.c.b16 %v4782, %v4780
        %v4807 = vpack.c.b16 %v4783, %v4781
        %v4808 = vpack.c.b16 %v4786, %v4784
        %v4809 = vpack.c.b16 %v4787, %v4785
        %v4810 = vpack.c.b16 %v4790, %v4788
        %v4811 = vpack.c.b16 %v4791, %v4789
        %v4812 = vpack.c.b16 %v4794, %v4792
        %v4813 = vpack.c.b16 %v4795, %v4793
        %v4814 = vpack.c.b16 %v4798, %v4796
        %v4815 = vpack.c.b16 %v4799, %v4797
        %vm4824 = vcmask 523264
        %v4826 = vsel %vm4824, %v4801, 0
        %v4829 = vsel %vm4824, %v4803, 0
        %v4832 = vsel %vm4824, %v4805, 0
        %v4835 = vsel %vm4824, %v4807, 0
        %v4838 = vsel %vm4824, %v4809, 0
        %v4841 = vsel %vm4824, %v4811, 0
        %v4844 = vsel %vm4824, %v4813, 0
        %v4847 = vsel %vm4824, %v4815, 0
        %4849 = vmatprep.subr.bf16.mxu0 0
        %4850 = vmatpush1.bf16.msra.mxu0 %v4635
        %4851 = vmatprep.subr.bf16.mxu0 0
        %4852 = vmatpush1.bf16.msra.mxu0 %v4633
        %4853 = vmatprep.subr.bf16.mxu0 0
        %4854 = vmatpush1.bf16.msra.mxu0 %v4631
        %4855 = vmatprep.subr.bf16.mxu0 0
        %4856 = vmatpush1.bf16.msra.mxu0 %v4629
        %4857 = vmatprep.subr.bf16.mxu0 0
        %4858 = vmatpush1.bf16.msra.mxu0 %v4622
        %4859 = vmatprep.subr.bf16.mxu0 0
        %4860 = vmatpush1.bf16.msra.mxu0 %v4620
        %4861 = vmatprep.subr.bf16.mxu0 0
        %4862 = vmatpush1.bf16.msra.mxu0 %v4618
        %4863 = vmatprep.subr.bf16.mxu0 0
        %4864 = vmatpush1.bf16.msra.mxu0 %v4616
        %4865 = vmatprep.subr.bf16.mxu0 0
        %4866 = vmatpush2.bf16.msra.mxu0 0
        %4867 = vmatprep.subr.bf16.mxu0 0
        %4868 = vmatpush2.bf16.msra.mxu0 0
        %4869 = vmatprep.subr.bf16.mxu0 0
        %4870 = vmatpush2.bf16.msra.mxu0 0
        %4871 = vmatprep.subr.bf16.mxu0 0
        %4872 = vmatpush2.bf16.msra.mxu0 0
        %4873 = vmatprep.subr.bf16.mxu0 0
        %4874 = vmatpush2.bf16.msra.mxu0 %v4623
        %4875 = vmatprep.subr.bf16.mxu0 0
        %4876 = vmatpush2.bf16.msra.mxu0 %v4621
        %4877 = vmatprep.subr.bf16.mxu0 0
        %4878 = vmatpush2.bf16.msra.mxu0 %v4619
        %4879 = vmatprep.subr.bf16.mxu0 0
        %4880 = vmatpush2.bf16.msra.mxu0 %v4617
        %4881 = vmatprep.mubr.bf16.mxu0 %v4826
        %4882 = vmatmul.mubr.bf16.gmra.mxu0 %v4800
        %v4883 = vpop.f32.mrf.mxu0
        %v4884 = vadd.f32 %v4675, %v4883
        %v4885 = vpop.f32.mrf.mxu0
        %v4886 = vpop.f32.mrf.mxu0
        %v4887 = vadd.f32 %v4680, %v4886
        %v4888 = vpop.f32.mrf.mxu0
        %4889 = vmatprep.mubr.bf16.mxu0 %v4829
        %4890 = vmatmul.mubr.bf16.gmra.mxu0 %v4802
        %v4891 = vpop.f32.mrf.mxu0
        %v4892 = vadd.f32 %v4685, %v4891
        %v4893 = vpop.f32.mrf.mxu0
        %v4894 = vpop.f32.mrf.mxu0
        %v4895 = vadd.f32 %v4690, %v4894
        %v4896 = vpop.f32.mrf.mxu0
        %4897 = vmatprep.mubr.bf16.mxu0 %v4832
        %4898 = vmatmul.mubr.bf16.gmra.mxu0 %v4804
        %v4899 = vpop.f32.mrf.mxu0
        %v4900 = vadd.f32 %v4695, %v4899
        %v4901 = vpop.f32.mrf.mxu0
        %v4902 = vpop.f32.mrf.mxu0
        %v4903 = vadd.f32 %v4700, %v4902
        %v4904 = vpop.f32.mrf.mxu0
        %4905 = vmatprep.mubr.bf16.mxu0 %v4835
        %4906 = vmatmul.mubr.bf16.gmra.mxu0 %v4806
        %v4907 = vpop.f32.mrf.mxu0
        %v4908 = vadd.f32 %v4705, %v4907
        %v4909 = vpop.f32.mrf.mxu0
        %v4910 = vpop.f32.mrf.mxu0
        %v4911 = vadd.f32 %v4710, %v4910
        %v4912 = vpop.f32.mrf.mxu0
        %4913 = vmatprep.mubr.bf16.mxu0 %v4838
        %4914 = vmatmul.mubr.bf16.gmra.mxu0 %v4808
        %v4915 = vpop.f32.mrf.mxu0
        %v4916 = vadd.f32 %v4715, %v4915
        %v4917 = vpop.f32.mrf.mxu0
        %v4918 = vpop.f32.mrf.mxu0
        %v4919 = vadd.f32 %v4720, %v4918
        %v4920 = vpop.f32.mrf.mxu0
        %4921 = vmatprep.mubr.bf16.mxu0 %v4841
        %4922 = vmatmul.mubr.bf16.gmra.mxu0 %v4810
        %v4923 = vpop.f32.mrf.mxu0
        %v4924 = vadd.f32 %v4725, %v4923
        %v4925 = vpop.f32.mrf.mxu0
        %v4926 = vpop.f32.mrf.mxu0
        %v4927 = vadd.f32 %v4730, %v4926
        %v4928 = vpop.f32.mrf.mxu0
        %4929 = vmatprep.mubr.bf16.mxu0 %v4844
        %4930 = vmatmul.mubr.bf16.gmra.mxu0 %v4812
        %v4931 = vpop.f32.mrf.mxu0
        %v4932 = vadd.f32 %v4735, %v4931
        %v4933 = vpop.f32.mrf.mxu0
        %v4934 = vpop.f32.mrf.mxu0
        %v4935 = vadd.f32 %v4740, %v4934
        %v4936 = vpop.f32.mrf.mxu0
        %4937 = vmatprep.mubr.bf16.mxu0 %v4847
        %4938 = vmatmul.mubr.bf16.gmra.mxu0 %v4814
        %v4939 = vpop.f32.mrf.mxu0
        %v4940 = vadd.f32 %v4745, %v4939
        %v4941 = vpop.f32.mrf.mxu0
        %v4942 = vpop.f32.mrf.mxu0
        %v4943 = vadd.f32 %v4750, %v4942
        %v4944 = vpop.f32.mrf.mxu0
        %4945 = vdwg.mxu0
        %vm4946 = vcmp.ge.f32.partialorder %v4884, 0.0
        %vm4947 = vcmp.ge.f32.partialorder %v4887, 0.0
        %vm4948 = vcmp.ge.f32.partialorder %v4892, 0.0
        %vm4949 = vcmp.ge.f32.partialorder %v4895, 0.0
        %vm4950 = vcmp.ge.f32.partialorder %v4900, 0.0
        %vm4951 = vcmp.ge.f32.partialorder %v4903, 0.0
        %vm4952 = vcmp.ge.f32.partialorder %v4908, 0.0
        %vm4953 = vcmp.ge.f32.partialorder %v4911, 0.0
        %vm4954 = vcmp.ge.f32.partialorder %v4916, 0.0
        %vm4955 = vcmp.ge.f32.partialorder %v4919, 0.0
        %vm4956 = vcmp.ge.f32.partialorder %v4924, 0.0
        %vm4957 = vcmp.ge.f32.partialorder %v4927, 0.0
        %vm4958 = vcmp.ge.f32.partialorder %v4932, 0.0
        %vm4959 = vcmp.ge.f32.partialorder %v4935, 0.0
        %vm4960 = vcmp.ge.f32.partialorder %v4940, 0.0
        %vm4961 = vcmp.ge.f32.partialorder %v4943, 0.0
        %v4962 = vmul.f32 %v4884, 0.2
        %v4963 = vmul.f32 %v4887, 0.2
        %v4964 = vmul.f32 %v4892, 0.2
        %v4965 = vmul.f32 %v4895, 0.2
        %v4966 = vmul.f32 %v4900, 0.2
        %v4967 = vmul.f32 %v4903, 0.2
        %v4968 = vmul.f32 %v4908, 0.2
        %v4969 = vmul.f32 %v4911, 0.2
        %v4970 = vmul.f32 %v4916, 0.2
        %v4971 = vmul.f32 %v4919, 0.2
        %v4972 = vmul.f32 %v4924, 0.2
        %v4973 = vmul.f32 %v4927, 0.2
        %v4974 = vmul.f32 %v4932, 0.2
        %v4975 = vmul.f32 %v4935, 0.2
        %v4976 = vmul.f32 %v4940, 0.2
        %v4977 = vmul.f32 %v4943, 0.2
        %v4978 = vsel %vm4946, %v4884, %v4962
        %v4979 = vsel %vm4947, %v4887, %v4963
        %v4980 = vsel %vm4948, %v4892, %v4964
        %v4981 = vsel %vm4949, %v4895, %v4965
        %v4982 = vsel %vm4950, %v4900, %v4966
        %v4983 = vsel %vm4951, %v4903, %v4967
        %v4984 = vsel %vm4952, %v4908, %v4968
        %v4985 = vsel %vm4953, %v4911, %v4969
        %v4986 = vsel %vm4954, %v4916, %v4970
        %v4987 = vsel %vm4955, %v4919, %v4971
        %v4988 = vsel %vm4956, %v4924, %v4972
        %v4989 = vsel %vm4957, %v4927, %v4973
        %v4990 = vsel %vm4958, %v4932, %v4974
        %v4991 = vsel %vm4959, %v4935, %v4975
        %v4992 = vsel %vm4960, %v4940, %v4976
        %v4993 = vsel %vm4961, %v4943, %v4977
        %s4994 = scalar_lea.vmem %s8, 128
        %v4995 = vld [vmem:[%s4994] sm:$0xff]
        %v4996 = vld [vmem:[%s4994 + $0x8] sm:$0xff]
        %v4997 = vld [vmem:[%s4994 + $0x10] sm:$0xff]
        %v4998 = vld [vmem:[%s4994 + $0x18] sm:$0xff]
        %v4999 = vld [vmem:[%s4994 + $0x20] sm:$0xff]
        %v5000 = vld [vmem:[%s4994 + $0x28] sm:$0xff]
        %v5001 = vld [vmem:[%s4994 + $0x30] sm:$0xff]
        %v5002 = vld [vmem:[%s4994 + $0x38] sm:$0xff]
        %v5003 = vld [vmem:[%s4994 + $0x40] sm:$0xff]
        %v5004 = vld [vmem:[%s4994 + $0x48] sm:$0xff]
        %v5005 = vld [vmem:[%s4994 + $0x50] sm:$0xff]
        %v5006 = vld [vmem:[%s4994 + $0x58] sm:$0xff]
        %v5007 = vld [vmem:[%s4994 + $0x60] sm:$0xff]
        %v5008 = vld [vmem:[%s4994 + $0x68] sm:$0xff]
        %v5009 = vld [vmem:[%s4994 + $0x70] sm:$0xff]
        %v5010 = vld [vmem:[%s4994 + $0x78] sm:$0xff]
        %5012 = vset.pattern.permute.xlu0 0
        %5013 = vperm.xlu0 %5012, %v4995
        %v5014 = vpop.permute.xlu0 %5013
        %5017 = vset.pattern.permute.xlu0 0
        %5018 = vperm.xlu0 %5017, %v4996
        %v5019 = vpop.permute.xlu0 %5018
        %5022 = vset.pattern.permute.xlu0 0
        %5023 = vperm.xlu0 %5022, %v4997
        %v5024 = vpop.permute.xlu0 %5023
        %5027 = vset.pattern.permute.xlu0 0
        %5028 = vperm.xlu0 %5027, %v4998
        %v5029 = vpop.permute.xlu0 %5028
        %5032 = vset.pattern.permute.xlu0 0
        %5033 = vperm.xlu0 %5032, %v4999
        %v5034 = vpop.permute.xlu0 %5033
        %5037 = vset.pattern.permute.xlu0 0
        %5038 = vperm.xlu0 %5037, %v5000
        %v5039 = vpop.permute.xlu0 %5038
        %5042 = vset.pattern.permute.xlu0 0
        %5043 = vperm.xlu0 %5042, %v5001
        %v5044 = vpop.permute.xlu0 %5043
        %5047 = vset.pattern.permute.xlu0 0
        %5048 = vperm.xlu0 %5047, %v5002
        %v5049 = vpop.permute.xlu0 %5048
        %5052 = vset.pattern.permute.xlu0 0
        %5053 = vperm.xlu0 %5052, %v5003
        %v5054 = vpop.permute.xlu0 %5053
        %5057 = vset.pattern.permute.xlu0 0
        %5058 = vperm.xlu0 %5057, %v5004
        %v5059 = vpop.permute.xlu0 %5058
        %5062 = vset.pattern.permute.xlu0 0
        %5063 = vperm.xlu0 %5062, %v5005
        %v5064 = vpop.permute.xlu0 %5063
        %5067 = vset.pattern.permute.xlu0 0
        %5068 = vperm.xlu0 %5067, %v5006
        %v5069 = vpop.permute.xlu0 %5068
        %5072 = vset.pattern.permute.xlu0 0
        %5073 = vperm.xlu0 %5072, %v5007
        %v5074 = vpop.permute.xlu0 %5073
        %5077 = vset.pattern.permute.xlu0 0
        %5078 = vperm.xlu0 %5077, %v5008
        %v5079 = vpop.permute.xlu0 %5078
        %5082 = vset.pattern.permute.xlu0 0
        %5083 = vperm.xlu0 %5082, %v5009
        %v5084 = vpop.permute.xlu0 %5083
        %5087 = vset.pattern.permute.xlu0 0
        %5088 = vperm.xlu0 %5087, %v5010
        %v5089 = vpop.permute.xlu0 %5088
        %v5091 = vmul.f32 %v4978, %v5014
        %v5092 = vmul.f32 %v4979, %v5019
        %v5093 = vmul.f32 %v4980, %v5024
        %v5094 = vmul.f32 %v4981, %v5029
        %v5095 = vmul.f32 %v4982, %v5034
        %v5096 = vmul.f32 %v4983, %v5039
        %v5097 = vmul.f32 %v4984, %v5044
        %v5098 = vmul.f32 %v4985, %v5049
        %v5099 = vmul.f32 %v4986, %v5054
        %v5100 = vmul.f32 %v4987, %v5059
        %v5101 = vmul.f32 %v4988, %v5064
        %v5102 = vmul.f32 %v4989, %v5069
        %v5103 = vmul.f32 %v4990, %v5074
        %v5104 = vmul.f32 %v4991, %v5079
        %v5105 = vmul.f32 %v4992, %v5084
        %v5106 = vmul.f32 %v4993, %v5089
        %s5107 = scalar_lea.vmem %s8, 256
        %v5108 = vld [vmem:[%s5107] sm:$0xff]
        %v5109 = vld [vmem:[%s5107 + $0x8] sm:$0xff]
        %v5110 = vld [vmem:[%s5107 + $0x10] sm:$0xff]
        %v5111 = vld [vmem:[%s5107 + $0x18] sm:$0xff]
        %v5112 = vld [vmem:[%s5107 + $0x20] sm:$0xff]
        %v5113 = vld [vmem:[%s5107 + $0x28] sm:$0xff]
        %v5114 = vld [vmem:[%s5107 + $0x30] sm:$0xff]
        %v5115 = vld [vmem:[%s5107 + $0x38] sm:$0xff]
        %v5116 = vld [vmem:[%s5107 + $0x40] sm:$0xff]
        %v5117 = vld [vmem:[%s5107 + $0x48] sm:$0xff]
        %v5118 = vld [vmem:[%s5107 + $0x50] sm:$0xff]
        %v5119 = vld [vmem:[%s5107 + $0x58] sm:$0xff]
        %v5120 = vld [vmem:[%s5107 + $0x60] sm:$0xff]
        %v5121 = vld [vmem:[%s5107 + $0x68] sm:$0xff]
        %v5122 = vld [vmem:[%s5107 + $0x70] sm:$0xff]
        %v5123 = vld [vmem:[%s5107 + $0x78] sm:$0xff]
        %5125 = vset.pattern.permute.xlu0 0
        %5126 = vperm.xlu0 %5125, %v5108
        %v5127 = vpop.permute.xlu0 %5126
        %5130 = vset.pattern.permute.xlu0 0
        %5131 = vperm.xlu0 %5130, %v5109
        %v5132 = vpop.permute.xlu0 %5131
        %5135 = vset.pattern.permute.xlu0 0
        %5136 = vperm.xlu0 %5135, %v5110
        %v5137 = vpop.permute.xlu0 %5136
        %5140 = vset.pattern.permute.xlu0 0
        %5141 = vperm.xlu0 %5140, %v5111
        %v5142 = vpop.permute.xlu0 %5141
        %5145 = vset.pattern.permute.xlu0 0
        %5146 = vperm.xlu0 %5145, %v5112
        %v5147 = vpop.permute.xlu0 %5146
        %5150 = vset.pattern.permute.xlu0 0
        %5151 = vperm.xlu0 %5150, %v5113
        %v5152 = vpop.permute.xlu0 %5151
        %5155 = vset.pattern.permute.xlu0 0
        %5156 = vperm.xlu0 %5155, %v5114
        %v5157 = vpop.permute.xlu0 %5156
        %5160 = vset.pattern.permute.xlu0 0
        %5161 = vperm.xlu0 %5160, %v5115
        %v5162 = vpop.permute.xlu0 %5161
        %5165 = vset.pattern.permute.xlu0 0
        %5166 = vperm.xlu0 %5165, %v5116
        %v5167 = vpop.permute.xlu0 %5166
        %5170 = vset.pattern.permute.xlu0 0
        %5171 = vperm.xlu0 %5170, %v5117
        %v5172 = vpop.permute.xlu0 %5171
        %5175 = vset.pattern.permute.xlu0 0
        %5176 = vperm.xlu0 %5175, %v5118
        %v5177 = vpop.permute.xlu0 %5176
        %5180 = vset.pattern.permute.xlu0 0
        %5181 = vperm.xlu0 %5180, %v5119
        %v5182 = vpop.permute.xlu0 %5181
        %5185 = vset.pattern.permute.xlu0 0
        %5186 = vperm.xlu0 %5185, %v5120
        %v5187 = vpop.permute.xlu0 %5186
        %5190 = vset.pattern.permute.xlu0 0
        %5191 = vperm.xlu0 %5190, %v5121
        %v5192 = vpop.permute.xlu0 %5191
        %5195 = vset.pattern.permute.xlu0 0
        %5196 = vperm.xlu0 %5195, %v5122
        %v5197 = vpop.permute.xlu0 %5196
        %5200 = vset.pattern.permute.xlu0 0
        %5201 = vperm.xlu0 %5200, %v5123
        %v5202 = vpop.permute.xlu0 %5201
        %v5204 = vadd.f32 %v5091, %v5127
        %v5205 = vadd.f32 %v5092, %v5132
        %v5206 = vadd.f32 %v5093, %v5137
        %v5207 = vadd.f32 %v5094, %v5142
        %v5208 = vadd.f32 %v5095, %v5147
        %v5209 = vadd.f32 %v5096, %v5152
        %v5210 = vadd.f32 %v5097, %v5157
        %v5211 = vadd.f32 %v5098, %v5162
        %v5212 = vadd.f32 %v5099, %v5167
        %v5213 = vadd.f32 %v5100, %v5172
        %v5214 = vadd.f32 %v5101, %v5177
        %v5215 = vadd.f32 %v5102, %v5182
        %v5216 = vadd.f32 %v5103, %v5187
        %v5217 = vadd.f32 %v5104, %v5192
        %v5218 = vadd.f32 %v5105, %v5197
        %v5219 = vadd.f32 %v5106, %v5202
        %v5220 = vld [vmem:[%s12] sm:$0xff]
        %v5221 = vld [vmem:[%s12 + $0x8] sm:$0xff]
        %v5222 = vld [vmem:[%s12 + $0x10] sm:$0xff]
        %v5223 = vld [vmem:[%s12 + $0x18] sm:$0xff]
        %v5224 = vld [vmem:[%s12 + $0x20] sm:$0xff]
        %v5225 = vld [vmem:[%s12 + $0x28] sm:$0xff]
        %v5226 = vld [vmem:[%s12 + $0x30] sm:$0xff]
        %v5227 = vld [vmem:[%s12 + $0x38] sm:$0xff]
        %v5228 = vld [vmem:[%s12 + $0x40] sm:$0xff]
        %v5229 = vld [vmem:[%s12 + $0x48] sm:$0xff]
        %v5230 = vld [vmem:[%s12 + $0x50] sm:$0xff]
        %v5231 = vld [vmem:[%s12 + $0x58] sm:$0xff]
        %v5232 = vld [vmem:[%s12 + $0x60] sm:$0xff]
        %v5233 = vld [vmem:[%s12 + $0x68] sm:$0xff]
        %v5234 = vld [vmem:[%s12 + $0x70] sm:$0xff]
        %v5235 = vld [vmem:[%s12 + $0x78] sm:$0xff]
        %v5236 = vmul.f32 %v5220, %v5204
        %v5237 = vmul.f32 %v5221, %v5205
        %v5238 = vmul.f32 %v5222, %v5206
        %v5239 = vmul.f32 %v5223, %v5207
        %v5240 = vmul.f32 %v5224, %v5208
        %v5241 = vmul.f32 %v5225, %v5209
        %v5242 = vmul.f32 %v5226, %v5210
        %v5243 = vmul.f32 %v5227, %v5211
        %v5244 = vmul.f32 %v5228, %v5212
        %v5245 = vmul.f32 %v5229, %v5213
        %v5246 = vmul.f32 %v5230, %v5214
        %v5247 = vmul.f32 %v5231, %v5215
        %v5248 = vmul.f32 %v5232, %v5216
        %v5249 = vmul.f32 %v5233, %v5217
        %v5250 = vmul.f32 %v5234, %v5218
        %v5251 = vmul.f32 %v5235, %v5219
        %v5252 = vsel %vm4227, %v5236, 0.0
        %5253 = vadd.xlane.f32.xlu0 %v5252
        %v5254 = vpop.xlane.xlu0 %5253
        %v5255 = vsel %vm4227, %v5237, 0.0
        %5256 = vadd.xlane.f32.xlu0 %v5255
        %v5257 = vpop.xlane.xlu0 %5256
        %v5258 = vsel %vm4227, %v5238, 0.0
        %5259 = vadd.xlane.f32.xlu0 %v5258
        %v5260 = vpop.xlane.xlu0 %5259
        %v5261 = vsel %vm4227, %v5239, 0.0
        %5262 = vadd.xlane.f32.xlu0 %v5261
        %v5263 = vpop.xlane.xlu0 %5262
        %v5264 = vsel %vm4227, %v5240, 0.0
        %5265 = vadd.xlane.f32.xlu0 %v5264
        %v5266 = vpop.xlane.xlu0 %5265
        %v5267 = vsel %vm4227, %v5241, 0.0
        %5268 = vadd.xlane.f32.xlu0 %v5267
        %v5269 = vpop.xlane.xlu0 %5268
        %v5270 = vsel %vm4227, %v5242, 0.0
        %5271 = vadd.xlane.f32.xlu0 %v5270
        %v5272 = vpop.xlane.xlu0 %5271
        %v5273 = vsel %vm4227, %v5243, 0.0
        %5274 = vadd.xlane.f32.xlu0 %v5273
        %v5275 = vpop.xlane.xlu0 %5274
        %v5276 = vsel %vm4227, %v5244, 0.0
        %5277 = vadd.xlane.f32.xlu0 %v5276
        %v5278 = vpop.xlane.xlu0 %5277
        %v5279 = vsel %vm4227, %v5245, 0.0
        %5280 = vadd.xlane.f32.xlu0 %v5279
        %v5281 = vpop.xlane.xlu0 %5280
        %v5282 = vsel %vm4227, %v5246, 0.0
        %5283 = vadd.xlane.f32.xlu0 %v5282
        %v5284 = vpop.xlane.xlu0 %5283
        %v5285 = vsel %vm4227, %v5247, 0.0
        %5286 = vadd.xlane.f32.xlu0 %v5285
        %v5287 = vpop.xlane.xlu0 %5286
        %v5288 = vsel %vm4227, %v5248, 0.0
        %5289 = vadd.xlane.f32.xlu0 %v5288
        %v5290 = vpop.xlane.xlu0 %5289
        %v5291 = vsel %vm4227, %v5249, 0.0
        %5292 = vadd.xlane.f32.xlu0 %v5291
        %v5293 = vpop.xlane.xlu0 %5292
        %v5294 = vsel %vm4227, %v5250, 0.0
        %5295 = vadd.xlane.f32.xlu0 %v5294
        %v5296 = vpop.xlane.xlu0 %5295
        %v5297 = vsel %vm4227, %v5251, 0.0
        %5298 = vadd.xlane.f32.xlu0 %v5297
        %v5299 = vpop.xlane.xlu0 %5298
        %v5300 = vadd.f32 %v5254, %v5257
        %v5301 = vadd.f32 %v5300, %v5260
        %v5302 = vadd.f32 %v5301, %v5263
        %v5303 = vadd.f32 %v5302, %v5266
        %v5304 = vadd.f32 %v5303, %v5269
        %v5305 = vadd.f32 %v5304, %v5272
        %v5306 = vadd.f32 %v5305, %v5275
        %v5307 = vadd.f32 %v5306, %v5278
        %v5308 = vadd.f32 %v5307, %v5281
        %v5309 = vadd.f32 %v5308, %v5284
        %v5310 = vadd.f32 %v5309, %v5287
        %v5311 = vadd.f32 %v5310, %v5290
        %v5312 = vadd.f32 %v5311, %v5293
        %v5313 = vadd.f32 %v5312, %v5296
        %v5314 = vadd.f32 %v5313, %v5299
        %v5315 = vrot.slane %v5314, 4
        %v5316 = vadd.f32 %v5314, %v5315
        %v5317 = vrot.slane %v5316, 2
        %v5318 = vadd.f32 %v5316, %v5317
        %v5319 = vrot.slane %v5318, 1
        %v5320 = vadd.f32 %v5318, %v5319
        %v5321 = vld [vmem:[#allocation2] sm:$0x1]
        %v5322 = vadd.f32 %v5320, %v5321
        %v5323 = vand.u32 2147483647, %v5322
        %v5324 = vsub.f32 0.0, %v5323
        %v5325 = vmul.f32 %v5324, 1.442695
        %v5326 = vpow.pop %v5325
        %vm5327 = vcmp.ge.f32.partialorder %v5322, 0.0
        %v5328 = vadd.f32 %v5326, 1.0
        %v5329 = vrcp.pop %v5328
        %v5330 = vmul.f32 1.0, %v5329
        %v5331 = vmul.f32 %v5326, %v5329
        %v5332 = vsel %vm5327, %v5330, %v5331
        %5349 = vrot.lane.b32.xlu0 %v5204, 96
        %v5350 = vpop.permute.xlu0 %5349
        %5351 = vrot.lane.b32.xlu0 %v5205, 96
        %v5352 = vpop.permute.xlu0 %5351
        %5353 = vrot.lane.b32.xlu0 %v5206, 96
        %v5354 = vpop.permute.xlu0 %5353
        %5355 = vrot.lane.b32.xlu0 %v5207, 96
        %v5356 = vpop.permute.xlu0 %5355
        %5357 = vrot.lane.b32.xlu0 %v5208, 96
        %v5358 = vpop.permute.xlu0 %5357
        %5359 = vrot.lane.b32.xlu0 %v5209, 96
        %v5360 = vpop.permute.xlu0 %5359
        %5361 = vrot.lane.b32.xlu0 %v5210, 96
        %v5362 = vpop.permute.xlu0 %5361
        %5363 = vrot.lane.b32.xlu0 %v5211, 96
        %v5364 = vpop.permute.xlu0 %5363
        %5365 = vrot.lane.b32.xlu0 %v5212, 96
        %v5366 = vpop.permute.xlu0 %5365
        %5367 = vrot.lane.b32.xlu0 %v5213, 96
        %v5368 = vpop.permute.xlu0 %5367
        %5369 = vrot.lane.b32.xlu0 %v5214, 96
        %v5370 = vpop.permute.xlu0 %5369
        %5371 = vrot.lane.b32.xlu0 %v5215, 96
        %v5372 = vpop.permute.xlu0 %5371
        %5373 = vrot.lane.b32.xlu0 %v5216, 96
        %v5374 = vpop.permute.xlu0 %5373
        %5375 = vrot.lane.b32.xlu0 %v5217, 96
        %v5376 = vpop.permute.xlu0 %5375
        %5377 = vrot.lane.b32.xlu0 %v5218, 96
        %v5378 = vpop.permute.xlu0 %5377
        %5379 = vrot.lane.b32.xlu0 %v5219, 96
        %v5380 = vpop.permute.xlu0 %5379
        %v5397 = vmul.f32 %v5220, %v5350
        %v5398 = vmul.f32 %v5221, %v5352
        %v5399 = vmul.f32 %v5222, %v5354
        %v5400 = vmul.f32 %v5223, %v5356
        %v5401 = vmul.f32 %v5224, %v5358
        %v5402 = vmul.f32 %v5225, %v5360
        %v5403 = vmul.f32 %v5226, %v5362
        %v5404 = vmul.f32 %v5227, %v5364
        %v5405 = vmul.f32 %v5228, %v5366
        %v5406 = vmul.f32 %v5229, %v5368
        %v5407 = vmul.f32 %v5230, %v5370
        %v5408 = vmul.f32 %v5231, %v5372
        %v5409 = vmul.f32 %v5232, %v5374
        %v5410 = vmul.f32 %v5233, %v5376
        %v5411 = vmul.f32 %v5234, %v5378
        %v5412 = vmul.f32 %v5235, %v5380
        %v5413 = vsel %vm4227, %v5397, 0.0
        %5414 = vadd.xlane.f32.xlu0 %v5413
        %v5415 = vpop.xlane.xlu0 %5414
        %v5416 = vsel %vm4227, %v5398, 0.0
        %5417 = vadd.xlane.f32.xlu0 %v5416
        %v5418 = vpop.xlane.xlu0 %5417
        %v5419 = vsel %vm4227, %v5399, 0.0
        %5420 = vadd.xlane.f32.xlu0 %v5419
        %v5421 = vpop.xlane.xlu0 %5420
        %v5422 = vsel %vm4227, %v5400, 0.0
        %5423 = vadd.xlane.f32.xlu0 %v5422
        %v5424 = vpop.xlane.xlu0 %5423
        %v5425 = vsel %vm4227, %v5401, 0.0
        %5426 = vadd.xlane.f32.xlu0 %v5425
        %v5427 = vpop.xlane.xlu0 %5426
        %v5428 = vsel %vm4227, %v5402, 0.0
        %5429 = vadd.xlane.f32.xlu0 %v5428
        %v5430 = vpop.xlane.xlu0 %5429
        %v5431 = vsel %vm4227, %v5403, 0.0
        %5432 = vadd.xlane.f32.xlu0 %v5431
        %v5433 = vpop.xlane.xlu0 %5432
        %v5434 = vsel %vm4227, %v5404, 0.0
        %5435 = vadd.xlane.f32.xlu0 %v5434
        %v5436 = vpop.xlane.xlu0 %5435
        %v5437 = vsel %vm4227, %v5405, 0.0
        %5438 = vadd.xlane.f32.xlu0 %v5437
        %v5439 = vpop.xlane.xlu0 %5438
        %v5440 = vsel %vm4227, %v5406, 0.0
        %5441 = vadd.xlane.f32.xlu0 %v5440
        %v5442 = vpop.xlane.xlu0 %5441
        %v5443 = vsel %vm4227, %v5407, 0.0
        %5444 = vadd.xlane.f32.xlu0 %v5443
        %v5445 = vpop.xlane.xlu0 %5444
        %v5446 = vsel %vm4227, %v5408, 0.0
        %5447 = vadd.xlane.f32.xlu0 %v5446
        %v5448 = vpop.xlane.xlu0 %5447
        %v5449 = vsel %vm4227, %v5409, 0.0
        %5450 = vadd.xlane.f32.xlu0 %v5449
        %v5451 = vpop.xlane.xlu0 %5450
        %v5452 = vsel %vm4227, %v5410, 0.0
        %5453 = vadd.xlane.f32.xlu0 %v5452
        %v5454 = vpop.xlane.xlu0 %5453
        %v5455 = vsel %vm4227, %v5411, 0.0
        %5456 = vadd.xlane.f32.xlu0 %v5455
        %v5457 = vpop.xlane.xlu0 %5456
        %v5458 = vsel %vm4227, %v5412, 0.0
        %5459 = vadd.xlane.f32.xlu0 %v5458
        %v5460 = vpop.xlane.xlu0 %5459
        %v5461 = vadd.f32 %v5415, %v5418
        %v5462 = vadd.f32 %v5461, %v5421
        %v5463 = vadd.f32 %v5462, %v5424
        %v5464 = vadd.f32 %v5463, %v5427
        %v5465 = vadd.f32 %v5464, %v5430
        %v5466 = vadd.f32 %v5465, %v5433
        %v5467 = vadd.f32 %v5466, %v5436
        %v5468 = vadd.f32 %v5467, %v5439
        %v5469 = vadd.f32 %v5468, %v5442
        %v5470 = vadd.f32 %v5469, %v5445
        %v5471 = vadd.f32 %v5470, %v5448
        %v5472 = vadd.f32 %v5471, %v5451
        %v5473 = vadd.f32 %v5472, %v5454
        %v5474 = vadd.f32 %v5473, %v5457
        %v5475 = vadd.f32 %v5474, %v5460
        %v5476 = vrot.slane %v5475, 4
        %v5477 = vadd.f32 %v5475, %v5476
        %v5478 = vrot.slane %v5477, 2
        %v5479 = vadd.f32 %v5477, %v5478
        %v5480 = vrot.slane %v5479, 1
        %v5481 = vadd.f32 %v5479, %v5480
        %v5482 = vadd.f32 %v5481, %v5321
        %v5483 = vand.u32 2147483647, %v5482
        %v5484 = vsub.f32 0.0, %v5483
        %v5485 = vmul.f32 %v5484, 1.442695
        %v5486 = vpow.pop %v5485
        %vm5487 = vcmp.ge.f32.partialorder %v5482, 0.0
        %v5488 = vadd.f32 %v5486, 1.0
        %v5489 = vrcp.pop %v5488
        %v5490 = vmul.f32 1.0, %v5489
        %v5491 = vmul.f32 %v5486, %v5489
        %v5492 = vsel %vm5487, %v5490, %v5491
        %v5494 = vlaneseq
        %v5495 = vshrl.u32 %v5494, 7
        %v5496 = vsub.s32 0, %v5495
        %v5497 = vrot.slane %v5492, %v5496
        %vm5499 = vcmask 1040384
        %v5500 = vsel %vm5499, %v5332, %v5497
        %vm5501 = vcmask 1024
        %5502 = vst.msk [vmem:[%s526] sm:$0x3] %vm5501, %v5500
        %p5503 = scmp.lt.s32.totalorder %s30, 1
        %s5504 = scalar_select %p5503, %s30, 1
        %s5505 = smul.addr %s5504, 2
        %s5506 = scalar_lea.vmem %s14, %s5505
        // Predicated region
        $region93: #{tpu_custom_call.1} parent=75 // pred_check
          %p5507 = pneg %p347
        $region94: #{tpu_custom_call.1} parent=75 // pred_check_branch
          %5509 = sbr.rel (%p5507) target = $region96
        $region95: #{tpu_custom_call.1} parent=75 // pred_region
          _
        $region96: #{tpu_custom_call.1} parent=75 // pred_fallthru
          _
      $region76: #{tpu_custom_call.1} parent=5 // pred_fallthru
        _
      %p5510 = scmp.le.s32.totalorder 2, %s25
      // Predicated region
      $region97: #{tpu_custom_call.1} parent=5 // pred_check
        %p5511 = pneg %p5510
      $region98: #{tpu_custom_call.1} parent=5 // pred_check_branch
        %5513 = sbr.rel (%p5511) target = $region100
      $region99: #{tpu_custom_call.1} parent=5 // pred_region
        %s5514 = ssub.s32 %s25, 2
        // Predicated region
        $region101: #{tpu_custom_call.1} parent=99 // pred_check
          %p5515 = pneg %p353
        $region102: #{tpu_custom_call.1} parent=99 // pred_check_branch
          %5517 = sbr.rel (%p5515) target = $region104
        $region103: #{tpu_custom_call.1} parent=99 // pred_region
          %p5518 = scmp.lt.s32.totalorder %s31, 1
          %s5519 = scalar_select %p5518, %s31, 1
          %s5520 = smul.addr %s5519, 2
          %s5521 = scalar_lea.vmem %s14, %s5520
        $region104: #{tpu_custom_call.1} parent=99 // pred_fallthru
          _
      $region100: #{tpu_custom_call.1} parent=5 // pred_fallthru
        _
    $region6: #{tpu_custom_call.1} parent=1 // loop_footer
      %s29 = sadd.s32 1, %s25
    $region7: #{tpu_custom_call.1} parent=1 // loop_footer_branch
      %24 = sbr.rel target = $region3
    $region8: #{tpu_custom_call.1} parent=1 // loop_exit
      _
    %5522 = vsyncpa [#allocation4], 1
    %s5523 = scalar_lea.sflag [#allocation4], 1
    %5524 = vsyncpa %s5523, 1
    %5525 = vsyncpa [#allocation6], 1
    %5526 = vsyncpa [#allocation9], 1

</llo_original>
